<compile_context>
chip_gen: v6e
topology: v6e:2x2x1
jax: 0.10.0
libtpu: 0.0.40
codegen_flags: <defaults>
</compile_context>

<pallas_src>
import jax
import jax.numpy as jnp
from jax.experimental import pallas as pl
from jax.experimental.pallas import tpu as pltpu


def _round_up(x, m):
    return ((x + m - 1) // m) * m


# ----------------------------------------------------------------------------
# Fused Pallas kernel (all layers + head, layer/time wavefront inside)
# ----------------------------------------------------------------------------
def _make_fused_kernel(*, T, B, Bp, H, Hp, L, Op):
    """Build the fused forward kernel for static (T, B, Bp, H, Hp, L, Op).

    Kernel refs (in order):
      x_ref      : (T*Bp, Ip)    bf16, time-major, batch padded to Bp, zeros pad
      h0_ref     : (L, Bp, Hp)   f32 initial hidden states (zero padded)
      per layer l (4 refs each):
        w_ih_ref : (in_pad, Gp)  bf16 fused [Wr|Wz|Wn], per-gate 128-lane padded
        w_hh_ref : (Hp, Gp)      bf16 fused [Wr|Wz|Wn], per-gate 128-lane padded
        b_x_ref  : (1, Gp)       f32 pre-folded input-path bias
                                   [b_ir+b_hr |0| b_iz+b_hz |0| b_in |0]
        b_hn_ref : (1, Hp)       f32 n-gate hidden bias (stays inside r*(.))
      lin_w_ref  : (L, Hp, Op)   bf16 head weight split per hflat column block
      lin_b_ref  : (1, Op)       f32 head bias
      out_ref    : (B, Op)       f32 output
    """
    Gp = 3 * Hp

    def kernel(x_ref, h0_ref, *rest):
        layer_refs = [rest[4 * l:4 * l + 4] for l in range(L)]
        lin_w_ref, lin_b_ref, out_ref = rest[4 * L:]

        # ---- layer 0 input-path gates, batched over ALL timesteps ----------
        # (one big aligned matmul, off the recurrence critical path; biases
        #  pre-folded host-side).  Per-step slices below are 8-row aligned.
        w_ih0, _, b_x0, _ = layer_refs[0]
        gx0 = (jnp.dot(x_ref[...], w_ih0[...],
                       preferred_element_type=jnp.float32)
               + b_x0[...])                                       # (T*Bp, Gp) f32

        # ---- hoisted bias broadcasts (JAX does not CSE broadcast_in_dim) ---
        b_x_bc = [None if l == 0 else
                  jnp.broadcast_to(layer_refs[l][2][...], (Bp, Gp))
                  for l in range(L)]
        b_hn_bc = [jnp.broadcast_to(layer_refs[l][3][...], (Bp, Hp))
                   for l in range(L)]

        # Per-layer recurrent state, f32, kept in registers.
        h = [h0_ref[l] for l in range(L)]                         # (Bp, Hp) each

        def cell(l, gx_t, h_in):
            """One GRU cell update.  gx_t: (Bp, Gp) f32, h_in: (Bp, Hp) f32."""
            gh = jnp.dot(h_in.astype(jnp.bfloat16), layer_refs[l][1][...],
                         preferred_element_type=jnp.float32)      # (Bp, Gp)
            r = jax.nn.sigmoid(gx_t[:, 0:Hp] + gh[:, 0:Hp])
            z = jax.nn.sigmoid(gx_t[:, Hp:2 * Hp] + gh[:, Hp:2 * Hp])
            n = jnp.tanh(gx_t[:, 2 * Hp:3 * Hp]
                         + r * (gh[:, 2 * Hp:3 * Hp] + b_hn_bc[l]))
            return (1.0 - z) * n + z * h_in

        # ---- layer/time wavefront ------------------------------------------
        # Diagonal d handles (layer l, time t=d-l) for all valid l; layer l>0
        # consumes layer l-1's hidden state produced one diagonal earlier.
        for d in range(T + L - 1):
            h_prev = list(h)                 # snapshot: state after diagonal d-1
            for l in range(L):
                t = d - l
                if t < 0 or t >= T:
                    continue
                if l == 0:
                    gx_t = gx0[t * Bp:(t + 1) * Bp, :]            # aligned rows
                else:
                    gx_t = (jnp.dot(h_prev[l - 1].astype(jnp.bfloat16),
                                    layer_refs[l][0][...],
                                    preferred_element_type=jnp.float32)
                            + b_x_bc[l])
                h[l] = cell(l, gx_t, h_prev[l])

        # ---- epilogue: faithful h_n.view(batch, -1) + linear head -----------
        # out[b,:] = lin_b + sum_j h[(b*L+j)//B][(b*L+j)%B, :H] @ W_j
        # (algebraically identical to the interleaved hflat @ lin_w; computed
        #  with full (Bp,Hp)@(Hp,Op) aligned dots + register row selects, no
        #  VMEM staging buffers or masked scratch stores).
        prod_cache = {}

        def head_prod(li, j):
            if (li, j) not in prod_cache:
                prod_cache[(li, j)] = jnp.dot(
                    h[li].astype(jnp.bfloat16), lin_w_ref[j],
                    preferred_element_type=jnp.float32)           # (Bp, Op)
            return prod_cache[(li, j)]

        lin_b_row = lin_b_ref[...]                                # (1, Op)
        for b in range(B):
            acc = lin_b_row
            for j in range(L):
                c = b * L + j
                li, bi = c // B, c % B
                acc = acc + head_prod(li, j)[bi:bi + 1, :]
            out_ref[b:b + 1, :] = acc

    return kernel


def _fused_forward(x_flat, h0, layer_params, lin_w, lin_b,
                   *, T, B, Bp, H, Hp, L, Op):
    kernel = _make_fused_kernel(T=T, B=B, Bp=Bp, H=H, Hp=Hp, L=L, Op=Op)
    inputs = [x_flat, h0]
    for p in layer_params:
        inputs.extend(p)
    inputs.extend([lin_w, lin_b])

    vmem = pl.BlockSpec(memory_space=pltpu.MemorySpace.VMEM)
    return pl.pallas_call(
        kernel,
        out_shape=jax.ShapeDtypeStruct((B, Op), jnp.float32),
        in_specs=[vmem] * len(inputs),
        out_specs=vmem,
    )(*inputs)


# ----------------------------------------------------------------------------
# Module wrapper
# ----------------------------------------------------------------------------
class LoadGRUPallas:
    """JAX/Pallas re-implementation of LoadGRU.forward (single fused kernel)."""

    def __init__(self, config, key):
        self.input_size = I = config["input_size"]
        self.hidden_size = H = config["hidden_size"]
        self.num_layers = L = config["num_layers"]
        self.forecast_step = config["forecast_step"]
        self.output_size = O = self.forecast_step * 24

        self.Hp = Hp = _round_up(H, 128)      # per-gate lane padding
        self.Ip = Ip = _round_up(I, 128)      # layer-0 input lane padding
        self.Op = Op = _round_up(O, 128)      # head output lane padding

        keys = jax.random.split(key, 4 * L + 2)
        scale = 0.1

        def pack_w(w3, in_dim, in_pad):
            # w3: (3, in_dim, H) -> (in_pad, 3*Hp) bf16, per-gate lane-padded.
            blocks = [jnp.pad(w3[g], ((0, in_pad - in_dim), (0, Hp - H)))
                      for g in range(3)]
            return jnp.concatenate(blocks, axis=1).astype(jnp.bfloat16)

        def pack_b(pieces):
            # 3 x (H,) -> (1, 3*Hp) f32, per-gate lane-padded.
            return jnp.concatenate(
                [jnp.pad(p, (0, Hp - H)) for p in pieces], axis=0)[None, :]

        # Torch-layout params (gate order r, z, n; transposed to (in, H)),
        # folded into the fused, lane-padded kernel layout.
        self.layer_params = []
        for l in range(L):
            in_l = I if l == 0 else H
            in_pad = Ip if l == 0 else Hp
            k0, k1, k2, k3 = keys[4 * l:4 * l + 4]
            w_ih = scale * jax.random.normal(k0, (3, in_l, H), jnp.float32)
            w_hh = scale * jax.random.normal(k1, (3, H, H), jnp.float32)
            b_ih = scale * jax.random.normal(k2, (3, H), jnp.float32)
            b_hh = scale * jax.random.normal(k3, (3, H), jnp.float32)

            w_ih_f = pack_w(w_ih, in_l, in_pad)
            w_hh_f = pack_w(w_hh, H, Hp)
            b_x = pack_b([b_ih[0] + b_hh[0], b_ih[1] + b_hh[1], b_ih[2]])
            b_hn = jnp.pad(b_hh[2], (0, Hp - H))[None, :]
            self.layer_params.append((w_ih_f, w_hh_f, b_x, b_hn))

        kw, kb = keys[4 * L], keys[4 * L + 1]
        lin_w = scale * jax.random.normal(kw, (L * H, O), jnp.float32)
        lin_b = scale * jax.random.normal(kb, (O,), jnp.float32)
        # (L*H, O) -> (L, Hp, Op): one zero-padded (Hp, Op) block per hflat
        # column block j, fed to the epilogue block matmuls.
        self.lin_w = jnp.pad(lin_w.reshape(L, H, O),
                             ((0, 0), (0, Hp - H), (0, Op - O))
                             ).astype(jnp.bfloat16)
        self.lin_b = jnp.pad(lin_b, (0, Op - O))[None, :]

    def init_hidden(self, batch, key):
        # torch.randn((num_layers, batch, hidden_size)) — deterministic key here.
        return jax.random.normal(
            key, (self.num_layers, batch, self.hidden_size), jnp.float32)

    def __call__(self, x, hidden_key):
        """
        x : (batch, look_back, 24)   -> returns (batch, forecast_step, 24)
        """
        B, T, _ = x.shape
        Bp = _round_up(B, 8)
        H, Hp, L = self.hidden_size, self.Hp, self.num_layers
        O, Op = self.output_size, self.Op

        h0 = self.init_hidden(B, hidden_key)                       # (L, B, H)
        h0 = jnp.pad(h0, ((0, 0), (0, Bp - B), (0, Hp - H)))       # (L, Bp, Hp)

        # batch-first -> time-major, batch padded to Bp, lanes padded to Ip,
        # flattened so row t*Bp + b == x[b, t]; bf16 MXU operand.
        x_t = jnp.transpose(x, (1, 0, 2)).astype(jnp.float32)      # (T, B, I)
        x_t = jnp.pad(x_t, ((0, 0), (0, Bp - B),
                            (0, self.Ip - self.input_size)))       # (T, Bp, Ip)
        x_flat = x_t.reshape(T * Bp, self.Ip).astype(jnp.bfloat16)

        out = _fused_forward(x_flat, h0, self.layer_params,
                             self.lin_w, self.lin_b,
                             T=T, B=B, Bp=Bp, H=H, Hp=Hp, L=L, Op=Op)
        return out[:, :O].reshape(B, self.forecast_step, 24)


# ----------------------------------------------------------------------------
if __name__ == "__main__":
    config = {
        "input_size": 24,
        "hidden_size": 32,
        "num_layers": 2,
        "forecast_step": 2,
    }
    batch, look_back = 2, 8

    root = jax.random.PRNGKey(0)
    k_params, k_input, k_hidden = jax.random.split(root, 3)

    model = LoadGRUPallas(config, k_params)
    x = jax.random.normal(k_input, (batch, look_back, 24), jnp.float32)

    out = model(x, k_hidden)
    out = jax.block_until_ready(out)
    assert out.shape == (batch, config["forecast_step"], 24), out.shape
    assert out.dtype == jnp.float32
    print("KERNEL_OK")
</pallas_src>

<mosaic_0001>
module attributes {stable_mosaic.version = 11 : i64} {
  func.func @kernel(%arg0: memref<64x128xbf16, #tpu.memory_space<vmem>>, %arg1: memref<2x8x128xf32, #tpu.memory_space<vmem>>, %arg2: memref<128x384xbf16, #tpu.memory_space<vmem>>, %arg3: memref<128x384xbf16, #tpu.memory_space<vmem>>, %arg4: memref<1x384xf32, #tpu.memory_space<vmem>>, %arg5: memref<1x128xf32, #tpu.memory_space<vmem>>, %arg6: memref<128x384xbf16, #tpu.memory_space<vmem>>, %arg7: memref<128x384xbf16, #tpu.memory_space<vmem>>, %arg8: memref<1x384xf32, #tpu.memory_space<vmem>>, %arg9: memref<1x128xf32, #tpu.memory_space<vmem>>, %arg10: memref<2x128x128xbf16, #tpu.memory_space<vmem>>, %arg11: memref<1x128xf32, #tpu.memory_space<vmem>>, %arg12: memref<2x128xf32, #tpu.memory_space<vmem>>) attributes {dimension_semantics = [], scalar_prefetch = 0 : i64, scratch_operands = 0 : i64, tpu.core_type = #tpu.core_type<tc>} {
    %c0 = arith.constant 0 : index
    %c0_0 = arith.constant 0 : index
    %0 = vector.load %arg0[%c0, %c0_0] : memref<64x128xbf16, #tpu.memory_space<vmem>>, vector<64x128xbf16>
    %c0_1 = arith.constant 0 : index
    %c0_2 = arith.constant 0 : index
    %1 = vector.load %arg2[%c0_1, %c0_2] : memref<128x384xbf16, #tpu.memory_space<vmem>>, vector<128x384xbf16>
    %cst = arith.constant dense<0.000000e+00> : vector<64x384xf32>
    %2 = tpu.matmul %0, %1, %cst {dimension_numbers = #tpu.dot_dimension_numbers<[1], [0], [0], [1], [0, 0, 1, 1], [], []>} : vector<64x128xbf16>, vector<128x384xbf16>, vector<64x384xf32> -> vector<64x384xf32>
    %c0_3 = arith.constant 0 : index
    %c0_4 = arith.constant 0 : index
    %3 = vector.load %arg4[%c0_3, %c0_4] : memref<1x384xf32, #tpu.memory_space<vmem>>, vector<1x384xf32>
    %4 = vector.broadcast %3 : vector<1x384xf32> to vector<64x384xf32>
    %5 = arith.addf %2, %4 : vector<64x384xf32>
    %c0_5 = arith.constant 0 : index
    %c0_6 = arith.constant 0 : index
    %6 = vector.load %arg8[%c0_5, %c0_6] : memref<1x384xf32, #tpu.memory_space<vmem>>, vector<1x384xf32>
    %7 = vector.shape_cast %6 : vector<1x384xf32> to vector<1x384xf32>
    %8 = vector.broadcast %7 : vector<1x384xf32> to vector<8x384xf32>
    %c0_7 = arith.constant 0 : index
    %c0_8 = arith.constant 0 : index
    %9 = vector.load %arg5[%c0_7, %c0_8] : memref<1x128xf32, #tpu.memory_space<vmem>>, vector<1x128xf32>
    %10 = vector.shape_cast %9 : vector<1x128xf32> to vector<1x128xf32>
    %11 = vector.broadcast %10 : vector<1x128xf32> to vector<8x128xf32>
    %c0_9 = arith.constant 0 : index
    %c0_10 = arith.constant 0 : index
    %12 = vector.load %arg9[%c0_9, %c0_10] : memref<1x128xf32, #tpu.memory_space<vmem>>, vector<1x128xf32>
    %13 = vector.shape_cast %12 : vector<1x128xf32> to vector<1x128xf32>
    %14 = vector.broadcast %13 : vector<1x128xf32> to vector<8x128xf32>
    %c0_11 = arith.constant 0 : index
    %c0_12 = arith.constant 0 : index
    %c0_13 = arith.constant 0 : index
    %15 = vector.load %arg1[%c0_11, %c0_12, %c0_13] : memref<2x8x128xf32, #tpu.memory_space<vmem>>, vector<1x8x128xf32>
    %16 = vector.shape_cast %15 : vector<1x8x128xf32> to vector<8x128xf32>
    %c1 = arith.constant 1 : index
    %c0_14 = arith.constant 0 : index
    %c0_15 = arith.constant 0 : index
    %17 = vector.load %arg1[%c1, %c0_14, %c0_15] : memref<2x8x128xf32, #tpu.memory_space<vmem>>, vector<1x8x128xf32>
    %18 = vector.shape_cast %17 : vector<1x8x128xf32> to vector<8x128xf32>
    %19 = vector.extract_strided_slice %5 {offsets = [0, 0], sizes = [8, 384], strides = [1, 1]} : vector<64x384xf32> to vector<8x384xf32>
    %20 = arith.truncf %16 : vector<8x128xf32> to vector<8x128xbf16>
    %c0_16 = arith.constant 0 : index
    %c0_17 = arith.constant 0 : index
    %21 = vector.load %arg3[%c0_16, %c0_17] : memref<128x384xbf16, #tpu.memory_space<vmem>>, vector<128x384xbf16>
    %cst_18 = arith.constant dense<0.000000e+00> : vector<8x384xf32>
    %22 = tpu.matmul %20, %21, %cst_18 {dimension_numbers = #tpu.dot_dimension_numbers<[1], [0], [0], [1], [0, 0, 1, 1], [], []>} : vector<8x128xbf16>, vector<128x384xbf16>, vector<8x384xf32> -> vector<8x384xf32>
    %23 = vector.extract_strided_slice %19 {offsets = [0, 0], sizes = [8, 128], strides = [1, 1]} : vector<8x384xf32> to vector<8x128xf32>
    %24 = vector.extract_strided_slice %22 {offsets = [0, 0], sizes = [8, 128], strides = [1, 1]} : vector<8x384xf32> to vector<8x128xf32>
    %25 = arith.addf %23, %24 : vector<8x128xf32>
    %26 = arith.negf %25 : vector<8x128xf32>
    %27 = math.exp %26 : vector<8x128xf32>
    %cst_19 = arith.constant 1.000000e+00 : f32
    %28 = vector.broadcast %cst_19 : f32 to vector<8x128xf32>
    %29 = arith.addf %28, %27 : vector<8x128xf32>
    %30 = arith.divf %28, %29 : vector<8x128xf32>
    %31 = vector.extract_strided_slice %19 {offsets = [0, 128], sizes = [8, 128], strides = [1, 1]} : vector<8x384xf32> to vector<8x128xf32>
    %32 = vector.extract_strided_slice %22 {offsets = [0, 128], sizes = [8, 128], strides = [1, 1]} : vector<8x384xf32> to vector<8x128xf32>
    %33 = arith.addf %31, %32 : vector<8x128xf32>
    %34 = arith.negf %33 : vector<8x128xf32>
    %35 = math.exp %34 : vector<8x128xf32>
    %cst_20 = arith.constant 1.000000e+00 : f32
    %36 = vector.broadcast %cst_20 : f32 to vector<8x128xf32>
    %37 = arith.addf %36, %35 : vector<8x128xf32>
    %38 = arith.divf %36, %37 : vector<8x128xf32>
    %39 = vector.extract_strided_slice %19 {offsets = [0, 256], sizes = [8, 128], strides = [1, 1]} : vector<8x384xf32> to vector<8x128xf32>
    %40 = vector.extract_strided_slice %22 {offsets = [0, 256], sizes = [8, 128], strides = [1, 1]} : vector<8x384xf32> to vector<8x128xf32>
    %41 = arith.addf %40, %11 : vector<8x128xf32>
    %42 = arith.mulf %30, %41 : vector<8x128xf32>
    %43 = arith.addf %39, %42 : vector<8x128xf32>
    %44 = math.tanh %43 : vector<8x128xf32>
    %cst_21 = arith.constant 1.000000e+00 : f32
    %45 = vector.broadcast %cst_21 : f32 to vector<8x128xf32>
    %46 = arith.subf %45, %38 : vector<8x128xf32>
    %47 = arith.mulf %46, %44 : vector<8x128xf32>
    %48 = arith.mulf %38, %16 : vector<8x128xf32>
    %49 = arith.addf %47, %48 : vector<8x128xf32>
    %50 = vector.extract_strided_slice %5 {offsets = [8, 0], sizes = [8, 384], strides = [1, 1]} : vector<64x384xf32> to vector<8x384xf32>
    %51 = arith.truncf %49 : vector<8x128xf32> to vector<8x128xbf16>
    %c0_22 = arith.constant 0 : index
    %c0_23 = arith.constant 0 : index
    %52 = vector.load %arg3[%c0_22, %c0_23] : memref<128x384xbf16, #tpu.memory_space<vmem>>, vector<128x384xbf16>
    %cst_24 = arith.constant dense<0.000000e+00> : vector<8x384xf32>
    %53 = tpu.matmul %51, %52, %cst_24 {dimension_numbers = #tpu.dot_dimension_numbers<[1], [0], [0], [1], [0, 0, 1, 1], [], []>} : vector<8x128xbf16>, vector<128x384xbf16>, vector<8x384xf32> -> vector<8x384xf32>
    %54 = vector.extract_strided_slice %50 {offsets = [0, 0], sizes = [8, 128], strides = [1, 1]} : vector<8x384xf32> to vector<8x128xf32>
    %55 = vector.extract_strided_slice %53 {offsets = [0, 0], sizes = [8, 128], strides = [1, 1]} : vector<8x384xf32> to vector<8x128xf32>
    %56 = arith.addf %54, %55 : vector<8x128xf32>
    %57 = arith.negf %56 : vector<8x128xf32>
    %58 = math.exp %57 : vector<8x128xf32>
    %cst_25 = arith.constant 1.000000e+00 : f32
    %59 = vector.broadcast %cst_25 : f32 to vector<8x128xf32>
    %60 = arith.addf %59, %58 : vector<8x128xf32>
    %61 = arith.divf %59, %60 : vector<8x128xf32>
    %62 = vector.extract_strided_slice %50 {offsets = [0, 128], sizes = [8, 128], strides = [1, 1]} : vector<8x384xf32> to vector<8x128xf32>
    %63 = vector.extract_strided_slice %53 {offsets = [0, 128], sizes = [8, 128], strides = [1, 1]} : vector<8x384xf32> to vector<8x128xf32>
    %64 = arith.addf %62, %63 : vector<8x128xf32>
    %65 = arith.negf %64 : vector<8x128xf32>
    %66 = math.exp %65 : vector<8x128xf32>
    %cst_26 = arith.constant 1.000000e+00 : f32
    %67 = vector.broadcast %cst_26 : f32 to vector<8x128xf32>
    %68 = arith.addf %67, %66 : vector<8x128xf32>
    %69 = arith.divf %67, %68 : vector<8x128xf32>
    %70 = vector.extract_strided_slice %50 {offsets = [0, 256], sizes = [8, 128], strides = [1, 1]} : vector<8x384xf32> to vector<8x128xf32>
    %71 = vector.extract_strided_slice %53 {offsets = [0, 256], sizes = [8, 128], strides = [1, 1]} : vector<8x384xf32> to vector<8x128xf32>
    %72 = arith.addf %71, %11 : vector<8x128xf32>
    %73 = arith.mulf %61, %72 : vector<8x128xf32>
    %74 = arith.addf %70, %73 : vector<8x128xf32>
    %75 = math.tanh %74 : vector<8x128xf32>
    %cst_27 = arith.constant 1.000000e+00 : f32
    %76 = vector.broadcast %cst_27 : f32 to vector<8x128xf32>
    %77 = arith.subf %76, %69 : vector<8x128xf32>
    %78 = arith.mulf %77, %75 : vector<8x128xf32>
    %79 = arith.mulf %69, %49 : vector<8x128xf32>
    %80 = arith.addf %78, %79 : vector<8x128xf32>
    %81 = arith.truncf %49 : vector<8x128xf32> to vector<8x128xbf16>
    %c0_28 = arith.constant 0 : index
    %c0_29 = arith.constant 0 : index
    %82 = vector.load %arg6[%c0_28, %c0_29] : memref<128x384xbf16, #tpu.memory_space<vmem>>, vector<128x384xbf16>
    %cst_30 = arith.constant dense<0.000000e+00> : vector<8x384xf32>
    %83 = tpu.matmul %81, %82, %cst_30 {dimension_numbers = #tpu.dot_dimension_numbers<[1], [0], [0], [1], [0, 0, 1, 1], [], []>} : vector<8x128xbf16>, vector<128x384xbf16>, vector<8x384xf32> -> vector<8x384xf32>
    %84 = arith.addf %83, %8 : vector<8x384xf32>
    %85 = arith.truncf %18 : vector<8x128xf32> to vector<8x128xbf16>
    %c0_31 = arith.constant 0 : index
    %c0_32 = arith.constant 0 : index
    %86 = vector.load %arg7[%c0_31, %c0_32] : memref<128x384xbf16, #tpu.memory_space<vmem>>, vector<128x384xbf16>
    %cst_33 = arith.constant dense<0.000000e+00> : vector<8x384xf32>
    %87 = tpu.matmul %85, %86, %cst_33 {dimension_numbers = #tpu.dot_dimension_numbers<[1], [0], [0], [1], [0, 0, 1, 1], [], []>} : vector<8x128xbf16>, vector<128x384xbf16>, vector<8x384xf32> -> vector<8x384xf32>
    %88 = vector.extract_strided_slice %84 {offsets = [0, 0], sizes = [8, 128], strides = [1, 1]} : vector<8x384xf32> to vector<8x128xf32>
    %89 = vector.extract_strided_slice %87 {offsets = [0, 0], sizes = [8, 128], strides = [1, 1]} : vector<8x384xf32> to vector<8x128xf32>
    %90 = arith.addf %88, %89 : vector<8x128xf32>
    %91 = arith.negf %90 : vector<8x128xf32>
    %92 = math.exp %91 : vector<8x128xf32>
    %cst_34 = arith.constant 1.000000e+00 : f32
    %93 = vector.broadcast %cst_34 : f32 to vector<8x128xf32>
    %94 = arith.addf %93, %92 : vector<8x128xf32>
    %95 = arith.divf %93, %94 : vector<8x128xf32>
    %96 = vector.extract_strided_slice %84 {offsets = [0, 128], sizes = [8, 128], strides = [1, 1]} : vector<8x384xf32> to vector<8x128xf32>
    %97 = vector.extract_strided_slice %87 {offsets = [0, 128], sizes = [8, 128], strides = [1, 1]} : vector<8x384xf32> to vector<8x128xf32>
    %98 = arith.addf %96, %97 : vector<8x128xf32>
    %99 = arith.negf %98 : vector<8x128xf32>
    %100 = math.exp %99 : vector<8x128xf32>
    %cst_35 = arith.constant 1.000000e+00 : f32
    %101 = vector.broadcast %cst_35 : f32 to vector<8x128xf32>
    %102 = arith.addf %101, %100 : vector<8x128xf32>
    %103 = arith.divf %101, %102 : vector<8x128xf32>
    %104 = vector.extract_strided_slice %84 {offsets = [0, 256], sizes = [8, 128], strides = [1, 1]} : vector<8x384xf32> to vector<8x128xf32>
    %105 = vector.extract_strided_slice %87 {offsets = [0, 256], sizes = [8, 128], strides = [1, 1]} : vector<8x384xf32> to vector<8x128xf32>
    %106 = arith.addf %105, %14 : vector<8x128xf32>
    %107 = arith.mulf %95, %106 : vector<8x128xf32>
    %108 = arith.addf %104, %107 : vector<8x128xf32>
    %109 = math.tanh %108 : vector<8x128xf32>
    %cst_36 = arith.constant 1.000000e+00 : f32
    %110 = vector.broadcast %cst_36 : f32 to vector<8x128xf32>
    %111 = arith.subf %110, %103 : vector<8x128xf32>
    %112 = arith.mulf %111, %109 : vector<8x128xf32>
    %113 = arith.mulf %103, %18 : vector<8x128xf32>
    %114 = arith.addf %112, %113 : vector<8x128xf32>
    %115 = vector.extract_strided_slice %5 {offsets = [16, 0], sizes = [8, 384], strides = [1, 1]} : vector<64x384xf32> to vector<8x384xf32>
    %116 = arith.truncf %80 : vector<8x128xf32> to vector<8x128xbf16>
    %c0_37 = arith.constant 0 : index
    %c0_38 = arith.constant 0 : index
    %117 = vector.load %arg3[%c0_37, %c0_38] : memref<128x384xbf16, #tpu.memory_space<vmem>>, vector<128x384xbf16>
    %cst_39 = arith.constant dense<0.000000e+00> : vector<8x384xf32>
    %118 = tpu.matmul %116, %117, %cst_39 {dimension_numbers = #tpu.dot_dimension_numbers<[1], [0], [0], [1], [0, 0, 1, 1], [], []>} : vector<8x128xbf16>, vector<128x384xbf16>, vector<8x384xf32> -> vector<8x384xf32>
    %119 = vector.extract_strided_slice %115 {offsets = [0, 0], sizes = [8, 128], strides = [1, 1]} : vector<8x384xf32> to vector<8x128xf32>
    %120 = vector.extract_strided_slice %118 {offsets = [0, 0], sizes = [8, 128], strides = [1, 1]} : vector<8x384xf32> to vector<8x128xf32>
    %121 = arith.addf %119, %120 : vector<8x128xf32>
    %122 = arith.negf %121 : vector<8x128xf32>
    %123 = math.exp %122 : vector<8x128xf32>
    %cst_40 = arith.constant 1.000000e+00 : f32
    %124 = vector.broadcast %cst_40 : f32 to vector<8x128xf32>
    %125 = arith.addf %124, %123 : vector<8x128xf32>
    %126 = arith.divf %124, %125 : vector<8x128xf32>
    %127 = vector.extract_strided_slice %115 {offsets = [0, 128], sizes = [8, 128], strides = [1, 1]} : vector<8x384xf32> to vector<8x128xf32>
    %128 = vector.extract_strided_slice %118 {offsets = [0, 128], sizes = [8, 128], strides = [1, 1]} : vector<8x384xf32> to vector<8x128xf32>
    %129 = arith.addf %127, %128 : vector<8x128xf32>
    %130 = arith.negf %129 : vector<8x128xf32>
    %131 = math.exp %130 : vector<8x128xf32>
    %cst_41 = arith.constant 1.000000e+00 : f32
    %132 = vector.broadcast %cst_41 : f32 to vector<8x128xf32>
    %133 = arith.addf %132, %131 : vector<8x128xf32>
    %134 = arith.divf %132, %133 : vector<8x128xf32>
    %135 = vector.extract_strided_slice %115 {offsets = [0, 256], sizes = [8, 128], strides = [1, 1]} : vector<8x384xf32> to vector<8x128xf32>
    %136 = vector.extract_strided_slice %118 {offsets = [0, 256], sizes = [8, 128], strides = [1, 1]} : vector<8x384xf32> to vector<8x128xf32>
    %137 = arith.addf %136, %11 : vector<8x128xf32>
    %138 = arith.mulf %126, %137 : vector<8x128xf32>
    %139 = arith.addf %135, %138 : vector<8x128xf32>
    %140 = math.tanh %139 : vector<8x128xf32>
    %cst_42 = arith.constant 1.000000e+00 : f32
    %141 = vector.broadcast %cst_42 : f32 to vector<8x128xf32>
    %142 = arith.subf %141, %134 : vector<8x128xf32>
    %143 = arith.mulf %142, %140 : vector<8x128xf32>
    %144 = arith.mulf %134, %80 : vector<8x128xf32>
    %145 = arith.addf %143, %144 : vector<8x128xf32>
    %146 = arith.truncf %80 : vector<8x128xf32> to vector<8x128xbf16>
    %c0_43 = arith.constant 0 : index
    %c0_44 = arith.constant 0 : index
    %147 = vector.load %arg6[%c0_43, %c0_44] : memref<128x384xbf16, #tpu.memory_space<vmem>>, vector<128x384xbf16>
    %cst_45 = arith.constant dense<0.000000e+00> : vector<8x384xf32>
    %148 = tpu.matmul %146, %147, %cst_45 {dimension_numbers = #tpu.dot_dimension_numbers<[1], [0], [0], [1], [0, 0, 1, 1], [], []>} : vector<8x128xbf16>, vector<128x384xbf16>, vector<8x384xf32> -> vector<8x384xf32>
    %149 = arith.addf %148, %8 : vector<8x384xf32>
    %150 = arith.truncf %114 : vector<8x128xf32> to vector<8x128xbf16>
    %c0_46 = arith.constant 0 : index
    %c0_47 = arith.constant 0 : index
    %151 = vector.load %arg7[%c0_46, %c0_47] : memref<128x384xbf16, #tpu.memory_space<vmem>>, vector<128x384xbf16>
    %cst_48 = arith.constant dense<0.000000e+00> : vector<8x384xf32>
    %152 = tpu.matmul %150, %151, %cst_48 {dimension_numbers = #tpu.dot_dimension_numbers<[1], [0], [0], [1], [0, 0, 1, 1], [], []>} : vector<8x128xbf16>, vector<128x384xbf16>, vector<8x384xf32> -> vector<8x384xf32>
    %153 = vector.extract_strided_slice %149 {offsets = [0, 0], sizes = [8, 128], strides = [1, 1]} : vector<8x384xf32> to vector<8x128xf32>
    %154 = vector.extract_strided_slice %152 {offsets = [0, 0], sizes = [8, 128], strides = [1, 1]} : vector<8x384xf32> to vector<8x128xf32>
    %155 = arith.addf %153, %154 : vector<8x128xf32>
    %156 = arith.negf %155 : vector<8x128xf32>
    %157 = math.exp %156 : vector<8x128xf32>
    %cst_49 = arith.constant 1.000000e+00 : f32
    %158 = vector.broadcast %cst_49 : f32 to vector<8x128xf32>
    %159 = arith.addf %158, %157 : vector<8x128xf32>
    %160 = arith.divf %158, %159 : vector<8x128xf32>
    %161 = vector.extract_strided_slice %149 {offsets = [0, 128], sizes = [8, 128], strides = [1, 1]} : vector<8x384xf32> to vector<8x128xf32>
    %162 = vector.extract_strided_slice %152 {offsets = [0, 128], sizes = [8, 128], strides = [1, 1]} : vector<8x384xf32> to vector<8x128xf32>
    %163 = arith.addf %161, %162 : vector<8x128xf32>
    %164 = arith.negf %163 : vector<8x128xf32>
    %165 = math.exp %164 : vector<8x128xf32>
    %cst_50 = arith.constant 1.000000e+00 : f32
    %166 = vector.broadcast %cst_50 : f32 to vector<8x128xf32>
    %167 = arith.addf %166, %165 : vector<8x128xf32>
    %168 = arith.divf %166, %167 : vector<8x128xf32>
    %169 = vector.extract_strided_slice %149 {offsets = [0, 256], sizes = [8, 128], strides = [1, 1]} : vector<8x384xf32> to vector<8x128xf32>
    %170 = vector.extract_strided_slice %152 {offsets = [0, 256], sizes = [8, 128], strides = [1, 1]} : vector<8x384xf32> to vector<8x128xf32>
    %171 = arith.addf %170, %14 : vector<8x128xf32>
    %172 = arith.mulf %160, %171 : vector<8x128xf32>
    %173 = arith.addf %169, %172 : vector<8x128xf32>
    %174 = math.tanh %173 : vector<8x128xf32>
    %cst_51 = arith.constant 1.000000e+00 : f32
    %175 = vector.broadcast %cst_51 : f32 to vector<8x128xf32>
    %176 = arith.subf %175, %168 : vector<8x128xf32>
    %177 = arith.mulf %176, %174 : vector<8x128xf32>
    %178 = arith.mulf %168, %114 : vector<8x128xf32>
    %179 = arith.addf %177, %178 : vector<8x128xf32>
    %180 = vector.extract_strided_slice %5 {offsets = [24, 0], sizes = [8, 384], strides = [1, 1]} : vector<64x384xf32> to vector<8x384xf32>
    %181 = arith.truncf %145 : vector<8x128xf32> to vector<8x128xbf16>
    %c0_52 = arith.constant 0 : index
    %c0_53 = arith.constant 0 : index
    %182 = vector.load %arg3[%c0_52, %c0_53] : memref<128x384xbf16, #tpu.memory_space<vmem>>, vector<128x384xbf16>
    %cst_54 = arith.constant dense<0.000000e+00> : vector<8x384xf32>
    %183 = tpu.matmul %181, %182, %cst_54 {dimension_numbers = #tpu.dot_dimension_numbers<[1], [0], [0], [1], [0, 0, 1, 1], [], []>} : vector<8x128xbf16>, vector<128x384xbf16>, vector<8x384xf32> -> vector<8x384xf32>
    %184 = vector.extract_strided_slice %180 {offsets = [0, 0], sizes = [8, 128], strides = [1, 1]} : vector<8x384xf32> to vector<8x128xf32>
    %185 = vector.extract_strided_slice %183 {offsets = [0, 0], sizes = [8, 128], strides = [1, 1]} : vector<8x384xf32> to vector<8x128xf32>
    %186 = arith.addf %184, %185 : vector<8x128xf32>
    %187 = arith.negf %186 : vector<8x128xf32>
    %188 = math.exp %187 : vector<8x128xf32>
    %cst_55 = arith.constant 1.000000e+00 : f32
    %189 = vector.broadcast %cst_55 : f32 to vector<8x128xf32>
    %190 = arith.addf %189, %188 : vector<8x128xf32>
    %191 = arith.divf %189, %190 : vector<8x128xf32>
    %192 = vector.extract_strided_slice %180 {offsets = [0, 128], sizes = [8, 128], strides = [1, 1]} : vector<8x384xf32> to vector<8x128xf32>
    %193 = vector.extract_strided_slice %183 {offsets = [0, 128], sizes = [8, 128], strides = [1, 1]} : vector<8x384xf32> to vector<8x128xf32>
    %194 = arith.addf %192, %193 : vector<8x128xf32>
    %195 = arith.negf %194 : vector<8x128xf32>
    %196 = math.exp %195 : vector<8x128xf32>
    %cst_56 = arith.constant 1.000000e+00 : f32
    %197 = vector.broadcast %cst_56 : f32 to vector<8x128xf32>
    %198 = arith.addf %197, %196 : vector<8x128xf32>
    %199 = arith.divf %197, %198 : vector<8x128xf32>
    %200 = vector.extract_strided_slice %180 {offsets = [0, 256], sizes = [8, 128], strides = [1, 1]} : vector<8x384xf32> to vector<8x128xf32>
    %201 = vector.extract_strided_slice %183 {offsets = [0, 256], sizes = [8, 128], strides = [1, 1]} : vector<8x384xf32> to vector<8x128xf32>
    %202 = arith.addf %201, %11 : vector<8x128xf32>
    %203 = arith.mulf %191, %202 : vector<8x128xf32>
    %204 = arith.addf %200, %203 : vector<8x128xf32>
    %205 = math.tanh %204 : vector<8x128xf32>
    %cst_57 = arith.constant 1.000000e+00 : f32
    %206 = vector.broadcast %cst_57 : f32 to vector<8x128xf32>
    %207 = arith.subf %206, %199 : vector<8x128xf32>
    %208 = arith.mulf %207, %205 : vector<8x128xf32>
    %209 = arith.mulf %199, %145 : vector<8x128xf32>
    %210 = arith.addf %208, %209 : vector<8x128xf32>
    %211 = arith.truncf %145 : vector<8x128xf32> to vector<8x128xbf16>
    %c0_58 = arith.constant 0 : index
    %c0_59 = arith.constant 0 : index
    %212 = vector.load %arg6[%c0_58, %c0_59] : memref<128x384xbf16, #tpu.memory_space<vmem>>, vector<128x384xbf16>
    %cst_60 = arith.constant dense<0.000000e+00> : vector<8x384xf32>
    %213 = tpu.matmul %211, %212, %cst_60 {dimension_numbers = #tpu.dot_dimension_numbers<[1], [0], [0], [1], [0, 0, 1, 1], [], []>} : vector<8x128xbf16>, vector<128x384xbf16>, vector<8x384xf32> -> vector<8x384xf32>
    %214 = arith.addf %213, %8 : vector<8x384xf32>
    %215 = arith.truncf %179 : vector<8x128xf32> to vector<8x128xbf16>
    %c0_61 = arith.constant 0 : index
    %c0_62 = arith.constant 0 : index
    %216 = vector.load %arg7[%c0_61, %c0_62] : memref<128x384xbf16, #tpu.memory_space<vmem>>, vector<128x384xbf16>
    %cst_63 = arith.constant dense<0.000000e+00> : vector<8x384xf32>
    %217 = tpu.matmul %215, %216, %cst_63 {dimension_numbers = #tpu.dot_dimension_numbers<[1], [0], [0], [1], [0, 0, 1, 1], [], []>} : vector<8x128xbf16>, vector<128x384xbf16>, vector<8x384xf32> -> vector<8x384xf32>
    %218 = vector.extract_strided_slice %214 {offsets = [0, 0], sizes = [8, 128], strides = [1, 1]} : vector<8x384xf32> to vector<8x128xf32>
    %219 = vector.extract_strided_slice %217 {offsets = [0, 0], sizes = [8, 128], strides = [1, 1]} : vector<8x384xf32> to vector<8x128xf32>
    %220 = arith.addf %218, %219 : vector<8x128xf32>
    %221 = arith.negf %220 : vector<8x128xf32>
    %222 = math.exp %221 : vector<8x128xf32>
    %cst_64 = arith.constant 1.000000e+00 : f32
    %223 = vector.broadcast %cst_64 : f32 to vector<8x128xf32>
    %224 = arith.addf %223, %222 : vector<8x128xf32>
    %225 = arith.divf %223, %224 : vector<8x128xf32>
    %226 = vector.extract_strided_slice %214 {offsets = [0, 128], sizes = [8, 128], strides = [1, 1]} : vector<8x384xf32> to vector<8x128xf32>
    %227 = vector.extract_strided_slice %217 {offsets = [0, 128], sizes = [8, 128], strides = [1, 1]} : vector<8x384xf32> to vector<8x128xf32>
    %228 = arith.addf %226, %227 : vector<8x128xf32>
    %229 = arith.negf %228 : vector<8x128xf32>
    %230 = math.exp %229 : vector<8x128xf32>
    %cst_65 = arith.constant 1.000000e+00 : f32
    %231 = vector.broadcast %cst_65 : f32 to vector<8x128xf32>
    %232 = arith.addf %231, %230 : vector<8x128xf32>
    %233 = arith.divf %231, %232 : vector<8x128xf32>
    %234 = vector.extract_strided_slice %214 {offsets = [0, 256], sizes = [8, 128], strides = [1, 1]} : vector<8x384xf32> to vector<8x128xf32>
    %235 = vector.extract_strided_slice %217 {offsets = [0, 256], sizes = [8, 128], strides = [1, 1]} : vector<8x384xf32> to vector<8x128xf32>
    %236 = arith.addf %235, %14 : vector<8x128xf32>
    %237 = arith.mulf %225, %236 : vector<8x128xf32>
    %238 = arith.addf %234, %237 : vector<8x128xf32>
    %239 = math.tanh %238 : vector<8x128xf32>
    %cst_66 = arith.constant 1.000000e+00 : f32
    %240 = vector.broadcast %cst_66 : f32 to vector<8x128xf32>
    %241 = arith.subf %240, %233 : vector<8x128xf32>
    %242 = arith.mulf %241, %239 : vector<8x128xf32>
    %243 = arith.mulf %233, %179 : vector<8x128xf32>
    %244 = arith.addf %242, %243 : vector<8x128xf32>
    %245 = vector.extract_strided_slice %5 {offsets = [32, 0], sizes = [8, 384], strides = [1, 1]} : vector<64x384xf32> to vector<8x384xf32>
    %246 = arith.truncf %210 : vector<8x128xf32> to vector<8x128xbf16>
    %c0_67 = arith.constant 0 : index
    %c0_68 = arith.constant 0 : index
    %247 = vector.load %arg3[%c0_67, %c0_68] : memref<128x384xbf16, #tpu.memory_space<vmem>>, vector<128x384xbf16>
    %cst_69 = arith.constant dense<0.000000e+00> : vector<8x384xf32>
    %248 = tpu.matmul %246, %247, %cst_69 {dimension_numbers = #tpu.dot_dimension_numbers<[1], [0], [0], [1], [0, 0, 1, 1], [], []>} : vector<8x128xbf16>, vector<128x384xbf16>, vector<8x384xf32> -> vector<8x384xf32>
    %249 = vector.extract_strided_slice %245 {offsets = [0, 0], sizes = [8, 128], strides = [1, 1]} : vector<8x384xf32> to vector<8x128xf32>
    %250 = vector.extract_strided_slice %248 {offsets = [0, 0], sizes = [8, 128], strides = [1, 1]} : vector<8x384xf32> to vector<8x128xf32>
    %251 = arith.addf %249, %250 : vector<8x128xf32>
    %252 = arith.negf %251 : vector<8x128xf32>
    %253 = math.exp %252 : vector<8x128xf32>
    %cst_70 = arith.constant 1.000000e+00 : f32
    %254 = vector.broadcast %cst_70 : f32 to vector<8x128xf32>
    %255 = arith.addf %254, %253 : vector<8x128xf32>
    %256 = arith.divf %254, %255 : vector<8x128xf32>
    %257 = vector.extract_strided_slice %245 {offsets = [0, 128], sizes = [8, 128], strides = [1, 1]} : vector<8x384xf32> to vector<8x128xf32>
    %258 = vector.extract_strided_slice %248 {offsets = [0, 128], sizes = [8, 128], strides = [1, 1]} : vector<8x384xf32> to vector<8x128xf32>
    %259 = arith.addf %257, %258 : vector<8x128xf32>
    %260 = arith.negf %259 : vector<8x128xf32>
    %261 = math.exp %260 : vector<8x128xf32>
    %cst_71 = arith.constant 1.000000e+00 : f32
    %262 = vector.broadcast %cst_71 : f32 to vector<8x128xf32>
    %263 = arith.addf %262, %261 : vector<8x128xf32>
    %264 = arith.divf %262, %263 : vector<8x128xf32>
    %265 = vector.extract_strided_slice %245 {offsets = [0, 256], sizes = [8, 128], strides = [1, 1]} : vector<8x384xf32> to vector<8x128xf32>
    %266 = vector.extract_strided_slice %248 {offsets = [0, 256], sizes = [8, 128], strides = [1, 1]} : vector<8x384xf32> to vector<8x128xf32>
    %267 = arith.addf %266, %11 : vector<8x128xf32>
    %268 = arith.mulf %256, %267 : vector<8x128xf32>
    %269 = arith.addf %265, %268 : vector<8x128xf32>
    %270 = math.tanh %269 : vector<8x128xf32>
    %cst_72 = arith.constant 1.000000e+00 : f32
    %271 = vector.broadcast %cst_72 : f32 to vector<8x128xf32>
    %272 = arith.subf %271, %264 : vector<8x128xf32>
    %273 = arith.mulf %272, %270 : vector<8x128xf32>
    %274 = arith.mulf %264, %210 : vector<8x128xf32>
    %275 = arith.addf %273, %274 : vector<8x128xf32>
    %276 = arith.truncf %210 : vector<8x128xf32> to vector<8x128xbf16>
    %c0_73 = arith.constant 0 : index
    %c0_74 = arith.constant 0 : index
    %277 = vector.load %arg6[%c0_73, %c0_74] : memref<128x384xbf16, #tpu.memory_space<vmem>>, vector<128x384xbf16>
    %cst_75 = arith.constant dense<0.000000e+00> : vector<8x384xf32>
    %278 = tpu.matmul %276, %277, %cst_75 {dimension_numbers = #tpu.dot_dimension_numbers<[1], [0], [0], [1], [0, 0, 1, 1], [], []>} : vector<8x128xbf16>, vector<128x384xbf16>, vector<8x384xf32> -> vector<8x384xf32>
    %279 = arith.addf %278, %8 : vector<8x384xf32>
    %280 = arith.truncf %244 : vector<8x128xf32> to vector<8x128xbf16>
    %c0_76 = arith.constant 0 : index
    %c0_77 = arith.constant 0 : index
    %281 = vector.load %arg7[%c0_76, %c0_77] : memref<128x384xbf16, #tpu.memory_space<vmem>>, vector<128x384xbf16>
    %cst_78 = arith.constant dense<0.000000e+00> : vector<8x384xf32>
    %282 = tpu.matmul %280, %281, %cst_78 {dimension_numbers = #tpu.dot_dimension_numbers<[1], [0], [0], [1], [0, 0, 1, 1], [], []>} : vector<8x128xbf16>, vector<128x384xbf16>, vector<8x384xf32> -> vector<8x384xf32>
    %283 = vector.extract_strided_slice %279 {offsets = [0, 0], sizes = [8, 128], strides = [1, 1]} : vector<8x384xf32> to vector<8x128xf32>
    %284 = vector.extract_strided_slice %282 {offsets = [0, 0], sizes = [8, 128], strides = [1, 1]} : vector<8x384xf32> to vector<8x128xf32>
    %285 = arith.addf %283, %284 : vector<8x128xf32>
    %286 = arith.negf %285 : vector<8x128xf32>
    %287 = math.exp %286 : vector<8x128xf32>
    %cst_79 = arith.constant 1.000000e+00 : f32
    %288 = vector.broadcast %cst_79 : f32 to vector<8x128xf32>
    %289 = arith.addf %288, %287 : vector<8x128xf32>
    %290 = arith.divf %288, %289 : vector<8x128xf32>
    %291 = vector.extract_strided_slice %279 {offsets = [0, 128], sizes = [8, 128], strides = [1, 1]} : vector<8x384xf32> to vector<8x128xf32>
    %292 = vector.extract_strided_slice %282 {offsets = [0, 128], sizes = [8, 128], strides = [1, 1]} : vector<8x384xf32> to vector<8x128xf32>
    %293 = arith.addf %291, %292 : vector<8x128xf32>
    %294 = arith.negf %293 : vector<8x128xf32>
    %295 = math.exp %294 : vector<8x128xf32>
    %cst_80 = arith.constant 1.000000e+00 : f32
    %296 = vector.broadcast %cst_80 : f32 to vector<8x128xf32>
    %297 = arith.addf %296, %295 : vector<8x128xf32>
    %298 = arith.divf %296, %297 : vector<8x128xf32>
    %299 = vector.extract_strided_slice %279 {offsets = [0, 256], sizes = [8, 128], strides = [1, 1]} : vector<8x384xf32> to vector<8x128xf32>
    %300 = vector.extract_strided_slice %282 {offsets = [0, 256], sizes = [8, 128], strides = [1, 1]} : vector<8x384xf32> to vector<8x128xf32>
    %301 = arith.addf %300, %14 : vector<8x128xf32>
    %302 = arith.mulf %290, %301 : vector<8x128xf32>
    %303 = arith.addf %299, %302 : vector<8x128xf32>
    %304 = math.tanh %303 : vector<8x128xf32>
    %cst_81 = arith.constant 1.000000e+00 : f32
    %305 = vector.broadcast %cst_81 : f32 to vector<8x128xf32>
    %306 = arith.subf %305, %298 : vector<8x128xf32>
    %307 = arith.mulf %306, %304 : vector<8x128xf32>
    %308 = arith.mulf %298, %244 : vector<8x128xf32>
    %309 = arith.addf %307, %308 : vector<8x128xf32>
    %310 = vector.extract_strided_slice %5 {offsets = [40, 0], sizes = [8, 384], strides = [1, 1]} : vector<64x384xf32> to vector<8x384xf32>
    %311 = arith.truncf %275 : vector<8x128xf32> to vector<8x128xbf16>
    %c0_82 = arith.constant 0 : index
    %c0_83 = arith.constant 0 : index
    %312 = vector.load %arg3[%c0_82, %c0_83] : memref<128x384xbf16, #tpu.memory_space<vmem>>, vector<128x384xbf16>
    %cst_84 = arith.constant dense<0.000000e+00> : vector<8x384xf32>
    %313 = tpu.matmul %311, %312, %cst_84 {dimension_numbers = #tpu.dot_dimension_numbers<[1], [0], [0], [1], [0, 0, 1, 1], [], []>} : vector<8x128xbf16>, vector<128x384xbf16>, vector<8x384xf32> -> vector<8x384xf32>
    %314 = vector.extract_strided_slice %310 {offsets = [0, 0], sizes = [8, 128], strides = [1, 1]} : vector<8x384xf32> to vector<8x128xf32>
    %315 = vector.extract_strided_slice %313 {offsets = [0, 0], sizes = [8, 128], strides = [1, 1]} : vector<8x384xf32> to vector<8x128xf32>
    %316 = arith.addf %314, %315 : vector<8x128xf32>
    %317 = arith.negf %316 : vector<8x128xf32>
    %318 = math.exp %317 : vector<8x128xf32>
    %cst_85 = arith.constant 1.000000e+00 : f32
    %319 = vector.broadcast %cst_85 : f32 to vector<8x128xf32>
    %320 = arith.addf %319, %318 : vector<8x128xf32>
    %321 = arith.divf %319, %320 : vector<8x128xf32>
    %322 = vector.extract_strided_slice %310 {offsets = [0, 128], sizes = [8, 128], strides = [1, 1]} : vector<8x384xf32> to vector<8x128xf32>
    %323 = vector.extract_strided_slice %313 {offsets = [0, 128], sizes = [8, 128], strides = [1, 1]} : vector<8x384xf32> to vector<8x128xf32>
    %324 = arith.addf %322, %323 : vector<8x128xf32>
    %325 = arith.negf %324 : vector<8x128xf32>
    %326 = math.exp %325 : vector<8x128xf32>
    %cst_86 = arith.constant 1.000000e+00 : f32
    %327 = vector.broadcast %cst_86 : f32 to vector<8x128xf32>
    %328 = arith.addf %327, %326 : vector<8x128xf32>
    %329 = arith.divf %327, %328 : vector<8x128xf32>
    %330 = vector.extract_strided_slice %310 {offsets = [0, 256], sizes = [8, 128], strides = [1, 1]} : vector<8x384xf32> to vector<8x128xf32>
    %331 = vector.extract_strided_slice %313 {offsets = [0, 256], sizes = [8, 128], strides = [1, 1]} : vector<8x384xf32> to vector<8x128xf32>
    %332 = arith.addf %331, %11 : vector<8x128xf32>
    %333 = arith.mulf %321, %332 : vector<8x128xf32>
    %334 = arith.addf %330, %333 : vector<8x128xf32>
    %335 = math.tanh %334 : vector<8x128xf32>
    %cst_87 = arith.constant 1.000000e+00 : f32
    %336 = vector.broadcast %cst_87 : f32 to vector<8x128xf32>
    %337 = arith.subf %336, %329 : vector<8x128xf32>
    %338 = arith.mulf %337, %335 : vector<8x128xf32>
    %339 = arith.mulf %329, %275 : vector<8x128xf32>
    %340 = arith.addf %338, %339 : vector<8x128xf32>
    %341 = arith.truncf %275 : vector<8x128xf32> to vector<8x128xbf16>
    %c0_88 = arith.constant 0 : index
    %c0_89 = arith.constant 0 : index
    %342 = vector.load %arg6[%c0_88, %c0_89] : memref<128x384xbf16, #tpu.memory_space<vmem>>, vector<128x384xbf16>
    %cst_90 = arith.constant dense<0.000000e+00> : vector<8x384xf32>
    %343 = tpu.matmul %341, %342, %cst_90 {dimension_numbers = #tpu.dot_dimension_numbers<[1], [0], [0], [1], [0, 0, 1, 1], [], []>} : vector<8x128xbf16>, vector<128x384xbf16>, vector<8x384xf32> -> vector<8x384xf32>
    %344 = arith.addf %343, %8 : vector<8x384xf32>
    %345 = arith.truncf %309 : vector<8x128xf32> to vector<8x128xbf16>
    %c0_91 = arith.constant 0 : index
    %c0_92 = arith.constant 0 : index
    %346 = vector.load %arg7[%c0_91, %c0_92] : memref<128x384xbf16, #tpu.memory_space<vmem>>, vector<128x384xbf16>
    %cst_93 = arith.constant dense<0.000000e+00> : vector<8x384xf32>
    %347 = tpu.matmul %345, %346, %cst_93 {dimension_numbers = #tpu.dot_dimension_numbers<[1], [0], [0], [1], [0, 0, 1, 1], [], []>} : vector<8x128xbf16>, vector<128x384xbf16>, vector<8x384xf32> -> vector<8x384xf32>
    %348 = vector.extract_strided_slice %344 {offsets = [0, 0], sizes = [8, 128], strides = [1, 1]} : vector<8x384xf32> to vector<8x128xf32>
    %349 = vector.extract_strided_slice %347 {offsets = [0, 0], sizes = [8, 128], strides = [1, 1]} : vector<8x384xf32> to vector<8x128xf32>
    %350 = arith.addf %348, %349 : vector<8x128xf32>
    %351 = arith.negf %350 : vector<8x128xf32>
    %352 = math.exp %351 : vector<8x128xf32>
    %cst_94 = arith.constant 1.000000e+00 : f32
    %353 = vector.broadcast %cst_94 : f32 to vector<8x128xf32>
    %354 = arith.addf %353, %352 : vector<8x128xf32>
    %355 = arith.divf %353, %354 : vector<8x128xf32>
    %356 = vector.extract_strided_slice %344 {offsets = [0, 128], sizes = [8, 128], strides = [1, 1]} : vector<8x384xf32> to vector<8x128xf32>
    %357 = vector.extract_strided_slice %347 {offsets = [0, 128], sizes = [8, 128], strides = [1, 1]} : vector<8x384xf32> to vector<8x128xf32>
    %358 = arith.addf %356, %357 : vector<8x128xf32>
    %359 = arith.negf %358 : vector<8x128xf32>
    %360 = math.exp %359 : vector<8x128xf32>
    %cst_95 = arith.constant 1.000000e+00 : f32
    %361 = vector.broadcast %cst_95 : f32 to vector<8x128xf32>
    %362 = arith.addf %361, %360 : vector<8x128xf32>
    %363 = arith.divf %361, %362 : vector<8x128xf32>
    %364 = vector.extract_strided_slice %344 {offsets = [0, 256], sizes = [8, 128], strides = [1, 1]} : vector<8x384xf32> to vector<8x128xf32>
    %365 = vector.extract_strided_slice %347 {offsets = [0, 256], sizes = [8, 128], strides = [1, 1]} : vector<8x384xf32> to vector<8x128xf32>
    %366 = arith.addf %365, %14 : vector<8x128xf32>
    %367 = arith.mulf %355, %366 : vector<8x128xf32>
    %368 = arith.addf %364, %367 : vector<8x128xf32>
    %369 = math.tanh %368 : vector<8x128xf32>
    %cst_96 = arith.constant 1.000000e+00 : f32
    %370 = vector.broadcast %cst_96 : f32 to vector<8x128xf32>
    %371 = arith.subf %370, %363 : vector<8x128xf32>
    %372 = arith.mulf %371, %369 : vector<8x128xf32>
    %373 = arith.mulf %363, %309 : vector<8x128xf32>
    %374 = arith.addf %372, %373 : vector<8x128xf32>
    %375 = vector.extract_strided_slice %5 {offsets = [48, 0], sizes = [8, 384], strides = [1, 1]} : vector<64x384xf32> to vector<8x384xf32>
    %376 = arith.truncf %340 : vector<8x128xf32> to vector<8x128xbf16>
    %c0_97 = arith.constant 0 : index
    %c0_98 = arith.constant 0 : index
    %377 = vector.load %arg3[%c0_97, %c0_98] : memref<128x384xbf16, #tpu.memory_space<vmem>>, vector<128x384xbf16>
    %cst_99 = arith.constant dense<0.000000e+00> : vector<8x384xf32>
    %378 = tpu.matmul %376, %377, %cst_99 {dimension_numbers = #tpu.dot_dimension_numbers<[1], [0], [0], [1], [0, 0, 1, 1], [], []>} : vector<8x128xbf16>, vector<128x384xbf16>, vector<8x384xf32> -> vector<8x384xf32>
    %379 = vector.extract_strided_slice %375 {offsets = [0, 0], sizes = [8, 128], strides = [1, 1]} : vector<8x384xf32> to vector<8x128xf32>
    %380 = vector.extract_strided_slice %378 {offsets = [0, 0], sizes = [8, 128], strides = [1, 1]} : vector<8x384xf32> to vector<8x128xf32>
    %381 = arith.addf %379, %380 : vector<8x128xf32>
    %382 = arith.negf %381 : vector<8x128xf32>
    %383 = math.exp %382 : vector<8x128xf32>
    %cst_100 = arith.constant 1.000000e+00 : f32
    %384 = vector.broadcast %cst_100 : f32 to vector<8x128xf32>
    %385 = arith.addf %384, %383 : vector<8x128xf32>
    %386 = arith.divf %384, %385 : vector<8x128xf32>
    %387 = vector.extract_strided_slice %375 {offsets = [0, 128], sizes = [8, 128], strides = [1, 1]} : vector<8x384xf32> to vector<8x128xf32>
    %388 = vector.extract_strided_slice %378 {offsets = [0, 128], sizes = [8, 128], strides = [1, 1]} : vector<8x384xf32> to vector<8x128xf32>
    %389 = arith.addf %387, %388 : vector<8x128xf32>
    %390 = arith.negf %389 : vector<8x128xf32>
    %391 = math.exp %390 : vector<8x128xf32>
    %cst_101 = arith.constant 1.000000e+00 : f32
    %392 = vector.broadcast %cst_101 : f32 to vector<8x128xf32>
    %393 = arith.addf %392, %391 : vector<8x128xf32>
    %394 = arith.divf %392, %393 : vector<8x128xf32>
    %395 = vector.extract_strided_slice %375 {offsets = [0, 256], sizes = [8, 128], strides = [1, 1]} : vector<8x384xf32> to vector<8x128xf32>
    %396 = vector.extract_strided_slice %378 {offsets = [0, 256], sizes = [8, 128], strides = [1, 1]} : vector<8x384xf32> to vector<8x128xf32>
    %397 = arith.addf %396, %11 : vector<8x128xf32>
    %398 = arith.mulf %386, %397 : vector<8x128xf32>
    %399 = arith.addf %395, %398 : vector<8x128xf32>
    %400 = math.tanh %399 : vector<8x128xf32>
    %cst_102 = arith.constant 1.000000e+00 : f32
    %401 = vector.broadcast %cst_102 : f32 to vector<8x128xf32>
    %402 = arith.subf %401, %394 : vector<8x128xf32>
    %403 = arith.mulf %402, %400 : vector<8x128xf32>
    %404 = arith.mulf %394, %340 : vector<8x128xf32>
    %405 = arith.addf %403, %404 : vector<8x128xf32>
    %406 = arith.truncf %340 : vector<8x128xf32> to vector<8x128xbf16>
    %c0_103 = arith.constant 0 : index
    %c0_104 = arith.constant 0 : index
    %407 = vector.load %arg6[%c0_103, %c0_104] : memref<128x384xbf16, #tpu.memory_space<vmem>>, vector<128x384xbf16>
    %cst_105 = arith.constant dense<0.000000e+00> : vector<8x384xf32>
    %408 = tpu.matmul %406, %407, %cst_105 {dimension_numbers = #tpu.dot_dimension_numbers<[1], [0], [0], [1], [0, 0, 1, 1], [], []>} : vector<8x128xbf16>, vector<128x384xbf16>, vector<8x384xf32> -> vector<8x384xf32>
    %409 = arith.addf %408, %8 : vector<8x384xf32>
    %410 = arith.truncf %374 : vector<8x128xf32> to vector<8x128xbf16>
    %c0_106 = arith.constant 0 : index
    %c0_107 = arith.constant 0 : index
    %411 = vector.load %arg7[%c0_106, %c0_107] : memref<128x384xbf16, #tpu.memory_space<vmem>>, vector<128x384xbf16>
    %cst_108 = arith.constant dense<0.000000e+00> : vector<8x384xf32>
    %412 = tpu.matmul %410, %411, %cst_108 {dimension_numbers = #tpu.dot_dimension_numbers<[1], [0], [0], [1], [0, 0, 1, 1], [], []>} : vector<8x128xbf16>, vector<128x384xbf16>, vector<8x384xf32> -> vector<8x384xf32>
    %413 = vector.extract_strided_slice %409 {offsets = [0, 0], sizes = [8, 128], strides = [1, 1]} : vector<8x384xf32> to vector<8x128xf32>
    %414 = vector.extract_strided_slice %412 {offsets = [0, 0], sizes = [8, 128], strides = [1, 1]} : vector<8x384xf32> to vector<8x128xf32>
    %415 = arith.addf %413, %414 : vector<8x128xf32>
    %416 = arith.negf %415 : vector<8x128xf32>
    %417 = math.exp %416 : vector<8x128xf32>
    %cst_109 = arith.constant 1.000000e+00 : f32
    %418 = vector.broadcast %cst_109 : f32 to vector<8x128xf32>
    %419 = arith.addf %418, %417 : vector<8x128xf32>
    %420 = arith.divf %418, %419 : vector<8x128xf32>
    %421 = vector.extract_strided_slice %409 {offsets = [0, 128], sizes = [8, 128], strides = [1, 1]} : vector<8x384xf32> to vector<8x128xf32>
    %422 = vector.extract_strided_slice %412 {offsets = [0, 128], sizes = [8, 128], strides = [1, 1]} : vector<8x384xf32> to vector<8x128xf32>
    %423 = arith.addf %421, %422 : vector<8x128xf32>
    %424 = arith.negf %423 : vector<8x128xf32>
    %425 = math.exp %424 : vector<8x128xf32>
    %cst_110 = arith.constant 1.000000e+00 : f32
    %426 = vector.broadcast %cst_110 : f32 to vector<8x128xf32>
    %427 = arith.addf %426, %425 : vector<8x128xf32>
    %428 = arith.divf %426, %427 : vector<8x128xf32>
    %429 = vector.extract_strided_slice %409 {offsets = [0, 256], sizes = [8, 128], strides = [1, 1]} : vector<8x384xf32> to vector<8x128xf32>
    %430 = vector.extract_strided_slice %412 {offsets = [0, 256], sizes = [8, 128], strides = [1, 1]} : vector<8x384xf32> to vector<8x128xf32>
    %431 = arith.addf %430, %14 : vector<8x128xf32>
    %432 = arith.mulf %420, %431 : vector<8x128xf32>
    %433 = arith.addf %429, %432 : vector<8x128xf32>
    %434 = math.tanh %433 : vector<8x128xf32>
    %cst_111 = arith.constant 1.000000e+00 : f32
    %435 = vector.broadcast %cst_111 : f32 to vector<8x128xf32>
    %436 = arith.subf %435, %428 : vector<8x128xf32>
    %437 = arith.mulf %436, %434 : vector<8x128xf32>
    %438 = arith.mulf %428, %374 : vector<8x128xf32>
    %439 = arith.addf %437, %438 : vector<8x128xf32>
    %440 = vector.extract_strided_slice %5 {offsets = [56, 0], sizes = [8, 384], strides = [1, 1]} : vector<64x384xf32> to vector<8x384xf32>
    %441 = arith.truncf %405 : vector<8x128xf32> to vector<8x128xbf16>
    %c0_112 = arith.constant 0 : index
    %c0_113 = arith.constant 0 : index
    %442 = vector.load %arg3[%c0_112, %c0_113] : memref<128x384xbf16, #tpu.memory_space<vmem>>, vector<128x384xbf16>
    %cst_114 = arith.constant dense<0.000000e+00> : vector<8x384xf32>
    %443 = tpu.matmul %441, %442, %cst_114 {dimension_numbers = #tpu.dot_dimension_numbers<[1], [0], [0], [1], [0, 0, 1, 1], [], []>} : vector<8x128xbf16>, vector<128x384xbf16>, vector<8x384xf32> -> vector<8x384xf32>
    %444 = vector.extract_strided_slice %440 {offsets = [0, 0], sizes = [8, 128], strides = [1, 1]} : vector<8x384xf32> to vector<8x128xf32>
    %445 = vector.extract_strided_slice %443 {offsets = [0, 0], sizes = [8, 128], strides = [1, 1]} : vector<8x384xf32> to vector<8x128xf32>
    %446 = arith.addf %444, %445 : vector<8x128xf32>
    %447 = arith.negf %446 : vector<8x128xf32>
    %448 = math.exp %447 : vector<8x128xf32>
    %cst_115 = arith.constant 1.000000e+00 : f32
    %449 = vector.broadcast %cst_115 : f32 to vector<8x128xf32>
    %450 = arith.addf %449, %448 : vector<8x128xf32>
    %451 = arith.divf %449, %450 : vector<8x128xf32>
    %452 = vector.extract_strided_slice %440 {offsets = [0, 128], sizes = [8, 128], strides = [1, 1]} : vector<8x384xf32> to vector<8x128xf32>
    %453 = vector.extract_strided_slice %443 {offsets = [0, 128], sizes = [8, 128], strides = [1, 1]} : vector<8x384xf32> to vector<8x128xf32>
    %454 = arith.addf %452, %453 : vector<8x128xf32>
    %455 = arith.negf %454 : vector<8x128xf32>
    %456 = math.exp %455 : vector<8x128xf32>
    %cst_116 = arith.constant 1.000000e+00 : f32
    %457 = vector.broadcast %cst_116 : f32 to vector<8x128xf32>
    %458 = arith.addf %457, %456 : vector<8x128xf32>
    %459 = arith.divf %457, %458 : vector<8x128xf32>
    %460 = vector.extract_strided_slice %440 {offsets = [0, 256], sizes = [8, 128], strides = [1, 1]} : vector<8x384xf32> to vector<8x128xf32>
    %461 = vector.extract_strided_slice %443 {offsets = [0, 256], sizes = [8, 128], strides = [1, 1]} : vector<8x384xf32> to vector<8x128xf32>
    %462 = arith.addf %461, %11 : vector<8x128xf32>
    %463 = arith.mulf %451, %462 : vector<8x128xf32>
    %464 = arith.addf %460, %463 : vector<8x128xf32>
    %465 = math.tanh %464 : vector<8x128xf32>
    %cst_117 = arith.constant 1.000000e+00 : f32
    %466 = vector.broadcast %cst_117 : f32 to vector<8x128xf32>
    %467 = arith.subf %466, %459 : vector<8x128xf32>
    %468 = arith.mulf %467, %465 : vector<8x128xf32>
    %469 = arith.mulf %459, %405 : vector<8x128xf32>
    %470 = arith.addf %468, %469 : vector<8x128xf32>
    %471 = arith.truncf %405 : vector<8x128xf32> to vector<8x128xbf16>
    %c0_118 = arith.constant 0 : index
    %c0_119 = arith.constant 0 : index
    %472 = vector.load %arg6[%c0_118, %c0_119] : memref<128x384xbf16, #tpu.memory_space<vmem>>, vector<128x384xbf16>
    %cst_120 = arith.constant dense<0.000000e+00> : vector<8x384xf32>
    %473 = tpu.matmul %471, %472, %cst_120 {dimension_numbers = #tpu.dot_dimension_numbers<[1], [0], [0], [1], [0, 0, 1, 1], [], []>} : vector<8x128xbf16>, vector<128x384xbf16>, vector<8x384xf32> -> vector<8x384xf32>
    %474 = arith.addf %473, %8 : vector<8x384xf32>
    %475 = arith.truncf %439 : vector<8x128xf32> to vector<8x128xbf16>
    %c0_121 = arith.constant 0 : index
    %c0_122 = arith.constant 0 : index
    %476 = vector.load %arg7[%c0_121, %c0_122] : memref<128x384xbf16, #tpu.memory_space<vmem>>, vector<128x384xbf16>
    %cst_123 = arith.constant dense<0.000000e+00> : vector<8x384xf32>
    %477 = tpu.matmul %475, %476, %cst_123 {dimension_numbers = #tpu.dot_dimension_numbers<[1], [0], [0], [1], [0, 0, 1, 1], [], []>} : vector<8x128xbf16>, vector<128x384xbf16>, vector<8x384xf32> -> vector<8x384xf32>
    %478 = vector.extract_strided_slice %474 {offsets = [0, 0], sizes = [8, 128], strides = [1, 1]} : vector<8x384xf32> to vector<8x128xf32>
    %479 = vector.extract_strided_slice %477 {offsets = [0, 0], sizes = [8, 128], strides = [1, 1]} : vector<8x384xf32> to vector<8x128xf32>
    %480 = arith.addf %478, %479 : vector<8x128xf32>
    %481 = arith.negf %480 : vector<8x128xf32>
    %482 = math.exp %481 : vector<8x128xf32>
    %cst_124 = arith.constant 1.000000e+00 : f32
    %483 = vector.broadcast %cst_124 : f32 to vector<8x128xf32>
    %484 = arith.addf %483, %482 : vector<8x128xf32>
    %485 = arith.divf %483, %484 : vector<8x128xf32>
    %486 = vector.extract_strided_slice %474 {offsets = [0, 128], sizes = [8, 128], strides = [1, 1]} : vector<8x384xf32> to vector<8x128xf32>
    %487 = vector.extract_strided_slice %477 {offsets = [0, 128], sizes = [8, 128], strides = [1, 1]} : vector<8x384xf32> to vector<8x128xf32>
    %488 = arith.addf %486, %487 : vector<8x128xf32>
    %489 = arith.negf %488 : vector<8x128xf32>
    %490 = math.exp %489 : vector<8x128xf32>
    %cst_125 = arith.constant 1.000000e+00 : f32
    %491 = vector.broadcast %cst_125 : f32 to vector<8x128xf32>
    %492 = arith.addf %491, %490 : vector<8x128xf32>
    %493 = arith.divf %491, %492 : vector<8x128xf32>
    %494 = vector.extract_strided_slice %474 {offsets = [0, 256], sizes = [8, 128], strides = [1, 1]} : vector<8x384xf32> to vector<8x128xf32>
    %495 = vector.extract_strided_slice %477 {offsets = [0, 256], sizes = [8, 128], strides = [1, 1]} : vector<8x384xf32> to vector<8x128xf32>
    %496 = arith.addf %495, %14 : vector<8x128xf32>
    %497 = arith.mulf %485, %496 : vector<8x128xf32>
    %498 = arith.addf %494, %497 : vector<8x128xf32>
    %499 = math.tanh %498 : vector<8x128xf32>
    %cst_126 = arith.constant 1.000000e+00 : f32
    %500 = vector.broadcast %cst_126 : f32 to vector<8x128xf32>
    %501 = arith.subf %500, %493 : vector<8x128xf32>
    %502 = arith.mulf %501, %499 : vector<8x128xf32>
    %503 = arith.mulf %493, %439 : vector<8x128xf32>
    %504 = arith.addf %502, %503 : vector<8x128xf32>
    %505 = arith.truncf %470 : vector<8x128xf32> to vector<8x128xbf16>
    %c0_127 = arith.constant 0 : index
    %c0_128 = arith.constant 0 : index
    %506 = vector.load %arg6[%c0_127, %c0_128] : memref<128x384xbf16, #tpu.memory_space<vmem>>, vector<128x384xbf16>
    %cst_129 = arith.constant dense<0.000000e+00> : vector<8x384xf32>
    %507 = tpu.matmul %505, %506, %cst_129 {dimension_numbers = #tpu.dot_dimension_numbers<[1], [0], [0], [1], [0, 0, 1, 1], [], []>} : vector<8x128xbf16>, vector<128x384xbf16>, vector<8x384xf32> -> vector<8x384xf32>
    %508 = arith.addf %507, %8 : vector<8x384xf32>
    %509 = arith.truncf %504 : vector<8x128xf32> to vector<8x128xbf16>
    %c0_130 = arith.constant 0 : index
    %c0_131 = arith.constant 0 : index
    %510 = vector.load %arg7[%c0_130, %c0_131] : memref<128x384xbf16, #tpu.memory_space<vmem>>, vector<128x384xbf16>
    %cst_132 = arith.constant dense<0.000000e+00> : vector<8x384xf32>
    %511 = tpu.matmul %509, %510, %cst_132 {dimension_numbers = #tpu.dot_dimension_numbers<[1], [0], [0], [1], [0, 0, 1, 1], [], []>} : vector<8x128xbf16>, vector<128x384xbf16>, vector<8x384xf32> -> vector<8x384xf32>
    %512 = vector.extract_strided_slice %508 {offsets = [0, 0], sizes = [8, 128], strides = [1, 1]} : vector<8x384xf32> to vector<8x128xf32>
    %513 = vector.extract_strided_slice %511 {offsets = [0, 0], sizes = [8, 128], strides = [1, 1]} : vector<8x384xf32> to vector<8x128xf32>
    %514 = arith.addf %512, %513 : vector<8x128xf32>
    %515 = arith.negf %514 : vector<8x128xf32>
    %516 = math.exp %515 : vector<8x128xf32>
    %cst_133 = arith.constant 1.000000e+00 : f32
    %517 = vector.broadcast %cst_133 : f32 to vector<8x128xf32>
    %518 = arith.addf %517, %516 : vector<8x128xf32>
    %519 = arith.divf %517, %518 : vector<8x128xf32>
    %520 = vector.extract_strided_slice %508 {offsets = [0, 128], sizes = [8, 128], strides = [1, 1]} : vector<8x384xf32> to vector<8x128xf32>
    %521 = vector.extract_strided_slice %511 {offsets = [0, 128], sizes = [8, 128], strides = [1, 1]} : vector<8x384xf32> to vector<8x128xf32>
    %522 = arith.addf %520, %521 : vector<8x128xf32>
    %523 = arith.negf %522 : vector<8x128xf32>
    %524 = math.exp %523 : vector<8x128xf32>
    %cst_134 = arith.constant 1.000000e+00 : f32
    %525 = vector.broadcast %cst_134 : f32 to vector<8x128xf32>
    %526 = arith.addf %525, %524 : vector<8x128xf32>
    %527 = arith.divf %525, %526 : vector<8x128xf32>
    %528 = vector.extract_strided_slice %508 {offsets = [0, 256], sizes = [8, 128], strides = [1, 1]} : vector<8x384xf32> to vector<8x128xf32>
    %529 = vector.extract_strided_slice %511 {offsets = [0, 256], sizes = [8, 128], strides = [1, 1]} : vector<8x384xf32> to vector<8x128xf32>
    %530 = arith.addf %529, %14 : vector<8x128xf32>
    %531 = arith.mulf %519, %530 : vector<8x128xf32>
    %532 = arith.addf %528, %531 : vector<8x128xf32>
    %533 = math.tanh %532 : vector<8x128xf32>
    %cst_135 = arith.constant 1.000000e+00 : f32
    %534 = vector.broadcast %cst_135 : f32 to vector<8x128xf32>
    %535 = arith.subf %534, %527 : vector<8x128xf32>
    %536 = arith.mulf %535, %533 : vector<8x128xf32>
    %537 = arith.mulf %527, %504 : vector<8x128xf32>
    %538 = arith.addf %536, %537 : vector<8x128xf32>
    %c0_136 = arith.constant 0 : index
    %c0_137 = arith.constant 0 : index
    %539 = vector.load %arg11[%c0_136, %c0_137] : memref<1x128xf32, #tpu.memory_space<vmem>>, vector<1x128xf32>
    %540 = arith.truncf %470 : vector<8x128xf32> to vector<8x128xbf16>
    %c0_138 = arith.constant 0 : index
    %c0_139 = arith.constant 0 : index
    %c0_140 = arith.constant 0 : index
    %541 = vector.load %arg10[%c0_138, %c0_139, %c0_140] : memref<2x128x128xbf16, #tpu.memory_space<vmem>>, vector<1x128x128xbf16>
    %542 = vector.shape_cast %541 : vector<1x128x128xbf16> to vector<128x128xbf16>
    %cst_141 = arith.constant dense<0.000000e+00> : vector<8x128xf32>
    %543 = tpu.matmul %540, %542, %cst_141 {dimension_numbers = #tpu.dot_dimension_numbers<[1], [0], [0], [1], [0, 0, 1, 1], [], []>} : vector<8x128xbf16>, vector<128x128xbf16>, vector<8x128xf32> -> vector<8x128xf32>
    %544 = vector.extract_strided_slice %543 {offsets = [0, 0], sizes = [1, 128], strides = [1, 1]} : vector<8x128xf32> to vector<1x128xf32>
    %545 = arith.addf %539, %544 : vector<1x128xf32>
    %546 = arith.truncf %470 : vector<8x128xf32> to vector<8x128xbf16>
    %c1_142 = arith.constant 1 : index
    %c0_143 = arith.constant 0 : index
    %c0_144 = arith.constant 0 : index
    %547 = vector.load %arg10[%c1_142, %c0_143, %c0_144] : memref<2x128x128xbf16, #tpu.memory_space<vmem>>, vector<1x128x128xbf16>
    %548 = vector.shape_cast %547 : vector<1x128x128xbf16> to vector<128x128xbf16>
    %cst_145 = arith.constant dense<0.000000e+00> : vector<8x128xf32>
    %549 = tpu.matmul %546, %548, %cst_145 {dimension_numbers = #tpu.dot_dimension_numbers<[1], [0], [0], [1], [0, 0, 1, 1], [], []>} : vector<8x128xbf16>, vector<128x128xbf16>, vector<8x128xf32> -> vector<8x128xf32>
    %550 = vector.extract_strided_slice %549 {offsets = [1, 0], sizes = [1, 128], strides = [1, 1]} : vector<8x128xf32> to vector<1x128xf32>
    %551 = arith.addf %545, %550 : vector<1x128xf32>
    %c0_146 = arith.constant 0 : index
    %c0_147 = arith.constant 0 : index
    %552 = vector.load %arg12[%c0_146, %c0_147] : memref<2x128xf32, #tpu.memory_space<vmem>>, vector<1x128xf32>
    tpu.vector_store %arg12[%c0_146, %c0_147], %551 {strides = array<i32>} : memref<2x128xf32, #tpu.memory_space<vmem>>, vector<1x128xf32>,
    %553 = arith.truncf %538 : vector<8x128xf32> to vector<8x128xbf16>
    %c0_148 = arith.constant 0 : index
    %c0_149 = arith.constant 0 : index
    %c0_150 = arith.constant 0 : index
    %554 = vector.load %arg10[%c0_148, %c0_149, %c0_150] : memref<2x128x128xbf16, #tpu.memory_space<vmem>>, vector<1x128x128xbf16>
    %555 = vector.shape_cast %554 : vector<1x128x128xbf16> to vector<128x128xbf16>
    %cst_151 = arith.constant dense<0.000000e+00> : vector<8x128xf32>
    %556 = tpu.matmul %553, %555, %cst_151 {dimension_numbers = #tpu.dot_dimension_numbers<[1], [0], [0], [1], [0, 0, 1, 1], [], []>} : vector<8x128xbf16>, vector<128x128xbf16>, vector<8x128xf32> -> vector<8x128xf32>
    %557 = vector.extract_strided_slice %556 {offsets = [0, 0], sizes = [1, 128], strides = [1, 1]} : vector<8x128xf32> to vector<1x128xf32>
    %558 = arith.addf %539, %557 : vector<1x128xf32>
    %559 = arith.truncf %538 : vector<8x128xf32> to vector<8x128xbf16>
    %c1_152 = arith.constant 1 : index
    %c0_153 = arith.constant 0 : index
    %c0_154 = arith.constant 0 : index
    %560 = vector.load %arg10[%c1_152, %c0_153, %c0_154] : memref<2x128x128xbf16, #tpu.memory_space<vmem>>, vector<1x128x128xbf16>
    %561 = vector.shape_cast %560 : vector<1x128x128xbf16> to vector<128x128xbf16>
    %cst_155 = arith.constant dense<0.000000e+00> : vector<8x128xf32>
    %562 = tpu.matmul %559, %561, %cst_155 {dimension_numbers = #tpu.dot_dimension_numbers<[1], [0], [0], [1], [0, 0, 1, 1], [], []>} : vector<8x128xbf16>, vector<128x128xbf16>, vector<8x128xf32> -> vector<8x128xf32>
    %563 = vector.extract_strided_slice %562 {offsets = [1, 0], sizes = [1, 128], strides = [1, 1]} : vector<8x128xf32> to vector<1x128xf32>
    %564 = arith.addf %558, %563 : vector<1x128xf32>
    %c1_156 = arith.constant 1 : index
    %c0_157 = arith.constant 0 : index
    %565 = vector.load %arg12[%c1_156, %c0_157] : memref<2x128xf32, #tpu.memory_space<vmem>>, vector<1x128xf32>
    tpu.vector_store %arg12[%c1_156, %c0_157], %564 {strides = array<i32>} : memref<2x128xf32, #tpu.memory_space<vmem>>, vector<1x128xf32>,
    return
  }
}

</mosaic_0001>

<llo_original>
// kernel: tpu_custom_call.1
$region0: #{tpu_custom_call.1}
  #allocation0 [shape = 'u32[]', space=smem, size = 0x4, offset = 0x4, fixed_abs, tag = 'smem constant byte address 0x4 - core index']
  #allocation1 [shape = 'u32[144,128]{1,0:T(1,128)}', space=vmem, size = 0x12000, scoped, tag = 'internal scratch']
  %s0 = inlined_call_operand.hbm [shape: bf16[64,128], index: 0, kind: input, shape index: {}]
  %s1 = inlined_call_operand.hbm [shape: f32[2,8,128], index: 1, kind: input, shape index: {}]
  %s2 = inlined_call_operand.hbm [shape: bf16[128,384], index: 2, kind: input, shape index: {}]
  %s3 = inlined_call_operand.hbm [shape: bf16[128,384], index: 3, kind: input, shape index: {}]
  %s4 = inlined_call_operand.vmem [shape: f32[1,384], index: 4, kind: input, shape index: {}]
  %s5 = inlined_call_operand.vmem [shape: f32[1,128], index: 5, kind: input, shape index: {}]
  %s6 = inlined_call_operand.hbm [shape: bf16[128,384], index: 6, kind: input, shape index: {}]
  %s7 = inlined_call_operand.hbm [shape: bf16[128,384], index: 7, kind: input, shape index: {}]
  %s8 = inlined_call_operand.vmem [shape: f32[1,384], index: 8, kind: input, shape index: {}]
  %s9 = inlined_call_operand.vmem [shape: f32[1,128], index: 9, kind: input, shape index: {}]
  %s10 = inlined_call_operand.hbm [shape: bf16[2,128,128], index: 10, kind: input, shape index: {}]
  %s11 = inlined_call_operand.vmem [shape: f32[1,128], index: 11, kind: input, shape index: {}]
  %s12 = inlined_call_operand.hbm [shape: f32[2,128], index: 12, kind: output, shape index: {}]
  %s13 = sld [smem:[#allocation0]]
  $region86: #{tpu_custom_call.1} parent=0
    _
  %s15 = ssub.s32 1, %s13
  %s16 = scalar_select 0, %s15, %s13
  $region1: #{tpu_custom_call.1} parent=0
    #allocation2 [shape = 'u8[16384]{0}', space=vmem, size = 0x4000, scoped, tag = 'input window, operand 0, single buffered']
    #allocation3 [shape = 's32[1]{0}', space=sflag, size = 0x4, scoped, tag = 'scoped memory for tpu_custom_call.1']
    #allocation4 [shape = 's32[1]{0}', space=sflag, size = 0x4, scoped, tag = 'scoped memory for tpu_custom_call.1']
    #allocation5 [shape = 'u8[8192]{0}', space=vmem, size = 0x2000, scoped, tag = 'input window, operand 1, single buffered']
    #allocation6 [shape = 's32[1]{0}', space=sflag, size = 0x4, scoped, tag = 'scoped memory for tpu_custom_call.1']
    #allocation7 [shape = 'u8[98304]{0}', space=vmem, size = 0x18000, scoped, tag = 'input window, operand 2, single buffered']
    #allocation8 [shape = 'u8[98304]{0}', space=vmem, size = 0x18000, scoped, tag = 'input window, operand 3, single buffered']
    #allocation9 [shape = 's32[1]{0}', space=sflag, size = 0x4, scoped, tag = 'scoped memory for tpu_custom_call.1']
    #allocation10 [shape = 'u8[98304]{0}', space=vmem, size = 0x18000, scoped, tag = 'input window, operand 6, single buffered']
    #allocation11 [shape = 'u8[98304]{0}', space=vmem, size = 0x18000, scoped, tag = 'input window, operand 7, single buffered']
    #allocation12 [shape = 's32[1]{0}', space=sflag, size = 0x4, scoped, tag = 'scoped memory for tpu_custom_call.1']
    #allocation13 [shape = 'u8[65536]{0}', space=vmem, size = 0x10000, scoped, tag = 'input window, operand 10, single buffered']
    #allocation14 [shape = 'u8[1024]{0}', space=vmem, size = 0x400, scoped, tag = 'output window, operand 0, single buffered']
    %17 = vsyncpa [#allocation3], 0
    %18 = vsyncpa [#allocation6], 0
    %19 = vsyncpa [#allocation9], 0
    %20 = vsyncpa [#allocation12], 0
    %21 = vsyncpa [#allocation4], 0
    // Predicated region
    $region2: #{tpu_custom_call.1} parent=1 // pred_check
      _
    $region3: #{tpu_custom_call.1} parent=1 // pred_check_branch
      %23 = sbr.rel (0) target = $region5
    $region4: #{tpu_custom_call.1} parent=1 // pred_region
      %s25 = ssub.s32 512, 512
      %26 = vsyncadd [#allocation3], %s25
      %s27 = sshll.u32 [#allocation2], 4
      %s28 = int_to_ptr.vmem [resolvable:$true] %s27
      %33 = dma.hbm_to_vmem [thread:$0]  %s0, 512, %s28, [#allocation3], 64, 64, 4
    $region5: #{tpu_custom_call.1} parent=1 // pred_fallthru
      _
    // Predicated region
    $region6: #{tpu_custom_call.1} parent=1 // pred_check
      _
    $region7: #{tpu_custom_call.1} parent=1 // pred_check_branch
      %35 = sbr.rel (0) target = $region9
    $region8: #{tpu_custom_call.1} parent=1 // pred_region
      %s37 = ssub.s32 256, 256
      %38 = vsyncadd [#allocation6], %s37
      %s39 = sshll.u32 [#allocation5], 4
      %s40 = int_to_ptr.vmem [resolvable:$true] %s39
      %45 = dma.hbm_to_vmem [thread:$0]  %s1, 256, %s40, [#allocation6], 128, 128, 8
    $region9: #{tpu_custom_call.1} parent=1 // pred_fallthru
      _
    // Predicated region
    $region10: #{tpu_custom_call.1} parent=1 // pred_check
      _
    $region11: #{tpu_custom_call.1} parent=1 // pred_check_branch
      %47 = sbr.rel (0) target = $region13
    $region12: #{tpu_custom_call.1} parent=1 // pred_region
      %s49 = ssub.s32 3072, 3072
      %50 = vsyncadd [#allocation6], %s49
      %s51 = sshll.u32 [#allocation7], 4
      %s52 = int_to_ptr.vmem [resolvable:$true] %s51
      %57 = dma.hbm_to_vmem [thread:$0]  %s2, 3072, %s52, [#allocation6], 192, 192, 12
    $region13: #{tpu_custom_call.1} parent=1 // pred_fallthru
      _
    // Predicated region
    $region14: #{tpu_custom_call.1} parent=1 // pred_check
      _
    $region15: #{tpu_custom_call.1} parent=1 // pred_check_branch
      %59 = sbr.rel (0) target = $region17
    $region16: #{tpu_custom_call.1} parent=1 // pred_region
      %s61 = ssub.s32 3072, 3072
      %62 = vsyncadd [#allocation9], %s61
      %s63 = sshll.u32 [#allocation8], 4
      %s64 = int_to_ptr.vmem [resolvable:$true] %s63
      %69 = dma.hbm_to_vmem [thread:$0]  %s3, 3072, %s64, [#allocation9], 192, 192, 12
    $region17: #{tpu_custom_call.1} parent=1 // pred_fallthru
      _
    // Predicated region
    $region18: #{tpu_custom_call.1} parent=1 // pred_check
      _
    $region19: #{tpu_custom_call.1} parent=1 // pred_check_branch
      %71 = sbr.rel (0) target = $region21
    $region20: #{tpu_custom_call.1} parent=1 // pred_region
      _
    $region21: #{tpu_custom_call.1} parent=1 // pred_fallthru
      _
    // Predicated region
    $region22: #{tpu_custom_call.1} parent=1 // pred_check
      _
    $region23: #{tpu_custom_call.1} parent=1 // pred_check_branch
      %73 = sbr.rel (0) target = $region25
    $region24: #{tpu_custom_call.1} parent=1 // pred_region
      _
    $region25: #{tpu_custom_call.1} parent=1 // pred_fallthru
      _
    // Predicated region
    $region26: #{tpu_custom_call.1} parent=1 // pred_check
      _
    $region27: #{tpu_custom_call.1} parent=1 // pred_check_branch
      %75 = sbr.rel (0) target = $region29
    $region28: #{tpu_custom_call.1} parent=1 // pred_region
      %s77 = ssub.s32 3072, 3072
      %78 = vsyncadd [#allocation9], %s77
      %s79 = sshll.u32 [#allocation10], 4
      %s80 = int_to_ptr.vmem [resolvable:$true] %s79
      %85 = dma.hbm_to_vmem [thread:$0]  %s6, 3072, %s80, [#allocation9], 192, 192, 12
    $region29: #{tpu_custom_call.1} parent=1 // pred_fallthru
      _
    // Predicated region
    $region30: #{tpu_custom_call.1} parent=1 // pred_check
      _
    $region31: #{tpu_custom_call.1} parent=1 // pred_check_branch
      %87 = sbr.rel (0) target = $region33
    $region32: #{tpu_custom_call.1} parent=1 // pred_region
      %s89 = ssub.s32 3072, 3072
      %90 = vsyncadd [#allocation12], %s89
      %s91 = sshll.u32 [#allocation11], 4
      %s92 = int_to_ptr.vmem [resolvable:$true] %s91
      %97 = dma.hbm_to_vmem [thread:$0]  %s7, 3072, %s92, [#allocation12], 192, 192, 12
    $region33: #{tpu_custom_call.1} parent=1 // pred_fallthru
      _
    // Predicated region
    $region34: #{tpu_custom_call.1} parent=1 // pred_check
      _
    $region35: #{tpu_custom_call.1} parent=1 // pred_check_branch
      %99 = sbr.rel (0) target = $region37
    $region36: #{tpu_custom_call.1} parent=1 // pred_region
      _
    $region37: #{tpu_custom_call.1} parent=1 // pred_fallthru
      _
    // Predicated region
    $region38: #{tpu_custom_call.1} parent=1 // pred_check
      _
    $region39: #{tpu_custom_call.1} parent=1 // pred_check_branch
      %101 = sbr.rel (0) target = $region41
    $region40: #{tpu_custom_call.1} parent=1 // pred_region
      _
    $region41: #{tpu_custom_call.1} parent=1 // pred_fallthru
      _
    // Predicated region
    $region42: #{tpu_custom_call.1} parent=1 // pred_check
      _
    $region43: #{tpu_custom_call.1} parent=1 // pred_check_branch
      %103 = sbr.rel (0) target = $region45
    $region44: #{tpu_custom_call.1} parent=1 // pred_region
      %s105 = ssub.s32 2048, 2048
      %106 = vsyncadd [#allocation12], %s105
      %s107 = sshll.u32 [#allocation13], 4
      %s108 = int_to_ptr.vmem [resolvable:$true] %s107
      %113 = dma.hbm_to_vmem [thread:$0]  %s10, 2048, %s108, [#allocation12], 64, 64, 4
    $region45: #{tpu_custom_call.1} parent=1 // pred_fallthru
      _
    // Predicated region
    $region46: #{tpu_custom_call.1} parent=1 // pred_check
      _
    $region47: #{tpu_custom_call.1} parent=1 // pred_check_branch
      %115 = sbr.rel (0) target = $region49
    $region48: #{tpu_custom_call.1} parent=1 // pred_region
      _
    $region49: #{tpu_custom_call.1} parent=1 // pred_fallthru
      _
    // Predicated region
    $region50: #{tpu_custom_call.1} parent=1 // pred_check
      _
    $region51: #{tpu_custom_call.1} parent=1 // pred_check_branch
      %117 = sbr.rel (0) target = $region53
    $region52: #{tpu_custom_call.1} parent=1 // pred_region
      %118 = dma.done [#allocation3], 512
    $region53: #{tpu_custom_call.1} parent=1 // pred_fallthru
      _
    // Predicated region
    $region54: #{tpu_custom_call.1} parent=1 // pred_check
      _
    $region55: #{tpu_custom_call.1} parent=1 // pred_check_branch
      %120 = sbr.rel (0) target = $region57
    $region56: #{tpu_custom_call.1} parent=1 // pred_region
      %121 = dma.done [#allocation6], 256
    $region57: #{tpu_custom_call.1} parent=1 // pred_fallthru
      _
    // Predicated region
    $region58: #{tpu_custom_call.1} parent=1 // pred_check
      _
    $region59: #{tpu_custom_call.1} parent=1 // pred_check_branch
      %123 = sbr.rel (0) target = $region61
    $region60: #{tpu_custom_call.1} parent=1 // pred_region
      %124 = dma.done [#allocation6], 3072
    $region61: #{tpu_custom_call.1} parent=1 // pred_fallthru
      _
    // Predicated region
    $region62: #{tpu_custom_call.1} parent=1 // pred_check
      _
    $region63: #{tpu_custom_call.1} parent=1 // pred_check_branch
      %126 = sbr.rel (0) target = $region65
    $region64: #{tpu_custom_call.1} parent=1 // pred_region
      %127 = dma.done [#allocation9], 3072
    $region65: #{tpu_custom_call.1} parent=1 // pred_fallthru
      _
    // Predicated region
    $region66: #{tpu_custom_call.1} parent=1 // pred_check
      _
    $region67: #{tpu_custom_call.1} parent=1 // pred_check_branch
      %129 = sbr.rel (0) target = $region69
    $region68: #{tpu_custom_call.1} parent=1 // pred_region
      %130 = dma.done [#allocation9], 3072
    $region69: #{tpu_custom_call.1} parent=1 // pred_fallthru
      _
    // Predicated region
    $region70: #{tpu_custom_call.1} parent=1 // pred_check
      _
    $region71: #{tpu_custom_call.1} parent=1 // pred_check_branch
      %132 = sbr.rel (0) target = $region73
    $region72: #{tpu_custom_call.1} parent=1 // pred_region
      %133 = dma.done [#allocation12], 3072
    $region73: #{tpu_custom_call.1} parent=1 // pred_fallthru
      _
    // Predicated region
    $region74: #{tpu_custom_call.1} parent=1 // pred_check
      _
    $region75: #{tpu_custom_call.1} parent=1 // pred_check_branch
      %135 = sbr.rel (0) target = $region77
    $region76: #{tpu_custom_call.1} parent=1 // pred_region
      %136 = dma.done [#allocation12], 2048
    $region77: #{tpu_custom_call.1} parent=1 // pred_fallthru
      _
    %v138 = vld [vmem:[#allocation2] sm:$0xf]
    %v139 = vld [vmem:[#allocation2 + $0x4] sm:$0xf]
    %v140 = vld [vmem:[#allocation2 + $0x8] sm:$0xf]
    %v141 = vld [vmem:[#allocation2 + $0xc] sm:$0xf]
    %v142 = vld [vmem:[#allocation2 + $0x10] sm:$0xf]
    %v143 = vld [vmem:[#allocation2 + $0x14] sm:$0xf]
    %v144 = vld [vmem:[#allocation2 + $0x18] sm:$0xf]
    %v145 = vld [vmem:[#allocation2 + $0x1c] sm:$0xf]
    %v146 = vld [vmem:[#allocation7] sm:$0xff]
    %v147 = vld [vmem:[#allocation7 + $0x8] sm:$0xf]
    %v148 = vld [vmem:[#allocation7 + $0xc] sm:$0xff]
    %v149 = vld [vmem:[#allocation7 + $0x14] sm:$0xf]
    %v150 = vld [vmem:[#allocation7 + $0x18] sm:$0xff]
    %v151 = vld [vmem:[#allocation7 + $0x20] sm:$0xf]
    %v152 = vld [vmem:[#allocation7 + $0x24] sm:$0xff]
    %v153 = vld [vmem:[#allocation7 + $0x2c] sm:$0xf]
    %v154 = vld [vmem:[#allocation7 + $0x30] sm:$0xff]
    %v155 = vld [vmem:[#allocation7 + $0x38] sm:$0xf]
    %v156 = vld [vmem:[#allocation7 + $0x3c] sm:$0xff]
    %v157 = vld [vmem:[#allocation7 + $0x44] sm:$0xf]
    %v158 = vld [vmem:[#allocation7 + $0x48] sm:$0xff]
    %v159 = vld [vmem:[#allocation7 + $0x50] sm:$0xf]
    %v160 = vld [vmem:[#allocation7 + $0x54] sm:$0xff]
    %v161 = vld [vmem:[#allocation7 + $0x5c] sm:$0xf]
    %v162 = vld [vmem:[#allocation7 + $0x60] sm:$0xff]
    %v163 = vld [vmem:[#allocation7 + $0x68] sm:$0xf]
    %v164 = vld [vmem:[#allocation7 + $0x6c] sm:$0xff]
    %v165 = vld [vmem:[#allocation7 + $0x74] sm:$0xf]
    %v166 = vld [vmem:[#allocation7 + $0x78] sm:$0xff]
    %v167 = vld [vmem:[#allocation7 + $0x80] sm:$0xf]
    %v168 = vld [vmem:[#allocation7 + $0x84] sm:$0xff]
    %v169 = vld [vmem:[#allocation7 + $0x8c] sm:$0xf]
    %v170 = vld [vmem:[#allocation7 + $0x90] sm:$0xff]
    %v171 = vld [vmem:[#allocation7 + $0x98] sm:$0xf]
    %v172 = vld [vmem:[#allocation7 + $0x9c] sm:$0xff]
    %v173 = vld [vmem:[#allocation7 + $0xa4] sm:$0xf]
    %v174 = vld [vmem:[#allocation7 + $0xa8] sm:$0xff]
    %v175 = vld [vmem:[#allocation7 + $0xb0] sm:$0xf]
    %v176 = vld [vmem:[#allocation7 + $0xb4] sm:$0xff]
    %v177 = vld [vmem:[#allocation7 + $0xbc] sm:$0xf]
    %v178 = vld [vmem:[%s4] sm:$0x7]
    %v180 = vlaneseq
    %v181 = vshrl.u32 %v180, 7
    %v182 = vsub.s32 0, %v181
    %v183 = vrot.slane %v178, %v182
    %v184 = vlaneseq
    %v185 = vshrl.u32 %v184, 7
    %v186 = vsub.s32 1, %v185
    %v187 = vrot.slane %v178, %v186
    %v188 = vlaneseq
    %v189 = vshrl.u32 %v188, 7
    %v190 = vsub.s32 2, %v189
    %v191 = vrot.slane %v178, %v190
    %v203 = vunpack.c.l.b16 %v138
    %v204 = vunpack.c.l.b16 %v139
    %v205 = vunpack.c.l.b16 %v140
    %v206 = vunpack.c.l.b16 %v141
    %v207 = vunpack.c.l.b16 %v142
    %v208 = vunpack.c.l.b16 %v143
    %v209 = vunpack.c.l.b16 %v144
    %v210 = vunpack.c.l.b16 %v145
    %v211 = vpack.c.b16 %v204, %v203
    %v212 = vpack.c.b16 %v206, %v205
    %v213 = vpack.c.b16 %v208, %v207
    %v214 = vpack.c.b16 %v210, %v209
    %v251 = vunpack.c.l.b16 %v146
    %v252 = vunpack.c.h.b16 %v146
    %v253 = vunpack.c.l.b16 %v147
    %v254 = vunpack.c.l.b16 %v148
    %v255 = vunpack.c.h.b16 %v148
    %v256 = vunpack.c.l.b16 %v149
    %v257 = vunpack.c.l.b16 %v150
    %v258 = vunpack.c.h.b16 %v150
    %v259 = vunpack.c.l.b16 %v151
    %v260 = vunpack.c.l.b16 %v152
    %v261 = vunpack.c.h.b16 %v152
    %v262 = vunpack.c.l.b16 %v153
    %v263 = vunpack.c.l.b16 %v154
    %v264 = vunpack.c.h.b16 %v154
    %v265 = vunpack.c.l.b16 %v155
    %v266 = vunpack.c.l.b16 %v156
    %v267 = vunpack.c.h.b16 %v156
    %v268 = vunpack.c.l.b16 %v157
    %v269 = vunpack.c.l.b16 %v158
    %v270 = vunpack.c.h.b16 %v158
    %v271 = vunpack.c.l.b16 %v159
    %v272 = vunpack.c.l.b16 %v160
    %v273 = vunpack.c.h.b16 %v160
    %v274 = vunpack.c.l.b16 %v161
    %v275 = vunpack.c.l.b16 %v162
    %v276 = vunpack.c.h.b16 %v162
    %v277 = vunpack.c.l.b16 %v163
    %v278 = vunpack.c.l.b16 %v164
    %v279 = vunpack.c.h.b16 %v164
    %v280 = vunpack.c.l.b16 %v165
    %v281 = vunpack.c.l.b16 %v166
    %v282 = vunpack.c.h.b16 %v166
    %v283 = vunpack.c.l.b16 %v167
    %v284 = vunpack.c.l.b16 %v168
    %v285 = vunpack.c.h.b16 %v168
    %v286 = vunpack.c.l.b16 %v169
    %v287 = vunpack.c.l.b16 %v170
    %v288 = vunpack.c.h.b16 %v170
    %v289 = vunpack.c.l.b16 %v171
    %v290 = vunpack.c.l.b16 %v172
    %v291 = vunpack.c.h.b16 %v172
    %v292 = vunpack.c.l.b16 %v173
    %v293 = vunpack.c.l.b16 %v174
    %v294 = vunpack.c.h.b16 %v174
    %v295 = vunpack.c.l.b16 %v175
    %v296 = vunpack.c.l.b16 %v176
    %v297 = vunpack.c.h.b16 %v176
    %v298 = vunpack.c.l.b16 %v177
    %v299 = vpack.c.b16 %v254, %v251
    %v300 = vpack.c.b16 %v255, %v252
    %v301 = vpack.c.b16 %v256, %v253
    %v302 = vpack.c.b16 %v260, %v257
    %v303 = vpack.c.b16 %v261, %v258
    %v304 = vpack.c.b16 %v262, %v259
    %v305 = vpack.c.b16 %v266, %v263
    %v306 = vpack.c.b16 %v267, %v264
    %v307 = vpack.c.b16 %v268, %v265
    %v308 = vpack.c.b16 %v272, %v269
    %v309 = vpack.c.b16 %v273, %v270
    %v310 = vpack.c.b16 %v274, %v271
    %v311 = vpack.c.b16 %v278, %v275
    %v312 = vpack.c.b16 %v279, %v276
    %v313 = vpack.c.b16 %v280, %v277
    %v314 = vpack.c.b16 %v284, %v281
    %v315 = vpack.c.b16 %v285, %v282
    %v316 = vpack.c.b16 %v286, %v283
    %v317 = vpack.c.b16 %v290, %v287
    %v318 = vpack.c.b16 %v291, %v288
    %v319 = vpack.c.b16 %v292, %v289
    %v320 = vpack.c.b16 %v296, %v293
    %v321 = vpack.c.b16 %v297, %v294
    %v322 = vpack.c.b16 %v298, %v295
    %347 = vmatprep.subr.bf16.mxu0 %v321
    %348 = vmatpush1.bf16.msra.mxu0 %v320
    %349 = vmatprep.subr.bf16.mxu0 %v318
    %350 = vmatpush1.bf16.msra.mxu0 %v317
    %351 = vmatprep.subr.bf16.mxu0 %v315
    %352 = vmatpush1.bf16.msra.mxu0 %v314
    %353 = vmatprep.subr.bf16.mxu0 %v312
    %354 = vmatpush1.bf16.msra.mxu0 %v311
    %355 = vmatprep.subr.bf16.mxu0 %v309
    %356 = vmatpush1.bf16.msra.mxu0 %v308
    %357 = vmatprep.subr.bf16.mxu0 %v306
    %358 = vmatpush1.bf16.msra.mxu0 %v305
    %359 = vmatprep.subr.bf16.mxu0 %v303
    %360 = vmatpush1.bf16.msra.mxu0 %v302
    %361 = vmatprep.subr.bf16.mxu0 %v300
    %362 = vmatpush1.bf16.msra.mxu0 %v299
    %363 = vmatprep.subr.bf16.mxu0 0
    %364 = vmatpush2.bf16.msra.mxu0 0
    %365 = vmatprep.subr.bf16.mxu0 0
    %366 = vmatpush2.bf16.msra.mxu0 0
    %367 = vmatprep.subr.bf16.mxu0 0
    %368 = vmatpush2.bf16.msra.mxu0 0
    %369 = vmatprep.subr.bf16.mxu0 0
    %370 = vmatpush2.bf16.msra.mxu0 0
    %371 = vmatprep.subr.bf16.mxu0 0
    %372 = vmatpush2.bf16.msra.mxu0 0
    %373 = vmatprep.subr.bf16.mxu0 0
    %374 = vmatpush2.bf16.msra.mxu0 0
    %375 = vmatprep.subr.bf16.mxu0 0
    %376 = vmatpush2.bf16.msra.mxu0 0
    %377 = vmatprep.subr.bf16.mxu0 0
    %378 = vmatpush2.bf16.msra.mxu0 0
    %379 = vmatprep.mubr.bf16.mxu0 0
    %380 = vmatmul.mubr.bf16.gmra.mxu0 %v211
    %v381 = vpop.f32.mrf.mxu0
    %v382 = vadd.f32 %v183, %v381
    %v383 = vpop.f32.mrf.mxu0
    %v384 = vadd.f32 %v187, %v383
    %v385 = vpop.f32.mrf.mxu0
    %v386 = vadd.f32 %v183, %v385
    %v387 = vpop.f32.mrf.mxu0
    %v388 = vadd.f32 %v187, %v387
    %389 = vmatprep.mubr.bf16.mxu0 0
    %390 = vmatmul.mubr.bf16.gmra.mxu0 %v212
    %v391 = vpop.f32.mrf.mxu0
    %v392 = vadd.f32 %v183, %v391
    %v393 = vpop.f32.mrf.mxu0
    %v394 = vadd.f32 %v187, %v393
    %v395 = vpop.f32.mrf.mxu0
    %v396 = vadd.f32 %v183, %v395
    %v397 = vpop.f32.mrf.mxu0
    %v398 = vadd.f32 %v187, %v397
    %399 = vmatprep.mubr.bf16.mxu0 0
    %400 = vmatmul.mubr.bf16.gmra.mxu0 %v213
    %v401 = vpop.f32.mrf.mxu0
    %v402 = vadd.f32 %v183, %v401
    %v403 = vpop.f32.mrf.mxu0
    %v404 = vadd.f32 %v187, %v403
    %v405 = vpop.f32.mrf.mxu0
    %v406 = vadd.f32 %v183, %v405
    %v407 = vpop.f32.mrf.mxu0
    %v408 = vadd.f32 %v187, %v407
    %409 = vmatprep.mubr.bf16.mxu0 0
    %410 = vmatmul.mubr.bf16.gmra.mxu0 %v214
    %v411 = vpop.f32.mrf.mxu0
    %v412 = vadd.f32 %v183, %v411
    %v413 = vpop.f32.mrf.mxu0
    %v414 = vadd.f32 %v187, %v413
    %v415 = vpop.f32.mrf.mxu0
    %v416 = vadd.f32 %v183, %v415
    %v417 = vpop.f32.mrf.mxu0
    %v418 = vadd.f32 %v187, %v417
    %419 = vdwg.mxu0
    %420 = vmatprep.subr.bf16.mxu0 0
    %421 = vmatpush1.bf16.msra.mxu0 %v322
    %422 = vmatprep.subr.bf16.mxu0 0
    %423 = vmatpush1.bf16.msra.mxu0 %v319
    %424 = vmatprep.subr.bf16.mxu0 0
    %425 = vmatpush1.bf16.msra.mxu0 %v316
    %426 = vmatprep.subr.bf16.mxu0 0
    %427 = vmatpush1.bf16.msra.mxu0 %v313
    %428 = vmatprep.subr.bf16.mxu0 0
    %429 = vmatpush1.bf16.msra.mxu0 %v310
    %430 = vmatprep.subr.bf16.mxu0 0
    %431 = vmatpush1.bf16.msra.mxu0 %v307
    %432 = vmatprep.subr.bf16.mxu0 0
    %433 = vmatpush1.bf16.msra.mxu0 %v304
    %434 = vmatprep.subr.bf16.mxu0 0
    %435 = vmatpush1.bf16.msra.mxu0 %v301
    %436 = vmatprep.subr.bf16.mxu0 0
    %437 = vmatpush2.bf16.msra.mxu0 0
    %438 = vmatprep.subr.bf16.mxu0 0
    %439 = vmatpush2.bf16.msra.mxu0 0
    %440 = vmatprep.subr.bf16.mxu0 0
    %441 = vmatpush2.bf16.msra.mxu0 0
    %442 = vmatprep.subr.bf16.mxu0 0
    %443 = vmatpush2.bf16.msra.mxu0 0
    %444 = vmatprep.subr.bf16.mxu0 0
    %445 = vmatpush2.bf16.msra.mxu0 0
    %446 = vmatprep.subr.bf16.mxu0 0
    %447 = vmatpush2.bf16.msra.mxu0 0
    %448 = vmatprep.subr.bf16.mxu0 0
    %449 = vmatpush2.bf16.msra.mxu0 0
    %450 = vmatprep.subr.bf16.mxu0 0
    %451 = vmatpush2.bf16.msra.mxu0 0
    %452 = vmatprep.mubr.bf16.mxu0 0
    %453 = vmatmul.mubr.bf16.gmra.mxu0 %v211
    %v454 = vpop.f32.mrf.mxu0
    %v455 = vadd.f32 %v191, %v454
    %v456 = vpop.f32.mrf.mxu0
    %v457 = vpop.f32.mrf.mxu0
    %v458 = vadd.f32 %v191, %v457
    %v459 = vpop.f32.mrf.mxu0
    %460 = vmatprep.mubr.bf16.mxu0 0
    %461 = vmatmul.mubr.bf16.gmra.mxu0 %v212
    %v462 = vpop.f32.mrf.mxu0
    %v463 = vadd.f32 %v191, %v462
    %v464 = vpop.f32.mrf.mxu0
    %v465 = vpop.f32.mrf.mxu0
    %v466 = vadd.f32 %v191, %v465
    %v467 = vpop.f32.mrf.mxu0
    %468 = vmatprep.mubr.bf16.mxu0 0
    %469 = vmatmul.mubr.bf16.gmra.mxu0 %v213
    %v470 = vpop.f32.mrf.mxu0
    %v471 = vadd.f32 %v191, %v470
    %v472 = vpop.f32.mrf.mxu0
    %v473 = vpop.f32.mrf.mxu0
    %v474 = vadd.f32 %v191, %v473
    %v475 = vpop.f32.mrf.mxu0
    %476 = vmatprep.mubr.bf16.mxu0 0
    %477 = vmatmul.mubr.bf16.gmra.mxu0 %v214
    %v478 = vpop.f32.mrf.mxu0
    %v479 = vadd.f32 %v191, %v478
    %v480 = vpop.f32.mrf.mxu0
    %v481 = vpop.f32.mrf.mxu0
    %v482 = vadd.f32 %v191, %v481
    %v483 = vpop.f32.mrf.mxu0
    %484 = vdwg.mxu0
    %v485 = vld [vmem:[%s8] sm:$0x7]
    %v487 = vlaneseq
    %v488 = vshrl.u32 %v487, 7
    %v489 = vsub.s32 0, %v488
    %v490 = vrot.slane %v485, %v489
    %v491 = vlaneseq
    %v492 = vshrl.u32 %v491, 7
    %v493 = vsub.s32 1, %v492
    %v494 = vrot.slane %v485, %v493
    %v495 = vlaneseq
    %v496 = vshrl.u32 %v495, 7
    %v497 = vsub.s32 2, %v496
    %v498 = vrot.slane %v485, %v497
    %v502 = vld [vmem:[%s5] sm:$0x1]
    %v504 = vlaneseq
    %v505 = vshrl.u32 %v504, 7
    %v506 = vsub.s32 0, %v505
    %v507 = vrot.slane %v502, %v506
    %v509 = vld [vmem:[%s9] sm:$0x1]
    %v511 = vlaneseq
    %v512 = vshrl.u32 %v511, 7
    %v513 = vsub.s32 0, %v512
    %v514 = vrot.slane %v509, %v513
    %v516 = vld [vmem:[#allocation5] sm:$0xff]
    %s517 = scalar_lea.vmem [#allocation5], 8
    %v518 = vld [vmem:[%s517] sm:$0xff]
    %v519 = vpack.c.bf16 %v516, %v516
    %v520 = vld [vmem:[#allocation8] sm:$0xff]
    %v521 = vld [vmem:[#allocation8 + $0x8] sm:$0xf]
    %v522 = vld [vmem:[#allocation8 + $0xc] sm:$0xff]
    %v523 = vld [vmem:[#allocation8 + $0x14] sm:$0xf]
    %v524 = vld [vmem:[#allocation8 + $0x18] sm:$0xff]
    %v525 = vld [vmem:[#allocation8 + $0x20] sm:$0xf]
    %v526 = vld [vmem:[#allocation8 + $0x24] sm:$0xff]
    %v527 = vld [vmem:[#allocation8 + $0x2c] sm:$0xf]
    %v528 = vld [vmem:[#allocation8 + $0x30] sm:$0xff]
    %v529 = vld [vmem:[#allocation8 + $0x38] sm:$0xf]
    %v530 = vld [vmem:[#allocation8 + $0x3c] sm:$0xff]
    %v531 = vld [vmem:[#allocation8 + $0x44] sm:$0xf]
    %v532 = vld [vmem:[#allocation8 + $0x48] sm:$0xff]
    %v533 = vld [vmem:[#allocation8 + $0x50] sm:$0xf]
    %v534 = vld [vmem:[#allocation8 + $0x54] sm:$0xff]
    %v535 = vld [vmem:[#allocation8 + $0x5c] sm:$0xf]
    %v536 = vld [vmem:[#allocation8 + $0x60] sm:$0xff]
    %v537 = vld [vmem:[#allocation8 + $0x68] sm:$0xf]
    %v538 = vld [vmem:[#allocation8 + $0x6c] sm:$0xff]
    %v539 = vld [vmem:[#allocation8 + $0x74] sm:$0xf]
    %v540 = vld [vmem:[#allocation8 + $0x78] sm:$0xff]
    %v541 = vld [vmem:[#allocation8 + $0x80] sm:$0xf]
    %v542 = vld [vmem:[#allocation8 + $0x84] sm:$0xff]
    %v543 = vld [vmem:[#allocation8 + $0x8c] sm:$0xf]
    %v544 = vld [vmem:[#allocation8 + $0x90] sm:$0xff]
    %v545 = vld [vmem:[#allocation8 + $0x98] sm:$0xf]
    %v546 = vld [vmem:[#allocation8 + $0x9c] sm:$0xff]
    %v547 = vld [vmem:[#allocation8 + $0xa4] sm:$0xf]
    %v548 = vld [vmem:[#allocation8 + $0xa8] sm:$0xff]
    %v549 = vld [vmem:[#allocation8 + $0xb0] sm:$0xf]
    %v550 = vld [vmem:[#allocation8 + $0xb4] sm:$0xff]
    %v551 = vld [vmem:[#allocation8 + $0xbc] sm:$0xf]
    %v584 = vunpack.c.l.b16 %v520
    %v585 = vunpack.c.h.b16 %v520
    %v586 = vunpack.c.l.b16 %v521
    %v587 = vunpack.c.l.b16 %v522
    %v588 = vunpack.c.h.b16 %v522
    %v589 = vunpack.c.l.b16 %v523
    %v590 = vunpack.c.l.b16 %v524
    %v591 = vunpack.c.h.b16 %v524
    %v592 = vunpack.c.l.b16 %v525
    %v593 = vunpack.c.l.b16 %v526
    %v594 = vunpack.c.h.b16 %v526
    %v595 = vunpack.c.l.b16 %v527
    %v596 = vunpack.c.l.b16 %v528
    %v597 = vunpack.c.h.b16 %v528
    %v598 = vunpack.c.l.b16 %v529
    %v599 = vunpack.c.l.b16 %v530
    %v600 = vunpack.c.h.b16 %v530
    %v601 = vunpack.c.l.b16 %v531
    %v602 = vunpack.c.l.b16 %v532
    %v603 = vunpack.c.h.b16 %v532
    %v604 = vunpack.c.l.b16 %v533
    %v605 = vunpack.c.l.b16 %v534
    %v606 = vunpack.c.h.b16 %v534
    %v607 = vunpack.c.l.b16 %v535
    %v608 = vunpack.c.l.b16 %v536
    %v609 = vunpack.c.h.b16 %v536
    %v610 = vunpack.c.l.b16 %v537
    %v611 = vunpack.c.l.b16 %v538
    %v612 = vunpack.c.h.b16 %v538
    %v613 = vunpack.c.l.b16 %v539
    %v614 = vunpack.c.l.b16 %v540
    %v615 = vunpack.c.h.b16 %v540
    %v616 = vunpack.c.l.b16 %v541
    %v617 = vunpack.c.l.b16 %v542
    %v618 = vunpack.c.h.b16 %v542
    %v619 = vunpack.c.l.b16 %v543
    %v620 = vunpack.c.l.b16 %v544
    %v621 = vunpack.c.h.b16 %v544
    %v622 = vunpack.c.l.b16 %v545
    %v623 = vunpack.c.l.b16 %v546
    %v624 = vunpack.c.h.b16 %v546
    %v625 = vunpack.c.l.b16 %v547
    %v626 = vunpack.c.l.b16 %v548
    %v627 = vunpack.c.h.b16 %v548
    %v628 = vunpack.c.l.b16 %v549
    %v629 = vunpack.c.l.b16 %v550
    %v630 = vunpack.c.h.b16 %v550
    %v631 = vunpack.c.l.b16 %v551
    %v632 = vpack.c.b16 %v587, %v584
    %v633 = vpack.c.b16 %v588, %v585
    %v634 = vpack.c.b16 %v589, %v586
    %v635 = vpack.c.b16 %v593, %v590
    %v636 = vpack.c.b16 %v594, %v591
    %v637 = vpack.c.b16 %v595, %v592
    %v638 = vpack.c.b16 %v599, %v596
    %v639 = vpack.c.b16 %v600, %v597
    %v640 = vpack.c.b16 %v601, %v598
    %v641 = vpack.c.b16 %v605, %v602
    %v642 = vpack.c.b16 %v606, %v603
    %v643 = vpack.c.b16 %v607, %v604
    %v644 = vpack.c.b16 %v611, %v608
    %v645 = vpack.c.b16 %v612, %v609
    %v646 = vpack.c.b16 %v613, %v610
    %v647 = vpack.c.b16 %v617, %v614
    %v648 = vpack.c.b16 %v618, %v615
    %v649 = vpack.c.b16 %v619, %v616
    %v650 = vpack.c.b16 %v623, %v620
    %v651 = vpack.c.b16 %v624, %v621
    %v652 = vpack.c.b16 %v625, %v622
    %v653 = vpack.c.b16 %v629, %v626
    %v654 = vpack.c.b16 %v630, %v627
    %v655 = vpack.c.b16 %v631, %v628
    %680 = vmatprep.subr.bf16.mxu0 %v654
    %681 = vmatpush1.bf16.msra.mxu0 %v653
    %682 = vmatprep.subr.bf16.mxu0 %v651
    %683 = vmatpush1.bf16.msra.mxu0 %v650
    %684 = vmatprep.subr.bf16.mxu0 %v648
    %685 = vmatpush1.bf16.msra.mxu0 %v647
    %686 = vmatprep.subr.bf16.mxu0 %v645
    %687 = vmatpush1.bf16.msra.mxu0 %v644
    %688 = vmatprep.subr.bf16.mxu0 %v642
    %689 = vmatpush1.bf16.msra.mxu0 %v641
    %690 = vmatprep.subr.bf16.mxu0 %v639
    %691 = vmatpush1.bf16.msra.mxu0 %v638
    %692 = vmatprep.subr.bf16.mxu0 %v636
    %693 = vmatpush1.bf16.msra.mxu0 %v635
    %694 = vmatprep.subr.bf16.mxu0 %v633
    %695 = vmatpush1.bf16.msra.mxu0 %v632
    %696 = vmatprep.subr.bf16.mxu0 0
    %697 = vmatpush2.bf16.msra.mxu0 0
    %698 = vmatprep.subr.bf16.mxu0 0
    %699 = vmatpush2.bf16.msra.mxu0 0
    %700 = vmatprep.subr.bf16.mxu0 0
    %701 = vmatpush2.bf16.msra.mxu0 0
    %702 = vmatprep.subr.bf16.mxu0 0
    %703 = vmatpush2.bf16.msra.mxu0 0
    %704 = vmatprep.subr.bf16.mxu0 0
    %705 = vmatpush2.bf16.msra.mxu0 0
    %706 = vmatprep.subr.bf16.mxu0 0
    %707 = vmatpush2.bf16.msra.mxu0 0
    %708 = vmatprep.subr.bf16.mxu0 0
    %709 = vmatpush2.bf16.msra.mxu0 0
    %710 = vmatprep.subr.bf16.mxu0 0
    %711 = vmatpush2.bf16.msra.mxu0 0
    %712 = vmatprep.mubr.bf16.mxu0 0
    %713 = vmatmul.mubr.bf16.gmra.mxu0 %v519
    %v714 = vpop.f32.mrf.mxu0
    %v715 = vadd.f32 0.0, %v714
    %v716 = vpop.f32.mrf.mxu0
    %v717 = vadd.f32 0.0, %v716
    %v718 = vpop.f32.mrf.mxu0
    %v719 = vpop.f32.mrf.mxu0
    %720 = vdwg.mxu0
    %721 = vmatprep.subr.bf16.mxu0 0
    %722 = vmatpush1.bf16.msra.mxu0 %v655
    %723 = vmatprep.subr.bf16.mxu0 0
    %724 = vmatpush1.bf16.msra.mxu0 %v652
    %725 = vmatprep.subr.bf16.mxu0 0
    %726 = vmatpush1.bf16.msra.mxu0 %v649
    %727 = vmatprep.subr.bf16.mxu0 0
    %728 = vmatpush1.bf16.msra.mxu0 %v646
    %729 = vmatprep.subr.bf16.mxu0 0
    %730 = vmatpush1.bf16.msra.mxu0 %v643
    %731 = vmatprep.subr.bf16.mxu0 0
    %732 = vmatpush1.bf16.msra.mxu0 %v640
    %733 = vmatprep.subr.bf16.mxu0 0
    %734 = vmatpush1.bf16.msra.mxu0 %v637
    %735 = vmatprep.subr.bf16.mxu0 0
    %736 = vmatpush1.bf16.msra.mxu0 %v634
    %737 = vmatprep.subr.bf16.mxu0 0
    %738 = vmatpush2.bf16.msra.mxu0 0
    %739 = vmatprep.subr.bf16.mxu0 0
    %740 = vmatpush2.bf16.msra.mxu0 0
    %741 = vmatprep.subr.bf16.mxu0 0
    %742 = vmatpush2.bf16.msra.mxu0 0
    %743 = vmatprep.subr.bf16.mxu0 0
    %744 = vmatpush2.bf16.msra.mxu0 0
    %745 = vmatprep.subr.bf16.mxu0 0
    %746 = vmatpush2.bf16.msra.mxu0 0
    %747 = vmatprep.subr.bf16.mxu0 0
    %748 = vmatpush2.bf16.msra.mxu0 0
    %749 = vmatprep.subr.bf16.mxu0 0
    %750 = vmatpush2.bf16.msra.mxu0 0
    %751 = vmatprep.subr.bf16.mxu0 0
    %752 = vmatpush2.bf16.msra.mxu0 0
    %753 = vmatprep.mubr.bf16.mxu0 0
    %754 = vmatmul.mubr.bf16.gmra.mxu0 %v519
    %v755 = vpop.f32.mrf.mxu0
    %v756 = vadd.f32 0.0, %v755
    %v757 = vpop.f32.mrf.mxu0
    %v758 = vpop.f32.mrf.mxu0
    %v759 = vpop.f32.mrf.mxu0
    %760 = vdwg.mxu0
    %v761 = vadd.f32 %v382, %v715
    %v762 = vxor.u32 %v761, 2147483648
    %v763 = vmul.f32 %v762, 1.442695
    %v764 = vpow.pop %v763
    %v765 = vadd.f32 %v764, 1.0
    %v766 = vrcp.pop %v765
    %v767 = vmul.f32 1.0, %v766
    %v768 = vadd.f32 %v384, %v717
    %v769 = vxor.u32 %v768, 2147483648
    %v770 = vmul.f32 %v769, 1.442695
    %v771 = vpow.pop %v770
    %v772 = vadd.f32 %v771, 1.0
    %v773 = vrcp.pop %v772
    %v774 = vmul.f32 1.0, %v773
    %v775 = vadd.f32 %v756, %v507
    %v776 = vmul.f32 %v767, %v775
    %v777 = vadd.f32 %v455, %v776
    %v778 = vtanh.pop %v777
    %v779 = vsub.f32 1.0, %v774
    %v780 = vmul.f32 %v779, %v778
    %v781 = vmul.f32 %v774, %v516
    %v782 = vadd.f32 %v780, %v781
    %v783 = vpack.c.bf16 %v782, %v782
    %784 = vmatprep.subr.bf16.mxu0 %v654
    %785 = vmatpush1.bf16.msra.mxu0 %v653
    %786 = vmatprep.subr.bf16.mxu0 %v651
    %787 = vmatpush1.bf16.msra.mxu0 %v650
    %788 = vmatprep.subr.bf16.mxu0 %v648
    %789 = vmatpush1.bf16.msra.mxu0 %v647
    %790 = vmatprep.subr.bf16.mxu0 %v645
    %791 = vmatpush1.bf16.msra.mxu0 %v644
    %792 = vmatprep.subr.bf16.mxu0 %v642
    %793 = vmatpush1.bf16.msra.mxu0 %v641
    %794 = vmatprep.subr.bf16.mxu0 %v639
    %795 = vmatpush1.bf16.msra.mxu0 %v638
    %796 = vmatprep.subr.bf16.mxu0 %v636
    %797 = vmatpush1.bf16.msra.mxu0 %v635
    %798 = vmatprep.subr.bf16.mxu0 %v633
    %799 = vmatpush1.bf16.msra.mxu0 %v632
    %800 = vmatprep.subr.bf16.mxu0 0
    %801 = vmatpush2.bf16.msra.mxu0 0
    %802 = vmatprep.subr.bf16.mxu0 0
    %803 = vmatpush2.bf16.msra.mxu0 0
    %804 = vmatprep.subr.bf16.mxu0 0
    %805 = vmatpush2.bf16.msra.mxu0 0
    %806 = vmatprep.subr.bf16.mxu0 0
    %807 = vmatpush2.bf16.msra.mxu0 0
    %808 = vmatprep.subr.bf16.mxu0 0
    %809 = vmatpush2.bf16.msra.mxu0 0
    %810 = vmatprep.subr.bf16.mxu0 0
    %811 = vmatpush2.bf16.msra.mxu0 0
    %812 = vmatprep.subr.bf16.mxu0 0
    %813 = vmatpush2.bf16.msra.mxu0 0
    %814 = vmatprep.subr.bf16.mxu0 0
    %815 = vmatpush2.bf16.msra.mxu0 0
    %816 = vmatprep.mubr.bf16.mxu0 0
    %817 = vmatmul.mubr.bf16.gmra.mxu0 %v783
    %v818 = vpop.f32.mrf.mxu0
    %v819 = vadd.f32 0.0, %v818
    %v820 = vpop.f32.mrf.mxu0
    %v821 = vadd.f32 0.0, %v820
    %v822 = vpop.f32.mrf.mxu0
    %v823 = vpop.f32.mrf.mxu0
    %824 = vdwg.mxu0
    %825 = vmatprep.subr.bf16.mxu0 0
    %826 = vmatpush1.bf16.msra.mxu0 %v655
    %827 = vmatprep.subr.bf16.mxu0 0
    %828 = vmatpush1.bf16.msra.mxu0 %v652
    %829 = vmatprep.subr.bf16.mxu0 0
    %830 = vmatpush1.bf16.msra.mxu0 %v649
    %831 = vmatprep.subr.bf16.mxu0 0
    %832 = vmatpush1.bf16.msra.mxu0 %v646
    %833 = vmatprep.subr.bf16.mxu0 0
    %834 = vmatpush1.bf16.msra.mxu0 %v643
    %835 = vmatprep.subr.bf16.mxu0 0
    %836 = vmatpush1.bf16.msra.mxu0 %v640
    %837 = vmatprep.subr.bf16.mxu0 0
    %838 = vmatpush1.bf16.msra.mxu0 %v637
    %839 = vmatprep.subr.bf16.mxu0 0
    %840 = vmatpush1.bf16.msra.mxu0 %v634
    %841 = vmatprep.subr.bf16.mxu0 0
    %842 = vmatpush2.bf16.msra.mxu0 0
    %843 = vmatprep.subr.bf16.mxu0 0
    %844 = vmatpush2.bf16.msra.mxu0 0
    %845 = vmatprep.subr.bf16.mxu0 0
    %846 = vmatpush2.bf16.msra.mxu0 0
    %847 = vmatprep.subr.bf16.mxu0 0
    %848 = vmatpush2.bf16.msra.mxu0 0
    %849 = vmatprep.subr.bf16.mxu0 0
    %850 = vmatpush2.bf16.msra.mxu0 0
    %851 = vmatprep.subr.bf16.mxu0 0
    %852 = vmatpush2.bf16.msra.mxu0 0
    %853 = vmatprep.subr.bf16.mxu0 0
    %854 = vmatpush2.bf16.msra.mxu0 0
    %855 = vmatprep.subr.bf16.mxu0 0
    %856 = vmatpush2.bf16.msra.mxu0 0
    %857 = vmatprep.mubr.bf16.mxu0 0
    %858 = vmatmul.mubr.bf16.gmra.mxu0 %v783
    %v859 = vpop.f32.mrf.mxu0
    %v860 = vadd.f32 0.0, %v859
    %v861 = vpop.f32.mrf.mxu0
    %v862 = vpop.f32.mrf.mxu0
    %v863 = vpop.f32.mrf.mxu0
    %864 = vdwg.mxu0
    %v865 = vadd.f32 %v386, %v819
    %v866 = vxor.u32 %v865, 2147483648
    %v867 = vmul.f32 %v866, 1.442695
    %v868 = vpow.pop %v867
    %v869 = vadd.f32 %v868, 1.0
    %v870 = vrcp.pop %v869
    %v871 = vmul.f32 1.0, %v870
    %v872 = vadd.f32 %v388, %v821
    %v873 = vxor.u32 %v872, 2147483648
    %v874 = vmul.f32 %v873, 1.442695
    %v875 = vpow.pop %v874
    %v876 = vadd.f32 %v875, 1.0
    %v877 = vrcp.pop %v876
    %v878 = vmul.f32 1.0, %v877
    %v879 = vadd.f32 %v860, %v507
    %v880 = vmul.f32 %v871, %v879
    %v881 = vadd.f32 %v458, %v880
    %v882 = vtanh.pop %v881
    %v883 = vsub.f32 1.0, %v878
    %v884 = vmul.f32 %v883, %v882
    %v885 = vmul.f32 %v878, %v782
    %v886 = vadd.f32 %v884, %v885
    %v887 = vld [vmem:[#allocation10] sm:$0xff]
    %v888 = vld [vmem:[#allocation10 + $0x8] sm:$0xf]
    %v889 = vld [vmem:[#allocation10 + $0xc] sm:$0xff]
    %v890 = vld [vmem:[#allocation10 + $0x14] sm:$0xf]
    %v891 = vld [vmem:[#allocation10 + $0x18] sm:$0xff]
    %v892 = vld [vmem:[#allocation10 + $0x20] sm:$0xf]
    %v893 = vld [vmem:[#allocation10 + $0x24] sm:$0xff]
    %v894 = vld [vmem:[#allocation10 + $0x2c] sm:$0xf]
    %v895 = vld [vmem:[#allocation10 + $0x30] sm:$0xff]
    %v896 = vld [vmem:[#allocation10 + $0x38] sm:$0xf]
    %v897 = vld [vmem:[#allocation10 + $0x3c] sm:$0xff]
    %v898 = vld [vmem:[#allocation10 + $0x44] sm:$0xf]
    %v899 = vld [vmem:[#allocation10 + $0x48] sm:$0xff]
    %v900 = vld [vmem:[#allocation10 + $0x50] sm:$0xf]
    %v901 = vld [vmem:[#allocation10 + $0x54] sm:$0xff]
    %v902 = vld [vmem:[#allocation10 + $0x5c] sm:$0xf]
    %v903 = vld [vmem:[#allocation10 + $0x60] sm:$0xff]
    %v904 = vld [vmem:[#allocation10 + $0x68] sm:$0xf]
    %v905 = vld [vmem:[#allocation10 + $0x6c] sm:$0xff]
    %v906 = vld [vmem:[#allocation10 + $0x74] sm:$0xf]
    %v907 = vld [vmem:[#allocation10 + $0x78] sm:$0xff]
    %v908 = vld [vmem:[#allocation10 + $0x80] sm:$0xf]
    %v909 = vld [vmem:[#allocation10 + $0x84] sm:$0xff]
    %v910 = vld [vmem:[#allocation10 + $0x8c] sm:$0xf]
    %v911 = vld [vmem:[#allocation10 + $0x90] sm:$0xff]
    %v912 = vld [vmem:[#allocation10 + $0x98] sm:$0xf]
    %v913 = vld [vmem:[#allocation10 + $0x9c] sm:$0xff]
    %v914 = vld [vmem:[#allocation10 + $0xa4] sm:$0xf]
    %v915 = vld [vmem:[#allocation10 + $0xa8] sm:$0xff]
    %v916 = vld [vmem:[#allocation10 + $0xb0] sm:$0xf]
    %v917 = vld [vmem:[#allocation10 + $0xb4] sm:$0xff]
    %v918 = vld [vmem:[#allocation10 + $0xbc] sm:$0xf]
    %v951 = vunpack.c.l.b16 %v887
    %v952 = vunpack.c.h.b16 %v887
    %v953 = vunpack.c.l.b16 %v888
    %v954 = vunpack.c.l.b16 %v889
    %v955 = vunpack.c.h.b16 %v889
    %v956 = vunpack.c.l.b16 %v890
    %v957 = vunpack.c.l.b16 %v891
    %v958 = vunpack.c.h.b16 %v891
    %v959 = vunpack.c.l.b16 %v892
    %v960 = vunpack.c.l.b16 %v893
    %v961 = vunpack.c.h.b16 %v893
    %v962 = vunpack.c.l.b16 %v894
    %v963 = vunpack.c.l.b16 %v895
    %v964 = vunpack.c.h.b16 %v895
    %v965 = vunpack.c.l.b16 %v896
    %v966 = vunpack.c.l.b16 %v897
    %v967 = vunpack.c.h.b16 %v897
    %v968 = vunpack.c.l.b16 %v898
    %v969 = vunpack.c.l.b16 %v899
    %v970 = vunpack.c.h.b16 %v899
    %v971 = vunpack.c.l.b16 %v900
    %v972 = vunpack.c.l.b16 %v901
    %v973 = vunpack.c.h.b16 %v901
    %v974 = vunpack.c.l.b16 %v902
    %v975 = vunpack.c.l.b16 %v903
    %v976 = vunpack.c.h.b16 %v903
    %v977 = vunpack.c.l.b16 %v904
    %v978 = vunpack.c.l.b16 %v905
    %v979 = vunpack.c.h.b16 %v905
    %v980 = vunpack.c.l.b16 %v906
    %v981 = vunpack.c.l.b16 %v907
    %v982 = vunpack.c.h.b16 %v907
    %v983 = vunpack.c.l.b16 %v908
    %v984 = vunpack.c.l.b16 %v909
    %v985 = vunpack.c.h.b16 %v909
    %v986 = vunpack.c.l.b16 %v910
    %v987 = vunpack.c.l.b16 %v911
    %v988 = vunpack.c.h.b16 %v911
    %v989 = vunpack.c.l.b16 %v912
    %v990 = vunpack.c.l.b16 %v913
    %v991 = vunpack.c.h.b16 %v913
    %v992 = vunpack.c.l.b16 %v914
    %v993 = vunpack.c.l.b16 %v915
    %v994 = vunpack.c.h.b16 %v915
    %v995 = vunpack.c.l.b16 %v916
    %v996 = vunpack.c.l.b16 %v917
    %v997 = vunpack.c.h.b16 %v917
    %v998 = vunpack.c.l.b16 %v918
    %v999 = vpack.c.b16 %v954, %v951
    %v1000 = vpack.c.b16 %v955, %v952
    %v1001 = vpack.c.b16 %v956, %v953
    %v1002 = vpack.c.b16 %v960, %v957
    %v1003 = vpack.c.b16 %v961, %v958
    %v1004 = vpack.c.b16 %v962, %v959
    %v1005 = vpack.c.b16 %v966, %v963
    %v1006 = vpack.c.b16 %v967, %v964
    %v1007 = vpack.c.b16 %v968, %v965
    %v1008 = vpack.c.b16 %v972, %v969
    %v1009 = vpack.c.b16 %v973, %v970
    %v1010 = vpack.c.b16 %v974, %v971
    %v1011 = vpack.c.b16 %v978, %v975
    %v1012 = vpack.c.b16 %v979, %v976
    %v1013 = vpack.c.b16 %v980, %v977
    %v1014 = vpack.c.b16 %v984, %v981
    %v1015 = vpack.c.b16 %v985, %v982
    %v1016 = vpack.c.b16 %v986, %v983
    %v1017 = vpack.c.b16 %v990, %v987
    %v1018 = vpack.c.b16 %v991, %v988
    %v1019 = vpack.c.b16 %v992, %v989
    %v1020 = vpack.c.b16 %v996, %v993
    %v1021 = vpack.c.b16 %v997, %v994
    %v1022 = vpack.c.b16 %v998, %v995
    %1047 = vmatprep.subr.bf16.mxu0 %v1021
    %1048 = vmatpush1.bf16.msra.mxu0 %v1020
    %1049 = vmatprep.subr.bf16.mxu0 %v1018
    %1050 = vmatpush1.bf16.msra.mxu0 %v1017
    %1051 = vmatprep.subr.bf16.mxu0 %v1015
    %1052 = vmatpush1.bf16.msra.mxu0 %v1014
    %1053 = vmatprep.subr.bf16.mxu0 %v1012
    %1054 = vmatpush1.bf16.msra.mxu0 %v1011
    %1055 = vmatprep.subr.bf16.mxu0 %v1009
    %1056 = vmatpush1.bf16.msra.mxu0 %v1008
    %1057 = vmatprep.subr.bf16.mxu0 %v1006
    %1058 = vmatpush1.bf16.msra.mxu0 %v1005
    %1059 = vmatprep.subr.bf16.mxu0 %v1003
    %1060 = vmatpush1.bf16.msra.mxu0 %v1002
    %1061 = vmatprep.subr.bf16.mxu0 %v1000
    %1062 = vmatpush1.bf16.msra.mxu0 %v999
    %1063 = vmatprep.subr.bf16.mxu0 0
    %1064 = vmatpush2.bf16.msra.mxu0 0
    %1065 = vmatprep.subr.bf16.mxu0 0
    %1066 = vmatpush2.bf16.msra.mxu0 0
    %1067 = vmatprep.subr.bf16.mxu0 0
    %1068 = vmatpush2.bf16.msra.mxu0 0
    %1069 = vmatprep.subr.bf16.mxu0 0
    %1070 = vmatpush2.bf16.msra.mxu0 0
    %1071 = vmatprep.subr.bf16.mxu0 0
    %1072 = vmatpush2.bf16.msra.mxu0 0
    %1073 = vmatprep.subr.bf16.mxu0 0
    %1074 = vmatpush2.bf16.msra.mxu0 0
    %1075 = vmatprep.subr.bf16.mxu0 0
    %1076 = vmatpush2.bf16.msra.mxu0 0
    %1077 = vmatprep.subr.bf16.mxu0 0
    %1078 = vmatpush2.bf16.msra.mxu0 0
    %1079 = vmatprep.mubr.bf16.mxu0 0
    %1080 = vmatmul.mubr.bf16.gmra.mxu0 %v783
    %v1081 = vpop.f32.mrf.mxu0
    %v1082 = vadd.f32 %v490, %v1081
    %v1083 = vpop.f32.mrf.mxu0
    %v1084 = vadd.f32 %v494, %v1083
    %v1085 = vpop.f32.mrf.mxu0
    %v1086 = vpop.f32.mrf.mxu0
    %1087 = vdwg.mxu0
    %1088 = vmatprep.subr.bf16.mxu0 0
    %1089 = vmatpush1.bf16.msra.mxu0 %v1022
    %1090 = vmatprep.subr.bf16.mxu0 0
    %1091 = vmatpush1.bf16.msra.mxu0 %v1019
    %1092 = vmatprep.subr.bf16.mxu0 0
    %1093 = vmatpush1.bf16.msra.mxu0 %v1016
    %1094 = vmatprep.subr.bf16.mxu0 0
    %1095 = vmatpush1.bf16.msra.mxu0 %v1013
    %1096 = vmatprep.subr.bf16.mxu0 0
    %1097 = vmatpush1.bf16.msra.mxu0 %v1010
    %1098 = vmatprep.subr.bf16.mxu0 0
    %1099 = vmatpush1.bf16.msra.mxu0 %v1007
    %1100 = vmatprep.subr.bf16.mxu0 0
    %1101 = vmatpush1.bf16.msra.mxu0 %v1004
    %1102 = vmatprep.subr.bf16.mxu0 0
    %1103 = vmatpush1.bf16.msra.mxu0 %v1001
    %1104 = vmatprep.subr.bf16.mxu0 0
    %1105 = vmatpush2.bf16.msra.mxu0 0
    %1106 = vmatprep.subr.bf16.mxu0 0
    %1107 = vmatpush2.bf16.msra.mxu0 0
    %1108 = vmatprep.subr.bf16.mxu0 0
    %1109 = vmatpush2.bf16.msra.mxu0 0
    %1110 = vmatprep.subr.bf16.mxu0 0
    %1111 = vmatpush2.bf16.msra.mxu0 0
    %1112 = vmatprep.subr.bf16.mxu0 0
    %1113 = vmatpush2.bf16.msra.mxu0 0
    %1114 = vmatprep.subr.bf16.mxu0 0
    %1115 = vmatpush2.bf16.msra.mxu0 0
    %1116 = vmatprep.subr.bf16.mxu0 0
    %1117 = vmatpush2.bf16.msra.mxu0 0
    %1118 = vmatprep.subr.bf16.mxu0 0
    %1119 = vmatpush2.bf16.msra.mxu0 0
    %1120 = vmatprep.mubr.bf16.mxu0 0
    %1121 = vmatmul.mubr.bf16.gmra.mxu0 %v783
    %v1122 = vpop.f32.mrf.mxu0
    %v1123 = vadd.f32 %v498, %v1122
    %v1124 = vpop.f32.mrf.mxu0
    %v1125 = vpop.f32.mrf.mxu0
    %v1126 = vpop.f32.mrf.mxu0
    %1127 = vdwg.mxu0
    %v1128 = vpack.c.bf16 %v518, %v518
    %v1129 = vld [vmem:[#allocation11] sm:$0xff]
    %v1130 = vld [vmem:[#allocation11 + $0x8] sm:$0xf]
    %v1131 = vld [vmem:[#allocation11 + $0xc] sm:$0xff]
    %v1132 = vld [vmem:[#allocation11 + $0x14] sm:$0xf]
    %v1133 = vld [vmem:[#allocation11 + $0x18] sm:$0xff]
    %v1134 = vld [vmem:[#allocation11 + $0x20] sm:$0xf]
    %v1135 = vld [vmem:[#allocation11 + $0x24] sm:$0xff]
    %v1136 = vld [vmem:[#allocation11 + $0x2c] sm:$0xf]
    %v1137 = vld [vmem:[#allocation11 + $0x30] sm:$0xff]
    %v1138 = vld [vmem:[#allocation11 + $0x38] sm:$0xf]
    %v1139 = vld [vmem:[#allocation11 + $0x3c] sm:$0xff]
    %v1140 = vld [vmem:[#allocation11 + $0x44] sm:$0xf]
    %v1141 = vld [vmem:[#allocation11 + $0x48] sm:$0xff]
    %v1142 = vld [vmem:[#allocation11 + $0x50] sm:$0xf]
    %v1143 = vld [vmem:[#allocation11 + $0x54] sm:$0xff]
    %v1144 = vld [vmem:[#allocation11 + $0x5c] sm:$0xf]
    %v1145 = vld [vmem:[#allocation11 + $0x60] sm:$0xff]
    %v1146 = vld [vmem:[#allocation11 + $0x68] sm:$0xf]
    %v1147 = vld [vmem:[#allocation11 + $0x6c] sm:$0xff]
    %v1148 = vld [vmem:[#allocation11 + $0x74] sm:$0xf]
    %v1149 = vld [vmem:[#allocation11 + $0x78] sm:$0xff]
    %v1150 = vld [vmem:[#allocation11 + $0x80] sm:$0xf]
    %v1151 = vld [vmem:[#allocation11 + $0x84] sm:$0xff]
    %v1152 = vld [vmem:[#allocation11 + $0x8c] sm:$0xf]
    %v1153 = vld [vmem:[#allocation11 + $0x90] sm:$0xff]
    %v1154 = vld [vmem:[#allocation11 + $0x98] sm:$0xf]
    %v1155 = vld [vmem:[#allocation11 + $0x9c] sm:$0xff]
    %v1156 = vld [vmem:[#allocation11 + $0xa4] sm:$0xf]
    %v1157 = vld [vmem:[#allocation11 + $0xa8] sm:$0xff]
    %v1158 = vld [vmem:[#allocation11 + $0xb0] sm:$0xf]
    %v1159 = vld [vmem:[#allocation11 + $0xb4] sm:$0xff]
    %v1160 = vld [vmem:[#allocation11 + $0xbc] sm:$0xf]
    %v1193 = vunpack.c.l.b16 %v1129
    %v1194 = vunpack.c.h.b16 %v1129
    %v1195 = vunpack.c.l.b16 %v1130
    %v1196 = vunpack.c.l.b16 %v1131
    %v1197 = vunpack.c.h.b16 %v1131
    %v1198 = vunpack.c.l.b16 %v1132
    %v1199 = vunpack.c.l.b16 %v1133
    %v1200 = vunpack.c.h.b16 %v1133
    %v1201 = vunpack.c.l.b16 %v1134
    %v1202 = vunpack.c.l.b16 %v1135
    %v1203 = vunpack.c.h.b16 %v1135
    %v1204 = vunpack.c.l.b16 %v1136
    %v1205 = vunpack.c.l.b16 %v1137
    %v1206 = vunpack.c.h.b16 %v1137
    %v1207 = vunpack.c.l.b16 %v1138
    %v1208 = vunpack.c.l.b16 %v1139
    %v1209 = vunpack.c.h.b16 %v1139
    %v1210 = vunpack.c.l.b16 %v1140
    %v1211 = vunpack.c.l.b16 %v1141
    %v1212 = vunpack.c.h.b16 %v1141
    %v1213 = vunpack.c.l.b16 %v1142
    %v1214 = vunpack.c.l.b16 %v1143
    %v1215 = vunpack.c.h.b16 %v1143
    %v1216 = vunpack.c.l.b16 %v1144
    %v1217 = vunpack.c.l.b16 %v1145
    %v1218 = vunpack.c.h.b16 %v1145
    %v1219 = vunpack.c.l.b16 %v1146
    %v1220 = vunpack.c.l.b16 %v1147
    %v1221 = vunpack.c.h.b16 %v1147
    %v1222 = vunpack.c.l.b16 %v1148
    %v1223 = vunpack.c.l.b16 %v1149
    %v1224 = vunpack.c.h.b16 %v1149
    %v1225 = vunpack.c.l.b16 %v1150
    %v1226 = vunpack.c.l.b16 %v1151
    %v1227 = vunpack.c.h.b16 %v1151
    %v1228 = vunpack.c.l.b16 %v1152
    %v1229 = vunpack.c.l.b16 %v1153
    %v1230 = vunpack.c.h.b16 %v1153
    %v1231 = vunpack.c.l.b16 %v1154
    %v1232 = vunpack.c.l.b16 %v1155
    %v1233 = vunpack.c.h.b16 %v1155
    %v1234 = vunpack.c.l.b16 %v1156
    %v1235 = vunpack.c.l.b16 %v1157
    %v1236 = vunpack.c.h.b16 %v1157
    %v1237 = vunpack.c.l.b16 %v1158
    %v1238 = vunpack.c.l.b16 %v1159
    %v1239 = vunpack.c.h.b16 %v1159
    %v1240 = vunpack.c.l.b16 %v1160
    %v1241 = vpack.c.b16 %v1196, %v1193
    %v1242 = vpack.c.b16 %v1197, %v1194
    %v1243 = vpack.c.b16 %v1198, %v1195
    %v1244 = vpack.c.b16 %v1202, %v1199
    %v1245 = vpack.c.b16 %v1203, %v1200
    %v1246 = vpack.c.b16 %v1204, %v1201
    %v1247 = vpack.c.b16 %v1208, %v1205
    %v1248 = vpack.c.b16 %v1209, %v1206
    %v1249 = vpack.c.b16 %v1210, %v1207
    %v1250 = vpack.c.b16 %v1214, %v1211
    %v1251 = vpack.c.b16 %v1215, %v1212
    %v1252 = vpack.c.b16 %v1216, %v1213
    %v1253 = vpack.c.b16 %v1220, %v1217
    %v1254 = vpack.c.b16 %v1221, %v1218
    %v1255 = vpack.c.b16 %v1222, %v1219
    %v1256 = vpack.c.b16 %v1226, %v1223
    %v1257 = vpack.c.b16 %v1227, %v1224
    %v1258 = vpack.c.b16 %v1228, %v1225
    %v1259 = vpack.c.b16 %v1232, %v1229
    %v1260 = vpack.c.b16 %v1233, %v1230
    %v1261 = vpack.c.b16 %v1234, %v1231
    %v1262 = vpack.c.b16 %v1238, %v1235
    %v1263 = vpack.c.b16 %v1239, %v1236
    %v1264 = vpack.c.b16 %v1240, %v1237
    %1289 = vmatprep.subr.bf16.mxu0 %v1263
    %1290 = vmatpush1.bf16.msra.mxu0 %v1262
    %1291 = vmatprep.subr.bf16.mxu0 %v1260
    %1292 = vmatpush1.bf16.msra.mxu0 %v1259
    %1293 = vmatprep.subr.bf16.mxu0 %v1257
    %1294 = vmatpush1.bf16.msra.mxu0 %v1256
    %1295 = vmatprep.subr.bf16.mxu0 %v1254
    %1296 = vmatpush1.bf16.msra.mxu0 %v1253
    %1297 = vmatprep.subr.bf16.mxu0 %v1251
    %1298 = vmatpush1.bf16.msra.mxu0 %v1250
    %1299 = vmatprep.subr.bf16.mxu0 %v1248
    %1300 = vmatpush1.bf16.msra.mxu0 %v1247
    %1301 = vmatprep.subr.bf16.mxu0 %v1245
    %1302 = vmatpush1.bf16.msra.mxu0 %v1244
    %1303 = vmatprep.subr.bf16.mxu0 %v1242
    %1304 = vmatpush1.bf16.msra.mxu0 %v1241
    %1305 = vmatprep.subr.bf16.mxu0 0
    %1306 = vmatpush2.bf16.msra.mxu0 0
    %1307 = vmatprep.subr.bf16.mxu0 0
    %1308 = vmatpush2.bf16.msra.mxu0 0
    %1309 = vmatprep.subr.bf16.mxu0 0
    %1310 = vmatpush2.bf16.msra.mxu0 0
    %1311 = vmatprep.subr.bf16.mxu0 0
    %1312 = vmatpush2.bf16.msra.mxu0 0
    %1313 = vmatprep.subr.bf16.mxu0 0
    %1314 = vmatpush2.bf16.msra.mxu0 0
    %1315 = vmatprep.subr.bf16.mxu0 0
    %1316 = vmatpush2.bf16.msra.mxu0 0
    %1317 = vmatprep.subr.bf16.mxu0 0
    %1318 = vmatpush2.bf16.msra.mxu0 0
    %1319 = vmatprep.subr.bf16.mxu0 0
    %1320 = vmatpush2.bf16.msra.mxu0 0
    %1321 = vmatprep.mubr.bf16.mxu0 0
    %1322 = vmatmul.mubr.bf16.gmra.mxu0 %v1128
    %v1323 = vpop.f32.mrf.mxu0
    %v1324 = vadd.f32 0.0, %v1323
    %v1325 = vpop.f32.mrf.mxu0
    %v1326 = vadd.f32 0.0, %v1325
    %v1327 = vpop.f32.mrf.mxu0
    %v1328 = vpop.f32.mrf.mxu0
    %1329 = vdwg.mxu0
    %1330 = vmatprep.subr.bf16.mxu0 0
    %1331 = vmatpush1.bf16.msra.mxu0 %v1264
    %1332 = vmatprep.subr.bf16.mxu0 0
    %1333 = vmatpush1.bf16.msra.mxu0 %v1261
    %1334 = vmatprep.subr.bf16.mxu0 0
    %1335 = vmatpush1.bf16.msra.mxu0 %v1258
    %1336 = vmatprep.subr.bf16.mxu0 0
    %1337 = vmatpush1.bf16.msra.mxu0 %v1255
    %1338 = vmatprep.subr.bf16.mxu0 0
    %1339 = vmatpush1.bf16.msra.mxu0 %v1252
    %1340 = vmatprep.subr.bf16.mxu0 0
    %1341 = vmatpush1.bf16.msra.mxu0 %v1249
    %1342 = vmatprep.subr.bf16.mxu0 0
    %1343 = vmatpush1.bf16.msra.mxu0 %v1246
    %1344 = vmatprep.subr.bf16.mxu0 0
    %1345 = vmatpush1.bf16.msra.mxu0 %v1243
    %1346 = vmatprep.subr.bf16.mxu0 0
    %1347 = vmatpush2.bf16.msra.mxu0 0
    %1348 = vmatprep.subr.bf16.mxu0 0
    %1349 = vmatpush2.bf16.msra.mxu0 0
    %1350 = vmatprep.subr.bf16.mxu0 0
    %1351 = vmatpush2.bf16.msra.mxu0 0
    %1352 = vmatprep.subr.bf16.mxu0 0
    %1353 = vmatpush2.bf16.msra.mxu0 0
    %1354 = vmatprep.subr.bf16.mxu0 0
    %1355 = vmatpush2.bf16.msra.mxu0 0
    %1356 = vmatprep.subr.bf16.mxu0 0
    %1357 = vmatpush2.bf16.msra.mxu0 0
    %1358 = vmatprep.subr.bf16.mxu0 0
    %1359 = vmatpush2.bf16.msra.mxu0 0
    %1360 = vmatprep.subr.bf16.mxu0 0
    %1361 = vmatpush2.bf16.msra.mxu0 0
    %1362 = vmatprep.mubr.bf16.mxu0 0
    %1363 = vmatmul.mubr.bf16.gmra.mxu0 %v1128
    %v1364 = vpop.f32.mrf.mxu0
    %v1365 = vadd.f32 0.0, %v1364
    %v1366 = vpop.f32.mrf.mxu0
    %v1367 = vpop.f32.mrf.mxu0
    %v1368 = vpop.f32.mrf.mxu0
    %1369 = vdwg.mxu0
    %v1370 = vadd.f32 %v1082, %v1324
    %v1371 = vxor.u32 %v1370, 2147483648
    %v1372 = vmul.f32 %v1371, 1.442695
    %v1373 = vpow.pop %v1372
    %v1374 = vadd.f32 %v1373, 1.0
    %v1375 = vrcp.pop %v1374
    %v1376 = vmul.f32 1.0, %v1375
    %v1377 = vadd.f32 %v1084, %v1326
    %v1378 = vxor.u32 %v1377, 2147483648
    %v1379 = vmul.f32 %v1378, 1.442695
    %v1380 = vpow.pop %v1379
    %v1381 = vadd.f32 %v1380, 1.0
    %v1382 = vrcp.pop %v1381
    %v1383 = vmul.f32 1.0, %v1382
    %v1384 = vadd.f32 %v1365, %v514
    %v1385 = vmul.f32 %v1376, %v1384
    %v1386 = vadd.f32 %v1123, %v1385
    %v1387 = vtanh.pop %v1386
    %v1388 = vsub.f32 1.0, %v1383
    %v1389 = vmul.f32 %v1388, %v1387
    %v1390 = vmul.f32 %v1383, %v518
    %v1391 = vadd.f32 %v1389, %v1390
    %v1392 = vpack.c.bf16 %v886, %v886
    %1393 = vmatprep.subr.bf16.mxu0 %v654
    %1394 = vmatpush1.bf16.msra.mxu0 %v653
    %1395 = vmatprep.subr.bf16.mxu0 %v651
    %1396 = vmatpush1.bf16.msra.mxu0 %v650
    %1397 = vmatprep.subr.bf16.mxu0 %v648
    %1398 = vmatpush1.bf16.msra.mxu0 %v647
    %1399 = vmatprep.subr.bf16.mxu0 %v645
    %1400 = vmatpush1.bf16.msra.mxu0 %v644
    %1401 = vmatprep.subr.bf16.mxu0 %v642
    %1402 = vmatpush1.bf16.msra.mxu0 %v641
    %1403 = vmatprep.subr.bf16.mxu0 %v639
    %1404 = vmatpush1.bf16.msra.mxu0 %v638
    %1405 = vmatprep.subr.bf16.mxu0 %v636
    %1406 = vmatpush1.bf16.msra.mxu0 %v635
    %1407 = vmatprep.subr.bf16.mxu0 %v633
    %1408 = vmatpush1.bf16.msra.mxu0 %v632
    %1409 = vmatprep.subr.bf16.mxu0 0
    %1410 = vmatpush2.bf16.msra.mxu0 0
    %1411 = vmatprep.subr.bf16.mxu0 0
    %1412 = vmatpush2.bf16.msra.mxu0 0
    %1413 = vmatprep.subr.bf16.mxu0 0
    %1414 = vmatpush2.bf16.msra.mxu0 0
    %1415 = vmatprep.subr.bf16.mxu0 0
    %1416 = vmatpush2.bf16.msra.mxu0 0
    %1417 = vmatprep.subr.bf16.mxu0 0
    %1418 = vmatpush2.bf16.msra.mxu0 0
    %1419 = vmatprep.subr.bf16.mxu0 0
    %1420 = vmatpush2.bf16.msra.mxu0 0
    %1421 = vmatprep.subr.bf16.mxu0 0
    %1422 = vmatpush2.bf16.msra.mxu0 0
    %1423 = vmatprep.subr.bf16.mxu0 0
    %1424 = vmatpush2.bf16.msra.mxu0 0
    %1425 = vmatprep.mubr.bf16.mxu0 0
    %1426 = vmatmul.mubr.bf16.gmra.mxu0 %v1392
    %v1427 = vpop.f32.mrf.mxu0
    %v1428 = vadd.f32 0.0, %v1427
    %v1429 = vpop.f32.mrf.mxu0
    %v1430 = vadd.f32 0.0, %v1429
    %v1431 = vpop.f32.mrf.mxu0
    %v1432 = vpop.f32.mrf.mxu0
    %1433 = vdwg.mxu0
    %1434 = vmatprep.subr.bf16.mxu0 0
    %1435 = vmatpush1.bf16.msra.mxu0 %v655
    %1436 = vmatprep.subr.bf16.mxu0 0
    %1437 = vmatpush1.bf16.msra.mxu0 %v652
    %1438 = vmatprep.subr.bf16.mxu0 0
    %1439 = vmatpush1.bf16.msra.mxu0 %v649
    %1440 = vmatprep.subr.bf16.mxu0 0
    %1441 = vmatpush1.bf16.msra.mxu0 %v646
    %1442 = vmatprep.subr.bf16.mxu0 0
    %1443 = vmatpush1.bf16.msra.mxu0 %v643
    %1444 = vmatprep.subr.bf16.mxu0 0
    %1445 = vmatpush1.bf16.msra.mxu0 %v640
    %1446 = vmatprep.subr.bf16.mxu0 0
    %1447 = vmatpush1.bf16.msra.mxu0 %v637
    %1448 = vmatprep.subr.bf16.mxu0 0
    %1449 = vmatpush1.bf16.msra.mxu0 %v634
    %1450 = vmatprep.subr.bf16.mxu0 0
    %1451 = vmatpush2.bf16.msra.mxu0 0
    %1452 = vmatprep.subr.bf16.mxu0 0
    %1453 = vmatpush2.bf16.msra.mxu0 0
    %1454 = vmatprep.subr.bf16.mxu0 0
    %1455 = vmatpush2.bf16.msra.mxu0 0
    %1456 = vmatprep.subr.bf16.mxu0 0
    %1457 = vmatpush2.bf16.msra.mxu0 0
    %1458 = vmatprep.subr.bf16.mxu0 0
    %1459 = vmatpush2.bf16.msra.mxu0 0
    %1460 = vmatprep.subr.bf16.mxu0 0
    %1461 = vmatpush2.bf16.msra.mxu0 0
    %1462 = vmatprep.subr.bf16.mxu0 0
    %1463 = vmatpush2.bf16.msra.mxu0 0
    %1464 = vmatprep.subr.bf16.mxu0 0
    %1465 = vmatpush2.bf16.msra.mxu0 0
    %1466 = vmatprep.mubr.bf16.mxu0 0
    %1467 = vmatmul.mubr.bf16.gmra.mxu0 %v1392
    %v1468 = vpop.f32.mrf.mxu0
    %v1469 = vadd.f32 0.0, %v1468
    %v1470 = vpop.f32.mrf.mxu0
    %v1471 = vpop.f32.mrf.mxu0
    %v1472 = vpop.f32.mrf.mxu0
    %1473 = vdwg.mxu0
    %v1474 = vadd.f32 %v392, %v1428
    %v1475 = vxor.u32 %v1474, 2147483648
    %v1476 = vmul.f32 %v1475, 1.442695
    %v1477 = vpow.pop %v1476
    %v1478 = vadd.f32 %v1477, 1.0
    %v1479 = vrcp.pop %v1478
    %v1480 = vmul.f32 1.0, %v1479
    %v1481 = vadd.f32 %v394, %v1430
    %v1482 = vxor.u32 %v1481, 2147483648
    %v1483 = vmul.f32 %v1482, 1.442695
    %v1484 = vpow.pop %v1483
    %v1485 = vadd.f32 %v1484, 1.0
    %v1486 = vrcp.pop %v1485
    %v1487 = vmul.f32 1.0, %v1486
    %v1488 = vadd.f32 %v1469, %v507
    %v1489 = vmul.f32 %v1480, %v1488
    %v1490 = vadd.f32 %v463, %v1489
    %v1491 = vtanh.pop %v1490
    %v1492 = vsub.f32 1.0, %v1487
    %v1493 = vmul.f32 %v1492, %v1491
    %v1494 = vmul.f32 %v1487, %v886
    %v1495 = vadd.f32 %v1493, %v1494
    %1496 = vmatprep.subr.bf16.mxu0 %v1021
    %1497 = vmatpush1.bf16.msra.mxu0 %v1020
    %1498 = vmatprep.subr.bf16.mxu0 %v1018
    %1499 = vmatpush1.bf16.msra.mxu0 %v1017
    %1500 = vmatprep.subr.bf16.mxu0 %v1015
    %1501 = vmatpush1.bf16.msra.mxu0 %v1014
    %1502 = vmatprep.subr.bf16.mxu0 %v1012
    %1503 = vmatpush1.bf16.msra.mxu0 %v1011
    %1504 = vmatprep.subr.bf16.mxu0 %v1009
    %1505 = vmatpush1.bf16.msra.mxu0 %v1008
    %1506 = vmatprep.subr.bf16.mxu0 %v1006
    %1507 = vmatpush1.bf16.msra.mxu0 %v1005
    %1508 = vmatprep.subr.bf16.mxu0 %v1003
    %1509 = vmatpush1.bf16.msra.mxu0 %v1002
    %1510 = vmatprep.subr.bf16.mxu0 %v1000
    %1511 = vmatpush1.bf16.msra.mxu0 %v999
    %1512 = vmatprep.subr.bf16.mxu0 0
    %1513 = vmatpush2.bf16.msra.mxu0 0
    %1514 = vmatprep.subr.bf16.mxu0 0
    %1515 = vmatpush2.bf16.msra.mxu0 0
    %1516 = vmatprep.subr.bf16.mxu0 0
    %1517 = vmatpush2.bf16.msra.mxu0 0
    %1518 = vmatprep.subr.bf16.mxu0 0
    %1519 = vmatpush2.bf16.msra.mxu0 0
    %1520 = vmatprep.subr.bf16.mxu0 0
    %1521 = vmatpush2.bf16.msra.mxu0 0
    %1522 = vmatprep.subr.bf16.mxu0 0
    %1523 = vmatpush2.bf16.msra.mxu0 0
    %1524 = vmatprep.subr.bf16.mxu0 0
    %1525 = vmatpush2.bf16.msra.mxu0 0
    %1526 = vmatprep.subr.bf16.mxu0 0
    %1527 = vmatpush2.bf16.msra.mxu0 0
    %1528 = vmatprep.mubr.bf16.mxu0 0
    %1529 = vmatmul.mubr.bf16.gmra.mxu0 %v1392
    %v1530 = vpop.f32.mrf.mxu0
    %v1531 = vadd.f32 %v490, %v1530
    %v1532 = vpop.f32.mrf.mxu0
    %v1533 = vadd.f32 %v494, %v1532
    %v1534 = vpop.f32.mrf.mxu0
    %v1535 = vpop.f32.mrf.mxu0
    %1536 = vdwg.mxu0
    %1537 = vmatprep.subr.bf16.mxu0 0
    %1538 = vmatpush1.bf16.msra.mxu0 %v1022
    %1539 = vmatprep.subr.bf16.mxu0 0
    %1540 = vmatpush1.bf16.msra.mxu0 %v1019
    %1541 = vmatprep.subr.bf16.mxu0 0
    %1542 = vmatpush1.bf16.msra.mxu0 %v1016
    %1543 = vmatprep.subr.bf16.mxu0 0
    %1544 = vmatpush1.bf16.msra.mxu0 %v1013
    %1545 = vmatprep.subr.bf16.mxu0 0
    %1546 = vmatpush1.bf16.msra.mxu0 %v1010
    %1547 = vmatprep.subr.bf16.mxu0 0
    %1548 = vmatpush1.bf16.msra.mxu0 %v1007
    %1549 = vmatprep.subr.bf16.mxu0 0
    %1550 = vmatpush1.bf16.msra.mxu0 %v1004
    %1551 = vmatprep.subr.bf16.mxu0 0
    %1552 = vmatpush1.bf16.msra.mxu0 %v1001
    %1553 = vmatprep.subr.bf16.mxu0 0
    %1554 = vmatpush2.bf16.msra.mxu0 0
    %1555 = vmatprep.subr.bf16.mxu0 0
    %1556 = vmatpush2.bf16.msra.mxu0 0
    %1557 = vmatprep.subr.bf16.mxu0 0
    %1558 = vmatpush2.bf16.msra.mxu0 0
    %1559 = vmatprep.subr.bf16.mxu0 0
    %1560 = vmatpush2.bf16.msra.mxu0 0
    %1561 = vmatprep.subr.bf16.mxu0 0
    %1562 = vmatpush2.bf16.msra.mxu0 0
    %1563 = vmatprep.subr.bf16.mxu0 0
    %1564 = vmatpush2.bf16.msra.mxu0 0
    %1565 = vmatprep.subr.bf16.mxu0 0
    %1566 = vmatpush2.bf16.msra.mxu0 0
    %1567 = vmatprep.subr.bf16.mxu0 0
    %1568 = vmatpush2.bf16.msra.mxu0 0
    %1569 = vmatprep.mubr.bf16.mxu0 0
    %1570 = vmatmul.mubr.bf16.gmra.mxu0 %v1392
    %v1571 = vpop.f32.mrf.mxu0
    %v1572 = vadd.f32 %v498, %v1571
    %v1573 = vpop.f32.mrf.mxu0
    %v1574 = vpop.f32.mrf.mxu0
    %v1575 = vpop.f32.mrf.mxu0
    %1576 = vdwg.mxu0
    %v1577 = vpack.c.bf16 %v1391, %v1391
    %1578 = vmatprep.subr.bf16.mxu0 %v1263
    %1579 = vmatpush1.bf16.msra.mxu0 %v1262
    %1580 = vmatprep.subr.bf16.mxu0 %v1260
    %1581 = vmatpush1.bf16.msra.mxu0 %v1259
    %1582 = vmatprep.subr.bf16.mxu0 %v1257
    %1583 = vmatpush1.bf16.msra.mxu0 %v1256
    %1584 = vmatprep.subr.bf16.mxu0 %v1254
    %1585 = vmatpush1.bf16.msra.mxu0 %v1253
    %1586 = vmatprep.subr.bf16.mxu0 %v1251
    %1587 = vmatpush1.bf16.msra.mxu0 %v1250
    %1588 = vmatprep.subr.bf16.mxu0 %v1248
    %1589 = vmatpush1.bf16.msra.mxu0 %v1247
    %1590 = vmatprep.subr.bf16.mxu0 %v1245
    %1591 = vmatpush1.bf16.msra.mxu0 %v1244
    %1592 = vmatprep.subr.bf16.mxu0 %v1242
    %1593 = vmatpush1.bf16.msra.mxu0 %v1241
    %1594 = vmatprep.subr.bf16.mxu0 0
    %1595 = vmatpush2.bf16.msra.mxu0 0
    %1596 = vmatprep.subr.bf16.mxu0 0
    %1597 = vmatpush2.bf16.msra.mxu0 0
    %1598 = vmatprep.subr.bf16.mxu0 0
    %1599 = vmatpush2.bf16.msra.mxu0 0
    %1600 = vmatprep.subr.bf16.mxu0 0
    %1601 = vmatpush2.bf16.msra.mxu0 0
    %1602 = vmatprep.subr.bf16.mxu0 0
    %1603 = vmatpush2.bf16.msra.mxu0 0
    %1604 = vmatprep.subr.bf16.mxu0 0
    %1605 = vmatpush2.bf16.msra.mxu0 0
    %1606 = vmatprep.subr.bf16.mxu0 0
    %1607 = vmatpush2.bf16.msra.mxu0 0
    %1608 = vmatprep.subr.bf16.mxu0 0
    %1609 = vmatpush2.bf16.msra.mxu0 0
    %1610 = vmatprep.mubr.bf16.mxu0 0
    %1611 = vmatmul.mubr.bf16.gmra.mxu0 %v1577
    %v1612 = vpop.f32.mrf.mxu0
    %v1613 = vadd.f32 0.0, %v1612
    %v1614 = vpop.f32.mrf.mxu0
    %v1615 = vadd.f32 0.0, %v1614
    %v1616 = vpop.f32.mrf.mxu0
    %v1617 = vpop.f32.mrf.mxu0
    %1618 = vdwg.mxu0
    %1619 = vmatprep.subr.bf16.mxu0 0
    %1620 = vmatpush1.bf16.msra.mxu0 %v1264
    %1621 = vmatprep.subr.bf16.mxu0 0
    %1622 = vmatpush1.bf16.msra.mxu0 %v1261
    %1623 = vmatprep.subr.bf16.mxu0 0
    %1624 = vmatpush1.bf16.msra.mxu0 %v1258
    %1625 = vmatprep.subr.bf16.mxu0 0
    %1626 = vmatpush1.bf16.msra.mxu0 %v1255
    %1627 = vmatprep.subr.bf16.mxu0 0
    %1628 = vmatpush1.bf16.msra.mxu0 %v1252
    %1629 = vmatprep.subr.bf16.mxu0 0
    %1630 = vmatpush1.bf16.msra.mxu0 %v1249
    %1631 = vmatprep.subr.bf16.mxu0 0
    %1632 = vmatpush1.bf16.msra.mxu0 %v1246
    %1633 = vmatprep.subr.bf16.mxu0 0
    %1634 = vmatpush1.bf16.msra.mxu0 %v1243
    %1635 = vmatprep.subr.bf16.mxu0 0
    %1636 = vmatpush2.bf16.msra.mxu0 0
    %1637 = vmatprep.subr.bf16.mxu0 0
    %1638 = vmatpush2.bf16.msra.mxu0 0
    %1639 = vmatprep.subr.bf16.mxu0 0
    %1640 = vmatpush2.bf16.msra.mxu0 0
    %1641 = vmatprep.subr.bf16.mxu0 0
    %1642 = vmatpush2.bf16.msra.mxu0 0
    %1643 = vmatprep.subr.bf16.mxu0 0
    %1644 = vmatpush2.bf16.msra.mxu0 0
    %1645 = vmatprep.subr.bf16.mxu0 0
    %1646 = vmatpush2.bf16.msra.mxu0 0
    %1647 = vmatprep.subr.bf16.mxu0 0
    %1648 = vmatpush2.bf16.msra.mxu0 0
    %1649 = vmatprep.subr.bf16.mxu0 0
    %1650 = vmatpush2.bf16.msra.mxu0 0
    %1651 = vmatprep.mubr.bf16.mxu0 0
    %1652 = vmatmul.mubr.bf16.gmra.mxu0 %v1577
    %v1653 = vpop.f32.mrf.mxu0
    %v1654 = vadd.f32 0.0, %v1653
    %v1655 = vpop.f32.mrf.mxu0
    %v1656 = vpop.f32.mrf.mxu0
    %v1657 = vpop.f32.mrf.mxu0
    %1658 = vdwg.mxu0
    %v1659 = vadd.f32 %v1531, %v1613
    %v1660 = vxor.u32 %v1659, 2147483648
    %v1661 = vmul.f32 %v1660, 1.442695
    %v1662 = vpow.pop %v1661
    %v1663 = vadd.f32 %v1662, 1.0
    %v1664 = vrcp.pop %v1663
    %v1665 = vmul.f32 1.0, %v1664
    %v1666 = vadd.f32 %v1533, %v1615
    %v1667 = vxor.u32 %v1666, 2147483648
    %v1668 = vmul.f32 %v1667, 1.442695
    %v1669 = vpow.pop %v1668
    %v1670 = vadd.f32 %v1669, 1.0
    %v1671 = vrcp.pop %v1670
    %v1672 = vmul.f32 1.0, %v1671
    %v1673 = vadd.f32 %v1654, %v514
    %v1674 = vmul.f32 %v1665, %v1673
    %v1675 = vadd.f32 %v1572, %v1674
    %v1676 = vtanh.pop %v1675
    %v1677 = vsub.f32 1.0, %v1672
    %v1678 = vmul.f32 %v1677, %v1676
    %v1679 = vmul.f32 %v1672, %v1391
    %v1680 = vadd.f32 %v1678, %v1679
    %v1681 = vpack.c.bf16 %v1495, %v1495
    %1682 = vmatprep.subr.bf16.mxu0 %v654
    %1683 = vmatpush1.bf16.msra.mxu0 %v653
    %1684 = vmatprep.subr.bf16.mxu0 %v651
    %1685 = vmatpush1.bf16.msra.mxu0 %v650
    %1686 = vmatprep.subr.bf16.mxu0 %v648
    %1687 = vmatpush1.bf16.msra.mxu0 %v647
    %1688 = vmatprep.subr.bf16.mxu0 %v645
    %1689 = vmatpush1.bf16.msra.mxu0 %v644
    %1690 = vmatprep.subr.bf16.mxu0 %v642
    %1691 = vmatpush1.bf16.msra.mxu0 %v641
    %1692 = vmatprep.subr.bf16.mxu0 %v639
    %1693 = vmatpush1.bf16.msra.mxu0 %v638
    %1694 = vmatprep.subr.bf16.mxu0 %v636
    %1695 = vmatpush1.bf16.msra.mxu0 %v635
    %1696 = vmatprep.subr.bf16.mxu0 %v633
    %1697 = vmatpush1.bf16.msra.mxu0 %v632
    %1698 = vmatprep.subr.bf16.mxu0 0
    %1699 = vmatpush2.bf16.msra.mxu0 0
    %1700 = vmatprep.subr.bf16.mxu0 0
    %1701 = vmatpush2.bf16.msra.mxu0 0
    %1702 = vmatprep.subr.bf16.mxu0 0
    %1703 = vmatpush2.bf16.msra.mxu0 0
    %1704 = vmatprep.subr.bf16.mxu0 0
    %1705 = vmatpush2.bf16.msra.mxu0 0
    %1706 = vmatprep.subr.bf16.mxu0 0
    %1707 = vmatpush2.bf16.msra.mxu0 0
    %1708 = vmatprep.subr.bf16.mxu0 0
    %1709 = vmatpush2.bf16.msra.mxu0 0
    %1710 = vmatprep.subr.bf16.mxu0 0
    %1711 = vmatpush2.bf16.msra.mxu0 0
    %1712 = vmatprep.subr.bf16.mxu0 0
    %1713 = vmatpush2.bf16.msra.mxu0 0
    %1714 = vmatprep.mubr.bf16.mxu0 0
    %1715 = vmatmul.mubr.bf16.gmra.mxu0 %v1681
    %v1716 = vpop.f32.mrf.mxu0
    %v1717 = vadd.f32 0.0, %v1716
    %v1718 = vpop.f32.mrf.mxu0
    %v1719 = vadd.f32 0.0, %v1718
    %v1720 = vpop.f32.mrf.mxu0
    %v1721 = vpop.f32.mrf.mxu0
    %1722 = vdwg.mxu0
    %1723 = vmatprep.subr.bf16.mxu0 0
    %1724 = vmatpush1.bf16.msra.mxu0 %v655
    %1725 = vmatprep.subr.bf16.mxu0 0
    %1726 = vmatpush1.bf16.msra.mxu0 %v652
    %1727 = vmatprep.subr.bf16.mxu0 0
    %1728 = vmatpush1.bf16.msra.mxu0 %v649
    %1729 = vmatprep.subr.bf16.mxu0 0
    %1730 = vmatpush1.bf16.msra.mxu0 %v646
    %1731 = vmatprep.subr.bf16.mxu0 0
    %1732 = vmatpush1.bf16.msra.mxu0 %v643
    %1733 = vmatprep.subr.bf16.mxu0 0
    %1734 = vmatpush1.bf16.msra.mxu0 %v640
    %1735 = vmatprep.subr.bf16.mxu0 0
    %1736 = vmatpush1.bf16.msra.mxu0 %v637
    %1737 = vmatprep.subr.bf16.mxu0 0
    %1738 = vmatpush1.bf16.msra.mxu0 %v634
    %1739 = vmatprep.subr.bf16.mxu0 0
    %1740 = vmatpush2.bf16.msra.mxu0 0
    %1741 = vmatprep.subr.bf16.mxu0 0
    %1742 = vmatpush2.bf16.msra.mxu0 0
    %1743 = vmatprep.subr.bf16.mxu0 0
    %1744 = vmatpush2.bf16.msra.mxu0 0
    %1745 = vmatprep.subr.bf16.mxu0 0
    %1746 = vmatpush2.bf16.msra.mxu0 0
    %1747 = vmatprep.subr.bf16.mxu0 0
    %1748 = vmatpush2.bf16.msra.mxu0 0
    %1749 = vmatprep.subr.bf16.mxu0 0
    %1750 = vmatpush2.bf16.msra.mxu0 0
    %1751 = vmatprep.subr.bf16.mxu0 0
    %1752 = vmatpush2.bf16.msra.mxu0 0
    %1753 = vmatprep.subr.bf16.mxu0 0
    %1754 = vmatpush2.bf16.msra.mxu0 0
    %1755 = vmatprep.mubr.bf16.mxu0 0
    %1756 = vmatmul.mubr.bf16.gmra.mxu0 %v1681
    %v1757 = vpop.f32.mrf.mxu0
    %v1758 = vadd.f32 0.0, %v1757
    %v1759 = vpop.f32.mrf.mxu0
    %v1760 = vpop.f32.mrf.mxu0
    %v1761 = vpop.f32.mrf.mxu0
    %1762 = vdwg.mxu0
    %v1763 = vadd.f32 %v396, %v1717
    %v1764 = vxor.u32 %v1763, 2147483648
    %v1765 = vmul.f32 %v1764, 1.442695
    %v1766 = vpow.pop %v1765
    %v1767 = vadd.f32 %v1766, 1.0
    %v1768 = vrcp.pop %v1767
    %v1769 = vmul.f32 1.0, %v1768
    %v1770 = vadd.f32 %v398, %v1719
    %v1771 = vxor.u32 %v1770, 2147483648
    %v1772 = vmul.f32 %v1771, 1.442695
    %v1773 = vpow.pop %v1772
    %v1774 = vadd.f32 %v1773, 1.0
    %v1775 = vrcp.pop %v1774
    %v1776 = vmul.f32 1.0, %v1775
    %v1777 = vadd.f32 %v1758, %v507
    %v1778 = vmul.f32 %v1769, %v1777
    %v1779 = vadd.f32 %v466, %v1778
    %v1780 = vtanh.pop %v1779
    %v1781 = vsub.f32 1.0, %v1776
    %v1782 = vmul.f32 %v1781, %v1780
    %v1783 = vmul.f32 %v1776, %v1495
    %v1784 = vadd.f32 %v1782, %v1783
    %1785 = vmatprep.subr.bf16.mxu0 %v1021
    %1786 = vmatpush1.bf16.msra.mxu0 %v1020
    %1787 = vmatprep.subr.bf16.mxu0 %v1018
    %1788 = vmatpush1.bf16.msra.mxu0 %v1017
    %1789 = vmatprep.subr.bf16.mxu0 %v1015
    %1790 = vmatpush1.bf16.msra.mxu0 %v1014
    %1791 = vmatprep.subr.bf16.mxu0 %v1012
    %1792 = vmatpush1.bf16.msra.mxu0 %v1011
    %1793 = vmatprep.subr.bf16.mxu0 %v1009
    %1794 = vmatpush1.bf16.msra.mxu0 %v1008
    %1795 = vmatprep.subr.bf16.mxu0 %v1006
    %1796 = vmatpush1.bf16.msra.mxu0 %v1005
    %1797 = vmatprep.subr.bf16.mxu0 %v1003
    %1798 = vmatpush1.bf16.msra.mxu0 %v1002
    %1799 = vmatprep.subr.bf16.mxu0 %v1000
    %1800 = vmatpush1.bf16.msra.mxu0 %v999
    %1801 = vmatprep.subr.bf16.mxu0 0
    %1802 = vmatpush2.bf16.msra.mxu0 0
    %1803 = vmatprep.subr.bf16.mxu0 0
    %1804 = vmatpush2.bf16.msra.mxu0 0
    %1805 = vmatprep.subr.bf16.mxu0 0
    %1806 = vmatpush2.bf16.msra.mxu0 0
    %1807 = vmatprep.subr.bf16.mxu0 0
    %1808 = vmatpush2.bf16.msra.mxu0 0
    %1809 = vmatprep.subr.bf16.mxu0 0
    %1810 = vmatpush2.bf16.msra.mxu0 0
    %1811 = vmatprep.subr.bf16.mxu0 0
    %1812 = vmatpush2.bf16.msra.mxu0 0
    %1813 = vmatprep.subr.bf16.mxu0 0
    %1814 = vmatpush2.bf16.msra.mxu0 0
    %1815 = vmatprep.subr.bf16.mxu0 0
    %1816 = vmatpush2.bf16.msra.mxu0 0
    %1817 = vmatprep.mubr.bf16.mxu0 0
    %1818 = vmatmul.mubr.bf16.gmra.mxu0 %v1681
    %v1819 = vpop.f32.mrf.mxu0
    %v1820 = vadd.f32 %v490, %v1819
    %v1821 = vpop.f32.mrf.mxu0
    %v1822 = vadd.f32 %v494, %v1821
    %v1823 = vpop.f32.mrf.mxu0
    %v1824 = vpop.f32.mrf.mxu0
    %1825 = vdwg.mxu0
    %1826 = vmatprep.subr.bf16.mxu0 0
    %1827 = vmatpush1.bf16.msra.mxu0 %v1022
    %1828 = vmatprep.subr.bf16.mxu0 0
    %1829 = vmatpush1.bf16.msra.mxu0 %v1019
    %1830 = vmatprep.subr.bf16.mxu0 0
    %1831 = vmatpush1.bf16.msra.mxu0 %v1016
    %1832 = vmatprep.subr.bf16.mxu0 0
    %1833 = vmatpush1.bf16.msra.mxu0 %v1013
    %1834 = vmatprep.subr.bf16.mxu0 0
    %1835 = vmatpush1.bf16.msra.mxu0 %v1010
    %1836 = vmatprep.subr.bf16.mxu0 0
    %1837 = vmatpush1.bf16.msra.mxu0 %v1007
    %1838 = vmatprep.subr.bf16.mxu0 0
    %1839 = vmatpush1.bf16.msra.mxu0 %v1004
    %1840 = vmatprep.subr.bf16.mxu0 0
    %1841 = vmatpush1.bf16.msra.mxu0 %v1001
    %1842 = vmatprep.subr.bf16.mxu0 0
    %1843 = vmatpush2.bf16.msra.mxu0 0
    %1844 = vmatprep.subr.bf16.mxu0 0
    %1845 = vmatpush2.bf16.msra.mxu0 0
    %1846 = vmatprep.subr.bf16.mxu0 0
    %1847 = vmatpush2.bf16.msra.mxu0 0
    %1848 = vmatprep.subr.bf16.mxu0 0
    %1849 = vmatpush2.bf16.msra.mxu0 0
    %1850 = vmatprep.subr.bf16.mxu0 0
    %1851 = vmatpush2.bf16.msra.mxu0 0
    %1852 = vmatprep.subr.bf16.mxu0 0
    %1853 = vmatpush2.bf16.msra.mxu0 0
    %1854 = vmatprep.subr.bf16.mxu0 0
    %1855 = vmatpush2.bf16.msra.mxu0 0
    %1856 = vmatprep.subr.bf16.mxu0 0
    %1857 = vmatpush2.bf16.msra.mxu0 0
    %1858 = vmatprep.mubr.bf16.mxu0 0
    %1859 = vmatmul.mubr.bf16.gmra.mxu0 %v1681
    %v1860 = vpop.f32.mrf.mxu0
    %v1861 = vadd.f32 %v498, %v1860
    %v1862 = vpop.f32.mrf.mxu0
    %v1863 = vpop.f32.mrf.mxu0
    %v1864 = vpop.f32.mrf.mxu0
    %1865 = vdwg.mxu0
    %v1866 = vpack.c.bf16 %v1680, %v1680
    %1867 = vmatprep.subr.bf16.mxu0 %v1263
    %1868 = vmatpush1.bf16.msra.mxu0 %v1262
    %1869 = vmatprep.subr.bf16.mxu0 %v1260
    %1870 = vmatpush1.bf16.msra.mxu0 %v1259
    %1871 = vmatprep.subr.bf16.mxu0 %v1257
    %1872 = vmatpush1.bf16.msra.mxu0 %v1256
    %1873 = vmatprep.subr.bf16.mxu0 %v1254
    %1874 = vmatpush1.bf16.msra.mxu0 %v1253
    %1875 = vmatprep.subr.bf16.mxu0 %v1251
    %1876 = vmatpush1.bf16.msra.mxu0 %v1250
    %1877 = vmatprep.subr.bf16.mxu0 %v1248
    %1878 = vmatpush1.bf16.msra.mxu0 %v1247
    %1879 = vmatprep.subr.bf16.mxu0 %v1245
    %1880 = vmatpush1.bf16.msra.mxu0 %v1244
    %1881 = vmatprep.subr.bf16.mxu0 %v1242
    %1882 = vmatpush1.bf16.msra.mxu0 %v1241
    %1883 = vmatprep.subr.bf16.mxu0 0
    %1884 = vmatpush2.bf16.msra.mxu0 0
    %1885 = vmatprep.subr.bf16.mxu0 0
    %1886 = vmatpush2.bf16.msra.mxu0 0
    %1887 = vmatprep.subr.bf16.mxu0 0
    %1888 = vmatpush2.bf16.msra.mxu0 0
    %1889 = vmatprep.subr.bf16.mxu0 0
    %1890 = vmatpush2.bf16.msra.mxu0 0
    %1891 = vmatprep.subr.bf16.mxu0 0
    %1892 = vmatpush2.bf16.msra.mxu0 0
    %1893 = vmatprep.subr.bf16.mxu0 0
    %1894 = vmatpush2.bf16.msra.mxu0 0
    %1895 = vmatprep.subr.bf16.mxu0 0
    %1896 = vmatpush2.bf16.msra.mxu0 0
    %1897 = vmatprep.subr.bf16.mxu0 0
    %1898 = vmatpush2.bf16.msra.mxu0 0
    %1899 = vmatprep.mubr.bf16.mxu0 0
    %1900 = vmatmul.mubr.bf16.gmra.mxu0 %v1866
    %v1901 = vpop.f32.mrf.mxu0
    %v1902 = vadd.f32 0.0, %v1901
    %v1903 = vpop.f32.mrf.mxu0
    %v1904 = vadd.f32 0.0, %v1903
    %v1905 = vpop.f32.mrf.mxu0
    %v1906 = vpop.f32.mrf.mxu0
    %1907 = vdwg.mxu0
    %1908 = vmatprep.subr.bf16.mxu0 0
    %1909 = vmatpush1.bf16.msra.mxu0 %v1264
    %1910 = vmatprep.subr.bf16.mxu0 0
    %1911 = vmatpush1.bf16.msra.mxu0 %v1261
    %1912 = vmatprep.subr.bf16.mxu0 0
    %1913 = vmatpush1.bf16.msra.mxu0 %v1258
    %1914 = vmatprep.subr.bf16.mxu0 0
    %1915 = vmatpush1.bf16.msra.mxu0 %v1255
    %1916 = vmatprep.subr.bf16.mxu0 0
    %1917 = vmatpush1.bf16.msra.mxu0 %v1252
    %1918 = vmatprep.subr.bf16.mxu0 0
    %1919 = vmatpush1.bf16.msra.mxu0 %v1249
    %1920 = vmatprep.subr.bf16.mxu0 0
    %1921 = vmatpush1.bf16.msra.mxu0 %v1246
    %1922 = vmatprep.subr.bf16.mxu0 0
    %1923 = vmatpush1.bf16.msra.mxu0 %v1243
    %1924 = vmatprep.subr.bf16.mxu0 0
    %1925 = vmatpush2.bf16.msra.mxu0 0
    %1926 = vmatprep.subr.bf16.mxu0 0
    %1927 = vmatpush2.bf16.msra.mxu0 0
    %1928 = vmatprep.subr.bf16.mxu0 0
    %1929 = vmatpush2.bf16.msra.mxu0 0
    %1930 = vmatprep.subr.bf16.mxu0 0
    %1931 = vmatpush2.bf16.msra.mxu0 0
    %1932 = vmatprep.subr.bf16.mxu0 0
    %1933 = vmatpush2.bf16.msra.mxu0 0
    %1934 = vmatprep.subr.bf16.mxu0 0
    %1935 = vmatpush2.bf16.msra.mxu0 0
    %1936 = vmatprep.subr.bf16.mxu0 0
    %1937 = vmatpush2.bf16.msra.mxu0 0
    %1938 = vmatprep.subr.bf16.mxu0 0
    %1939 = vmatpush2.bf16.msra.mxu0 0
    %1940 = vmatprep.mubr.bf16.mxu0 0
    %1941 = vmatmul.mubr.bf16.gmra.mxu0 %v1866
    %v1942 = vpop.f32.mrf.mxu0
    %v1943 = vadd.f32 0.0, %v1942
    %v1944 = vpop.f32.mrf.mxu0
    %v1945 = vpop.f32.mrf.mxu0
    %v1946 = vpop.f32.mrf.mxu0
    %1947 = vdwg.mxu0
    %v1948 = vadd.f32 %v1820, %v1902
    %v1949 = vxor.u32 %v1948, 2147483648
    %v1950 = vmul.f32 %v1949, 1.442695
    %v1951 = vpow.pop %v1950
    %v1952 = vadd.f32 %v1951, 1.0
    %v1953 = vrcp.pop %v1952
    %v1954 = vmul.f32 1.0, %v1953
    %v1955 = vadd.f32 %v1822, %v1904
    %v1956 = vxor.u32 %v1955, 2147483648
    %v1957 = vmul.f32 %v1956, 1.442695
    %v1958 = vpow.pop %v1957
    %v1959 = vadd.f32 %v1958, 1.0
    %v1960 = vrcp.pop %v1959
    %v1961 = vmul.f32 1.0, %v1960
    %v1962 = vadd.f32 %v1943, %v514
    %v1963 = vmul.f32 %v1954, %v1962
    %v1964 = vadd.f32 %v1861, %v1963
    %v1965 = vtanh.pop %v1964
    %v1966 = vsub.f32 1.0, %v1961
    %v1967 = vmul.f32 %v1966, %v1965
    %v1968 = vmul.f32 %v1961, %v1680
    %v1969 = vadd.f32 %v1967, %v1968
    %v1970 = vpack.c.bf16 %v1784, %v1784
    %1971 = vmatprep.subr.bf16.mxu0 %v654
    %1972 = vmatpush1.bf16.msra.mxu0 %v653
    %1973 = vmatprep.subr.bf16.mxu0 %v651
    %1974 = vmatpush1.bf16.msra.mxu0 %v650
    %1975 = vmatprep.subr.bf16.mxu0 %v648
    %1976 = vmatpush1.bf16.msra.mxu0 %v647
    %1977 = vmatprep.subr.bf16.mxu0 %v645
    %1978 = vmatpush1.bf16.msra.mxu0 %v644
    %1979 = vmatprep.subr.bf16.mxu0 %v642
    %1980 = vmatpush1.bf16.msra.mxu0 %v641
    %1981 = vmatprep.subr.bf16.mxu0 %v639
    %1982 = vmatpush1.bf16.msra.mxu0 %v638
    %1983 = vmatprep.subr.bf16.mxu0 %v636
    %1984 = vmatpush1.bf16.msra.mxu0 %v635
    %1985 = vmatprep.subr.bf16.mxu0 %v633
    %1986 = vmatpush1.bf16.msra.mxu0 %v632
    %1987 = vmatprep.subr.bf16.mxu0 0
    %1988 = vmatpush2.bf16.msra.mxu0 0
    %1989 = vmatprep.subr.bf16.mxu0 0
    %1990 = vmatpush2.bf16.msra.mxu0 0
    %1991 = vmatprep.subr.bf16.mxu0 0
    %1992 = vmatpush2.bf16.msra.mxu0 0
    %1993 = vmatprep.subr.bf16.mxu0 0
    %1994 = vmatpush2.bf16.msra.mxu0 0
    %1995 = vmatprep.subr.bf16.mxu0 0
    %1996 = vmatpush2.bf16.msra.mxu0 0
    %1997 = vmatprep.subr.bf16.mxu0 0
    %1998 = vmatpush2.bf16.msra.mxu0 0
    %1999 = vmatprep.subr.bf16.mxu0 0
    %2000 = vmatpush2.bf16.msra.mxu0 0
    %2001 = vmatprep.subr.bf16.mxu0 0
    %2002 = vmatpush2.bf16.msra.mxu0 0
    %2003 = vmatprep.mubr.bf16.mxu0 0
    %2004 = vmatmul.mubr.bf16.gmra.mxu0 %v1970
    %v2005 = vpop.f32.mrf.mxu0
    %v2006 = vadd.f32 0.0, %v2005
    %v2007 = vpop.f32.mrf.mxu0
    %v2008 = vadd.f32 0.0, %v2007
    %v2009 = vpop.f32.mrf.mxu0
    %v2010 = vpop.f32.mrf.mxu0
    %2011 = vdwg.mxu0
    %2012 = vmatprep.subr.bf16.mxu0 0
    %2013 = vmatpush1.bf16.msra.mxu0 %v655
    %2014 = vmatprep.subr.bf16.mxu0 0
    %2015 = vmatpush1.bf16.msra.mxu0 %v652
    %2016 = vmatprep.subr.bf16.mxu0 0
    %2017 = vmatpush1.bf16.msra.mxu0 %v649
    %2018 = vmatprep.subr.bf16.mxu0 0
    %2019 = vmatpush1.bf16.msra.mxu0 %v646
    %2020 = vmatprep.subr.bf16.mxu0 0
    %2021 = vmatpush1.bf16.msra.mxu0 %v643
    %2022 = vmatprep.subr.bf16.mxu0 0
    %2023 = vmatpush1.bf16.msra.mxu0 %v640
    %2024 = vmatprep.subr.bf16.mxu0 0
    %2025 = vmatpush1.bf16.msra.mxu0 %v637
    %2026 = vmatprep.subr.bf16.mxu0 0
    %2027 = vmatpush1.bf16.msra.mxu0 %v634
    %2028 = vmatprep.subr.bf16.mxu0 0
    %2029 = vmatpush2.bf16.msra.mxu0 0
    %2030 = vmatprep.subr.bf16.mxu0 0
    %2031 = vmatpush2.bf16.msra.mxu0 0
    %2032 = vmatprep.subr.bf16.mxu0 0
    %2033 = vmatpush2.bf16.msra.mxu0 0
    %2034 = vmatprep.subr.bf16.mxu0 0
    %2035 = vmatpush2.bf16.msra.mxu0 0
    %2036 = vmatprep.subr.bf16.mxu0 0
    %2037 = vmatpush2.bf16.msra.mxu0 0
    %2038 = vmatprep.subr.bf16.mxu0 0
    %2039 = vmatpush2.bf16.msra.mxu0 0
    %2040 = vmatprep.subr.bf16.mxu0 0
    %2041 = vmatpush2.bf16.msra.mxu0 0
    %2042 = vmatprep.subr.bf16.mxu0 0
    %2043 = vmatpush2.bf16.msra.mxu0 0
    %2044 = vmatprep.mubr.bf16.mxu0 0
    %2045 = vmatmul.mubr.bf16.gmra.mxu0 %v1970
    %v2046 = vpop.f32.mrf.mxu0
    %v2047 = vadd.f32 0.0, %v2046
    %v2048 = vpop.f32.mrf.mxu0
    %v2049 = vpop.f32.mrf.mxu0
    %v2050 = vpop.f32.mrf.mxu0
    %2051 = vdwg.mxu0
    %v2052 = vadd.f32 %v402, %v2006
    %v2053 = vxor.u32 %v2052, 2147483648
    %v2054 = vmul.f32 %v2053, 1.442695
    %v2055 = vpow.pop %v2054
    %v2056 = vadd.f32 %v2055, 1.0
    %v2057 = vrcp.pop %v2056
    %v2058 = vmul.f32 1.0, %v2057
    %v2059 = vadd.f32 %v404, %v2008
    %v2060 = vxor.u32 %v2059, 2147483648
    %v2061 = vmul.f32 %v2060, 1.442695
    %v2062 = vpow.pop %v2061
    %v2063 = vadd.f32 %v2062, 1.0
    %v2064 = vrcp.pop %v2063
    %v2065 = vmul.f32 1.0, %v2064
    %v2066 = vadd.f32 %v2047, %v507
    %v2067 = vmul.f32 %v2058, %v2066
    %v2068 = vadd.f32 %v471, %v2067
    %v2069 = vtanh.pop %v2068
    %v2070 = vsub.f32 1.0, %v2065
    %v2071 = vmul.f32 %v2070, %v2069
    %v2072 = vmul.f32 %v2065, %v1784
    %v2073 = vadd.f32 %v2071, %v2072
    %2074 = vmatprep.subr.bf16.mxu0 %v1021
    %2075 = vmatpush1.bf16.msra.mxu0 %v1020
    %2076 = vmatprep.subr.bf16.mxu0 %v1018
    %2077 = vmatpush1.bf16.msra.mxu0 %v1017
    %2078 = vmatprep.subr.bf16.mxu0 %v1015
    %2079 = vmatpush1.bf16.msra.mxu0 %v1014
    %2080 = vmatprep.subr.bf16.mxu0 %v1012
    %2081 = vmatpush1.bf16.msra.mxu0 %v1011
    %2082 = vmatprep.subr.bf16.mxu0 %v1009
    %2083 = vmatpush1.bf16.msra.mxu0 %v1008
    %2084 = vmatprep.subr.bf16.mxu0 %v1006
    %2085 = vmatpush1.bf16.msra.mxu0 %v1005
    %2086 = vmatprep.subr.bf16.mxu0 %v1003
    %2087 = vmatpush1.bf16.msra.mxu0 %v1002
    %2088 = vmatprep.subr.bf16.mxu0 %v1000
    %2089 = vmatpush1.bf16.msra.mxu0 %v999
    %2090 = vmatprep.subr.bf16.mxu0 0
    %2091 = vmatpush2.bf16.msra.mxu0 0
    %2092 = vmatprep.subr.bf16.mxu0 0
    %2093 = vmatpush2.bf16.msra.mxu0 0
    %2094 = vmatprep.subr.bf16.mxu0 0
    %2095 = vmatpush2.bf16.msra.mxu0 0
    %2096 = vmatprep.subr.bf16.mxu0 0
    %2097 = vmatpush2.bf16.msra.mxu0 0
    %2098 = vmatprep.subr.bf16.mxu0 0
    %2099 = vmatpush2.bf16.msra.mxu0 0
    %2100 = vmatprep.subr.bf16.mxu0 0
    %2101 = vmatpush2.bf16.msra.mxu0 0
    %2102 = vmatprep.subr.bf16.mxu0 0
    %2103 = vmatpush2.bf16.msra.mxu0 0
    %2104 = vmatprep.subr.bf16.mxu0 0
    %2105 = vmatpush2.bf16.msra.mxu0 0
    %2106 = vmatprep.mubr.bf16.mxu0 0
    %2107 = vmatmul.mubr.bf16.gmra.mxu0 %v1970
    %v2108 = vpop.f32.mrf.mxu0
    %v2109 = vadd.f32 %v490, %v2108
    %v2110 = vpop.f32.mrf.mxu0
    %v2111 = vadd.f32 %v494, %v2110
    %v2112 = vpop.f32.mrf.mxu0
    %v2113 = vpop.f32.mrf.mxu0
    %2114 = vdwg.mxu0
    %2115 = vmatprep.subr.bf16.mxu0 0
    %2116 = vmatpush1.bf16.msra.mxu0 %v1022
    %2117 = vmatprep.subr.bf16.mxu0 0
    %2118 = vmatpush1.bf16.msra.mxu0 %v1019
    %2119 = vmatprep.subr.bf16.mxu0 0
    %2120 = vmatpush1.bf16.msra.mxu0 %v1016
    %2121 = vmatprep.subr.bf16.mxu0 0
    %2122 = vmatpush1.bf16.msra.mxu0 %v1013
    %2123 = vmatprep.subr.bf16.mxu0 0
    %2124 = vmatpush1.bf16.msra.mxu0 %v1010
    %2125 = vmatprep.subr.bf16.mxu0 0
    %2126 = vmatpush1.bf16.msra.mxu0 %v1007
    %2127 = vmatprep.subr.bf16.mxu0 0
    %2128 = vmatpush1.bf16.msra.mxu0 %v1004
    %2129 = vmatprep.subr.bf16.mxu0 0
    %2130 = vmatpush1.bf16.msra.mxu0 %v1001
    %2131 = vmatprep.subr.bf16.mxu0 0
    %2132 = vmatpush2.bf16.msra.mxu0 0
    %2133 = vmatprep.subr.bf16.mxu0 0
    %2134 = vmatpush2.bf16.msra.mxu0 0
    %2135 = vmatprep.subr.bf16.mxu0 0
    %2136 = vmatpush2.bf16.msra.mxu0 0
    %2137 = vmatprep.subr.bf16.mxu0 0
    %2138 = vmatpush2.bf16.msra.mxu0 0
    %2139 = vmatprep.subr.bf16.mxu0 0
    %2140 = vmatpush2.bf16.msra.mxu0 0
    %2141 = vmatprep.subr.bf16.mxu0 0
    %2142 = vmatpush2.bf16.msra.mxu0 0
    %2143 = vmatprep.subr.bf16.mxu0 0
    %2144 = vmatpush2.bf16.msra.mxu0 0
    %2145 = vmatprep.subr.bf16.mxu0 0
    %2146 = vmatpush2.bf16.msra.mxu0 0
    %2147 = vmatprep.mubr.bf16.mxu0 0
    %2148 = vmatmul.mubr.bf16.gmra.mxu0 %v1970
    %v2149 = vpop.f32.mrf.mxu0
    %v2150 = vadd.f32 %v498, %v2149
    %v2151 = vpop.f32.mrf.mxu0
    %v2152 = vpop.f32.mrf.mxu0
    %v2153 = vpop.f32.mrf.mxu0
    %2154 = vdwg.mxu0
    %v2155 = vpack.c.bf16 %v1969, %v1969
    %2156 = vmatprep.subr.bf16.mxu0 %v1263
    %2157 = vmatpush1.bf16.msra.mxu0 %v1262
    %2158 = vmatprep.subr.bf16.mxu0 %v1260
    %2159 = vmatpush1.bf16.msra.mxu0 %v1259
    %2160 = vmatprep.subr.bf16.mxu0 %v1257
    %2161 = vmatpush1.bf16.msra.mxu0 %v1256
    %2162 = vmatprep.subr.bf16.mxu0 %v1254
    %2163 = vmatpush1.bf16.msra.mxu0 %v1253
    %2164 = vmatprep.subr.bf16.mxu0 %v1251
    %2165 = vmatpush1.bf16.msra.mxu0 %v1250
    %2166 = vmatprep.subr.bf16.mxu0 %v1248
    %2167 = vmatpush1.bf16.msra.mxu0 %v1247
    %2168 = vmatprep.subr.bf16.mxu0 %v1245
    %2169 = vmatpush1.bf16.msra.mxu0 %v1244
    %2170 = vmatprep.subr.bf16.mxu0 %v1242
    %2171 = vmatpush1.bf16.msra.mxu0 %v1241
    %2172 = vmatprep.subr.bf16.mxu0 0
    %2173 = vmatpush2.bf16.msra.mxu0 0
    %2174 = vmatprep.subr.bf16.mxu0 0
    %2175 = vmatpush2.bf16.msra.mxu0 0
    %2176 = vmatprep.subr.bf16.mxu0 0
    %2177 = vmatpush2.bf16.msra.mxu0 0
    %2178 = vmatprep.subr.bf16.mxu0 0
    %2179 = vmatpush2.bf16.msra.mxu0 0
    %2180 = vmatprep.subr.bf16.mxu0 0
    %2181 = vmatpush2.bf16.msra.mxu0 0
    %2182 = vmatprep.subr.bf16.mxu0 0
    %2183 = vmatpush2.bf16.msra.mxu0 0
    %2184 = vmatprep.subr.bf16.mxu0 0
    %2185 = vmatpush2.bf16.msra.mxu0 0
    %2186 = vmatprep.subr.bf16.mxu0 0
    %2187 = vmatpush2.bf16.msra.mxu0 0
    %2188 = vmatprep.mubr.bf16.mxu0 0
    %2189 = vmatmul.mubr.bf16.gmra.mxu0 %v2155
    %v2190 = vpop.f32.mrf.mxu0
    %v2191 = vadd.f32 0.0, %v2190
    %v2192 = vpop.f32.mrf.mxu0
    %v2193 = vadd.f32 0.0, %v2192
    %v2194 = vpop.f32.mrf.mxu0
    %v2195 = vpop.f32.mrf.mxu0
    %2196 = vdwg.mxu0
    %2197 = vmatprep.subr.bf16.mxu0 0
    %2198 = vmatpush1.bf16.msra.mxu0 %v1264
    %2199 = vmatprep.subr.bf16.mxu0 0
    %2200 = vmatpush1.bf16.msra.mxu0 %v1261
    %2201 = vmatprep.subr.bf16.mxu0 0
    %2202 = vmatpush1.bf16.msra.mxu0 %v1258
    %2203 = vmatprep.subr.bf16.mxu0 0
    %2204 = vmatpush1.bf16.msra.mxu0 %v1255
    %2205 = vmatprep.subr.bf16.mxu0 0
    %2206 = vmatpush1.bf16.msra.mxu0 %v1252
    %2207 = vmatprep.subr.bf16.mxu0 0
    %2208 = vmatpush1.bf16.msra.mxu0 %v1249
    %2209 = vmatprep.subr.bf16.mxu0 0
    %2210 = vmatpush1.bf16.msra.mxu0 %v1246
    %2211 = vmatprep.subr.bf16.mxu0 0
    %2212 = vmatpush1.bf16.msra.mxu0 %v1243
    %2213 = vmatprep.subr.bf16.mxu0 0
    %2214 = vmatpush2.bf16.msra.mxu0 0
    %2215 = vmatprep.subr.bf16.mxu0 0
    %2216 = vmatpush2.bf16.msra.mxu0 0
    %2217 = vmatprep.subr.bf16.mxu0 0
    %2218 = vmatpush2.bf16.msra.mxu0 0
    %2219 = vmatprep.subr.bf16.mxu0 0
    %2220 = vmatpush2.bf16.msra.mxu0 0
    %2221 = vmatprep.subr.bf16.mxu0 0
    %2222 = vmatpush2.bf16.msra.mxu0 0
    %2223 = vmatprep.subr.bf16.mxu0 0
    %2224 = vmatpush2.bf16.msra.mxu0 0
    %2225 = vmatprep.subr.bf16.mxu0 0
    %2226 = vmatpush2.bf16.msra.mxu0 0
    %2227 = vmatprep.subr.bf16.mxu0 0
    %2228 = vmatpush2.bf16.msra.mxu0 0
    %2229 = vmatprep.mubr.bf16.mxu0 0
    %2230 = vmatmul.mubr.bf16.gmra.mxu0 %v2155
    %v2231 = vpop.f32.mrf.mxu0
    %v2232 = vadd.f32 0.0, %v2231
    %v2233 = vpop.f32.mrf.mxu0
    %v2234 = vpop.f32.mrf.mxu0
    %v2235 = vpop.f32.mrf.mxu0
    %2236 = vdwg.mxu0
    %v2237 = vadd.f32 %v2109, %v2191
    %v2238 = vxor.u32 %v2237, 2147483648
    %v2239 = vmul.f32 %v2238, 1.442695
    %v2240 = vpow.pop %v2239
    %v2241 = vadd.f32 %v2240, 1.0
    %v2242 = vrcp.pop %v2241
    %v2243 = vmul.f32 1.0, %v2242
    %v2244 = vadd.f32 %v2111, %v2193
    %v2245 = vxor.u32 %v2244, 2147483648
    %v2246 = vmul.f32 %v2245, 1.442695
    %v2247 = vpow.pop %v2246
    %v2248 = vadd.f32 %v2247, 1.0
    %v2249 = vrcp.pop %v2248
    %v2250 = vmul.f32 1.0, %v2249
    %v2251 = vadd.f32 %v2232, %v514
    %v2252 = vmul.f32 %v2243, %v2251
    %v2253 = vadd.f32 %v2150, %v2252
    %v2254 = vtanh.pop %v2253
    %v2255 = vsub.f32 1.0, %v2250
    %v2256 = vmul.f32 %v2255, %v2254
    %v2257 = vmul.f32 %v2250, %v1969
    %v2258 = vadd.f32 %v2256, %v2257
    %v2259 = vpack.c.bf16 %v2073, %v2073
    %2260 = vmatprep.subr.bf16.mxu0 %v654
    %2261 = vmatpush1.bf16.msra.mxu0 %v653
    %2262 = vmatprep.subr.bf16.mxu0 %v651
    %2263 = vmatpush1.bf16.msra.mxu0 %v650
    %2264 = vmatprep.subr.bf16.mxu0 %v648
    %2265 = vmatpush1.bf16.msra.mxu0 %v647
    %2266 = vmatprep.subr.bf16.mxu0 %v645
    %2267 = vmatpush1.bf16.msra.mxu0 %v644
    %2268 = vmatprep.subr.bf16.mxu0 %v642
    %2269 = vmatpush1.bf16.msra.mxu0 %v641
    %2270 = vmatprep.subr.bf16.mxu0 %v639
    %2271 = vmatpush1.bf16.msra.mxu0 %v638
    %2272 = vmatprep.subr.bf16.mxu0 %v636
    %2273 = vmatpush1.bf16.msra.mxu0 %v635
    %2274 = vmatprep.subr.bf16.mxu0 %v633
    %2275 = vmatpush1.bf16.msra.mxu0 %v632
    %2276 = vmatprep.subr.bf16.mxu0 0
    %2277 = vmatpush2.bf16.msra.mxu0 0
    %2278 = vmatprep.subr.bf16.mxu0 0
    %2279 = vmatpush2.bf16.msra.mxu0 0
    %2280 = vmatprep.subr.bf16.mxu0 0
    %2281 = vmatpush2.bf16.msra.mxu0 0
    %2282 = vmatprep.subr.bf16.mxu0 0
    %2283 = vmatpush2.bf16.msra.mxu0 0
    %2284 = vmatprep.subr.bf16.mxu0 0
    %2285 = vmatpush2.bf16.msra.mxu0 0
    %2286 = vmatprep.subr.bf16.mxu0 0
    %2287 = vmatpush2.bf16.msra.mxu0 0
    %2288 = vmatprep.subr.bf16.mxu0 0
    %2289 = vmatpush2.bf16.msra.mxu0 0
    %2290 = vmatprep.subr.bf16.mxu0 0
    %2291 = vmatpush2.bf16.msra.mxu0 0
    %2292 = vmatprep.mubr.bf16.mxu0 0
    %2293 = vmatmul.mubr.bf16.gmra.mxu0 %v2259
    %v2294 = vpop.f32.mrf.mxu0
    %v2295 = vadd.f32 0.0, %v2294
    %v2296 = vpop.f32.mrf.mxu0
    %v2297 = vadd.f32 0.0, %v2296
    %v2298 = vpop.f32.mrf.mxu0
    %v2299 = vpop.f32.mrf.mxu0
    %2300 = vdwg.mxu0
    %2301 = vmatprep.subr.bf16.mxu0 0
    %2302 = vmatpush1.bf16.msra.mxu0 %v655
    %2303 = vmatprep.subr.bf16.mxu0 0
    %2304 = vmatpush1.bf16.msra.mxu0 %v652
    %2305 = vmatprep.subr.bf16.mxu0 0
    %2306 = vmatpush1.bf16.msra.mxu0 %v649
    %2307 = vmatprep.subr.bf16.mxu0 0
    %2308 = vmatpush1.bf16.msra.mxu0 %v646
    %2309 = vmatprep.subr.bf16.mxu0 0
    %2310 = vmatpush1.bf16.msra.mxu0 %v643
    %2311 = vmatprep.subr.bf16.mxu0 0
    %2312 = vmatpush1.bf16.msra.mxu0 %v640
    %2313 = vmatprep.subr.bf16.mxu0 0
    %2314 = vmatpush1.bf16.msra.mxu0 %v637
    %2315 = vmatprep.subr.bf16.mxu0 0
    %2316 = vmatpush1.bf16.msra.mxu0 %v634
    %2317 = vmatprep.subr.bf16.mxu0 0
    %2318 = vmatpush2.bf16.msra.mxu0 0
    %2319 = vmatprep.subr.bf16.mxu0 0
    %2320 = vmatpush2.bf16.msra.mxu0 0
    %2321 = vmatprep.subr.bf16.mxu0 0
    %2322 = vmatpush2.bf16.msra.mxu0 0
    %2323 = vmatprep.subr.bf16.mxu0 0
    %2324 = vmatpush2.bf16.msra.mxu0 0
    %2325 = vmatprep.subr.bf16.mxu0 0
    %2326 = vmatpush2.bf16.msra.mxu0 0
    %2327 = vmatprep.subr.bf16.mxu0 0
    %2328 = vmatpush2.bf16.msra.mxu0 0
    %2329 = vmatprep.subr.bf16.mxu0 0
    %2330 = vmatpush2.bf16.msra.mxu0 0
    %2331 = vmatprep.subr.bf16.mxu0 0
    %2332 = vmatpush2.bf16.msra.mxu0 0
    %2333 = vmatprep.mubr.bf16.mxu0 0
    %2334 = vmatmul.mubr.bf16.gmra.mxu0 %v2259
    %v2335 = vpop.f32.mrf.mxu0
    %v2336 = vadd.f32 0.0, %v2335
    %v2337 = vpop.f32.mrf.mxu0
    %v2338 = vpop.f32.mrf.mxu0
    %v2339 = vpop.f32.mrf.mxu0
    %2340 = vdwg.mxu0
    %v2341 = vadd.f32 %v406, %v2295
    %v2342 = vxor.u32 %v2341, 2147483648
    %v2343 = vmul.f32 %v2342, 1.442695
    %v2344 = vpow.pop %v2343
    %v2345 = vadd.f32 %v2344, 1.0
    %v2346 = vrcp.pop %v2345
    %v2347 = vmul.f32 1.0, %v2346
    %v2348 = vadd.f32 %v408, %v2297
    %v2349 = vxor.u32 %v2348, 2147483648
    %v2350 = vmul.f32 %v2349, 1.442695
    %v2351 = vpow.pop %v2350
    %v2352 = vadd.f32 %v2351, 1.0
    %v2353 = vrcp.pop %v2352
    %v2354 = vmul.f32 1.0, %v2353
    %v2355 = vadd.f32 %v2336, %v507
    %v2356 = vmul.f32 %v2347, %v2355
    %v2357 = vadd.f32 %v474, %v2356
    %v2358 = vtanh.pop %v2357
    %v2359 = vsub.f32 1.0, %v2354
    %v2360 = vmul.f32 %v2359, %v2358
    %v2361 = vmul.f32 %v2354, %v2073
    %v2362 = vadd.f32 %v2360, %v2361
    %2363 = vmatprep.subr.bf16.mxu0 %v1021
    %2364 = vmatpush1.bf16.msra.mxu0 %v1020
    %2365 = vmatprep.subr.bf16.mxu0 %v1018
    %2366 = vmatpush1.bf16.msra.mxu0 %v1017
    %2367 = vmatprep.subr.bf16.mxu0 %v1015
    %2368 = vmatpush1.bf16.msra.mxu0 %v1014
    %2369 = vmatprep.subr.bf16.mxu0 %v1012
    %2370 = vmatpush1.bf16.msra.mxu0 %v1011
    %2371 = vmatprep.subr.bf16.mxu0 %v1009
    %2372 = vmatpush1.bf16.msra.mxu0 %v1008
    %2373 = vmatprep.subr.bf16.mxu0 %v1006
    %2374 = vmatpush1.bf16.msra.mxu0 %v1005
    %2375 = vmatprep.subr.bf16.mxu0 %v1003
    %2376 = vmatpush1.bf16.msra.mxu0 %v1002
    %2377 = vmatprep.subr.bf16.mxu0 %v1000
    %2378 = vmatpush1.bf16.msra.mxu0 %v999
    %2379 = vmatprep.subr.bf16.mxu0 0
    %2380 = vmatpush2.bf16.msra.mxu0 0
    %2381 = vmatprep.subr.bf16.mxu0 0
    %2382 = vmatpush2.bf16.msra.mxu0 0
    %2383 = vmatprep.subr.bf16.mxu0 0
    %2384 = vmatpush2.bf16.msra.mxu0 0
    %2385 = vmatprep.subr.bf16.mxu0 0
    %2386 = vmatpush2.bf16.msra.mxu0 0
    %2387 = vmatprep.subr.bf16.mxu0 0
    %2388 = vmatpush2.bf16.msra.mxu0 0
    %2389 = vmatprep.subr.bf16.mxu0 0
    %2390 = vmatpush2.bf16.msra.mxu0 0
    %2391 = vmatprep.subr.bf16.mxu0 0
    %2392 = vmatpush2.bf16.msra.mxu0 0
    %2393 = vmatprep.subr.bf16.mxu0 0
    %2394 = vmatpush2.bf16.msra.mxu0 0
    %2395 = vmatprep.mubr.bf16.mxu0 0
    %2396 = vmatmul.mubr.bf16.gmra.mxu0 %v2259
    %v2397 = vpop.f32.mrf.mxu0
    %v2398 = vadd.f32 %v490, %v2397
    %v2399 = vpop.f32.mrf.mxu0
    %v2400 = vadd.f32 %v494, %v2399
    %v2401 = vpop.f32.mrf.mxu0
    %v2402 = vpop.f32.mrf.mxu0
    %2403 = vdwg.mxu0
    %2404 = vmatprep.subr.bf16.mxu0 0
    %2405 = vmatpush1.bf16.msra.mxu0 %v1022
    %2406 = vmatprep.subr.bf16.mxu0 0
    %2407 = vmatpush1.bf16.msra.mxu0 %v1019
    %2408 = vmatprep.subr.bf16.mxu0 0
    %2409 = vmatpush1.bf16.msra.mxu0 %v1016
    %2410 = vmatprep.subr.bf16.mxu0 0
    %2411 = vmatpush1.bf16.msra.mxu0 %v1013
    %2412 = vmatprep.subr.bf16.mxu0 0
    %2413 = vmatpush1.bf16.msra.mxu0 %v1010
    %2414 = vmatprep.subr.bf16.mxu0 0
    %2415 = vmatpush1.bf16.msra.mxu0 %v1007
    %2416 = vmatprep.subr.bf16.mxu0 0
    %2417 = vmatpush1.bf16.msra.mxu0 %v1004
    %2418 = vmatprep.subr.bf16.mxu0 0
    %2419 = vmatpush1.bf16.msra.mxu0 %v1001
    %2420 = vmatprep.subr.bf16.mxu0 0
    %2421 = vmatpush2.bf16.msra.mxu0 0
    %2422 = vmatprep.subr.bf16.mxu0 0
    %2423 = vmatpush2.bf16.msra.mxu0 0
    %2424 = vmatprep.subr.bf16.mxu0 0
    %2425 = vmatpush2.bf16.msra.mxu0 0
    %2426 = vmatprep.subr.bf16.mxu0 0
    %2427 = vmatpush2.bf16.msra.mxu0 0
    %2428 = vmatprep.subr.bf16.mxu0 0
    %2429 = vmatpush2.bf16.msra.mxu0 0
    %2430 = vmatprep.subr.bf16.mxu0 0
    %2431 = vmatpush2.bf16.msra.mxu0 0
    %2432 = vmatprep.subr.bf16.mxu0 0
    %2433 = vmatpush2.bf16.msra.mxu0 0
    %2434 = vmatprep.subr.bf16.mxu0 0
    %2435 = vmatpush2.bf16.msra.mxu0 0
    %2436 = vmatprep.mubr.bf16.mxu0 0
    %2437 = vmatmul.mubr.bf16.gmra.mxu0 %v2259
    %v2438 = vpop.f32.mrf.mxu0
    %v2439 = vadd.f32 %v498, %v2438
    %v2440 = vpop.f32.mrf.mxu0
    %v2441 = vpop.f32.mrf.mxu0
    %v2442 = vpop.f32.mrf.mxu0
    %2443 = vdwg.mxu0
    %v2444 = vpack.c.bf16 %v2258, %v2258
    %2445 = vmatprep.subr.bf16.mxu0 %v1263
    %2446 = vmatpush1.bf16.msra.mxu0 %v1262
    %2447 = vmatprep.subr.bf16.mxu0 %v1260
    %2448 = vmatpush1.bf16.msra.mxu0 %v1259
    %2449 = vmatprep.subr.bf16.mxu0 %v1257
    %2450 = vmatpush1.bf16.msra.mxu0 %v1256
    %2451 = vmatprep.subr.bf16.mxu0 %v1254
    %2452 = vmatpush1.bf16.msra.mxu0 %v1253
    %2453 = vmatprep.subr.bf16.mxu0 %v1251
    %2454 = vmatpush1.bf16.msra.mxu0 %v1250
    %2455 = vmatprep.subr.bf16.mxu0 %v1248
    %2456 = vmatpush1.bf16.msra.mxu0 %v1247
    %2457 = vmatprep.subr.bf16.mxu0 %v1245
    %2458 = vmatpush1.bf16.msra.mxu0 %v1244
    %2459 = vmatprep.subr.bf16.mxu0 %v1242
    %2460 = vmatpush1.bf16.msra.mxu0 %v1241
    %2461 = vmatprep.subr.bf16.mxu0 0
    %2462 = vmatpush2.bf16.msra.mxu0 0
    %2463 = vmatprep.subr.bf16.mxu0 0
    %2464 = vmatpush2.bf16.msra.mxu0 0
    %2465 = vmatprep.subr.bf16.mxu0 0
    %2466 = vmatpush2.bf16.msra.mxu0 0
    %2467 = vmatprep.subr.bf16.mxu0 0
    %2468 = vmatpush2.bf16.msra.mxu0 0
    %2469 = vmatprep.subr.bf16.mxu0 0
    %2470 = vmatpush2.bf16.msra.mxu0 0
    %2471 = vmatprep.subr.bf16.mxu0 0
    %2472 = vmatpush2.bf16.msra.mxu0 0
    %2473 = vmatprep.subr.bf16.mxu0 0
    %2474 = vmatpush2.bf16.msra.mxu0 0
    %2475 = vmatprep.subr.bf16.mxu0 0
    %2476 = vmatpush2.bf16.msra.mxu0 0
    %2477 = vmatprep.mubr.bf16.mxu0 0
    %2478 = vmatmul.mubr.bf16.gmra.mxu0 %v2444
    %v2479 = vpop.f32.mrf.mxu0
    %v2480 = vadd.f32 0.0, %v2479
    %v2481 = vpop.f32.mrf.mxu0
    %v2482 = vadd.f32 0.0, %v2481
    %v2483 = vpop.f32.mrf.mxu0
    %v2484 = vpop.f32.mrf.mxu0
    %2485 = vdwg.mxu0
    %2486 = vmatprep.subr.bf16.mxu0 0
    %2487 = vmatpush1.bf16.msra.mxu0 %v1264
    %2488 = vmatprep.subr.bf16.mxu0 0
    %2489 = vmatpush1.bf16.msra.mxu0 %v1261
    %2490 = vmatprep.subr.bf16.mxu0 0
    %2491 = vmatpush1.bf16.msra.mxu0 %v1258
    %2492 = vmatprep.subr.bf16.mxu0 0
    %2493 = vmatpush1.bf16.msra.mxu0 %v1255
    %2494 = vmatprep.subr.bf16.mxu0 0
    %2495 = vmatpush1.bf16.msra.mxu0 %v1252
    %2496 = vmatprep.subr.bf16.mxu0 0
    %2497 = vmatpush1.bf16.msra.mxu0 %v1249
    %2498 = vmatprep.subr.bf16.mxu0 0
    %2499 = vmatpush1.bf16.msra.mxu0 %v1246
    %2500 = vmatprep.subr.bf16.mxu0 0
    %2501 = vmatpush1.bf16.msra.mxu0 %v1243
    %2502 = vmatprep.subr.bf16.mxu0 0
    %2503 = vmatpush2.bf16.msra.mxu0 0
    %2504 = vmatprep.subr.bf16.mxu0 0
    %2505 = vmatpush2.bf16.msra.mxu0 0
    %2506 = vmatprep.subr.bf16.mxu0 0
    %2507 = vmatpush2.bf16.msra.mxu0 0
    %2508 = vmatprep.subr.bf16.mxu0 0
    %2509 = vmatpush2.bf16.msra.mxu0 0
    %2510 = vmatprep.subr.bf16.mxu0 0
    %2511 = vmatpush2.bf16.msra.mxu0 0
    %2512 = vmatprep.subr.bf16.mxu0 0
    %2513 = vmatpush2.bf16.msra.mxu0 0
    %2514 = vmatprep.subr.bf16.mxu0 0
    %2515 = vmatpush2.bf16.msra.mxu0 0
    %2516 = vmatprep.subr.bf16.mxu0 0
    %2517 = vmatpush2.bf16.msra.mxu0 0
    %2518 = vmatprep.mubr.bf16.mxu0 0
    %2519 = vmatmul.mubr.bf16.gmra.mxu0 %v2444
    %v2520 = vpop.f32.mrf.mxu0
    %v2521 = vadd.f32 0.0, %v2520
    %v2522 = vpop.f32.mrf.mxu0
    %v2523 = vpop.f32.mrf.mxu0
    %v2524 = vpop.f32.mrf.mxu0
    %2525 = vdwg.mxu0
    %v2526 = vadd.f32 %v2398, %v2480
    %v2527 = vxor.u32 %v2526, 2147483648
    %v2528 = vmul.f32 %v2527, 1.442695
    %v2529 = vpow.pop %v2528
    %v2530 = vadd.f32 %v2529, 1.0
    %v2531 = vrcp.pop %v2530
    %v2532 = vmul.f32 1.0, %v2531
    %v2533 = vadd.f32 %v2400, %v2482
    %v2534 = vxor.u32 %v2533, 2147483648
    %v2535 = vmul.f32 %v2534, 1.442695
    %v2536 = vpow.pop %v2535
    %v2537 = vadd.f32 %v2536, 1.0
    %v2538 = vrcp.pop %v2537
    %v2539 = vmul.f32 1.0, %v2538
    %v2540 = vadd.f32 %v2521, %v514
    %v2541 = vmul.f32 %v2532, %v2540
    %v2542 = vadd.f32 %v2439, %v2541
    %v2543 = vtanh.pop %v2542
    %v2544 = vsub.f32 1.0, %v2539
    %v2545 = vmul.f32 %v2544, %v2543
    %v2546 = vmul.f32 %v2539, %v2258
    %v2547 = vadd.f32 %v2545, %v2546
    %v2548 = vpack.c.bf16 %v2362, %v2362
    %2549 = vmatprep.subr.bf16.mxu0 %v654
    %2550 = vmatpush1.bf16.msra.mxu0 %v653
    %2551 = vmatprep.subr.bf16.mxu0 %v651
    %2552 = vmatpush1.bf16.msra.mxu0 %v650
    %2553 = vmatprep.subr.bf16.mxu0 %v648
    %2554 = vmatpush1.bf16.msra.mxu0 %v647
    %2555 = vmatprep.subr.bf16.mxu0 %v645
    %2556 = vmatpush1.bf16.msra.mxu0 %v644
    %2557 = vmatprep.subr.bf16.mxu0 %v642
    %2558 = vmatpush1.bf16.msra.mxu0 %v641
    %2559 = vmatprep.subr.bf16.mxu0 %v639
    %2560 = vmatpush1.bf16.msra.mxu0 %v638
    %2561 = vmatprep.subr.bf16.mxu0 %v636
    %2562 = vmatpush1.bf16.msra.mxu0 %v635
    %2563 = vmatprep.subr.bf16.mxu0 %v633
    %2564 = vmatpush1.bf16.msra.mxu0 %v632
    %2565 = vmatprep.subr.bf16.mxu0 0
    %2566 = vmatpush2.bf16.msra.mxu0 0
    %2567 = vmatprep.subr.bf16.mxu0 0
    %2568 = vmatpush2.bf16.msra.mxu0 0
    %2569 = vmatprep.subr.bf16.mxu0 0
    %2570 = vmatpush2.bf16.msra.mxu0 0
    %2571 = vmatprep.subr.bf16.mxu0 0
    %2572 = vmatpush2.bf16.msra.mxu0 0
    %2573 = vmatprep.subr.bf16.mxu0 0
    %2574 = vmatpush2.bf16.msra.mxu0 0
    %2575 = vmatprep.subr.bf16.mxu0 0
    %2576 = vmatpush2.bf16.msra.mxu0 0
    %2577 = vmatprep.subr.bf16.mxu0 0
    %2578 = vmatpush2.bf16.msra.mxu0 0
    %2579 = vmatprep.subr.bf16.mxu0 0
    %2580 = vmatpush2.bf16.msra.mxu0 0
    %2581 = vmatprep.mubr.bf16.mxu0 0
    %2582 = vmatmul.mubr.bf16.gmra.mxu0 %v2548
    %v2583 = vpop.f32.mrf.mxu0
    %v2584 = vadd.f32 0.0, %v2583
    %v2585 = vpop.f32.mrf.mxu0
    %v2586 = vadd.f32 0.0, %v2585
    %v2587 = vpop.f32.mrf.mxu0
    %v2588 = vpop.f32.mrf.mxu0
    %2589 = vdwg.mxu0
    %2590 = vmatprep.subr.bf16.mxu0 0
    %2591 = vmatpush1.bf16.msra.mxu0 %v655
    %2592 = vmatprep.subr.bf16.mxu0 0
    %2593 = vmatpush1.bf16.msra.mxu0 %v652
    %2594 = vmatprep.subr.bf16.mxu0 0
    %2595 = vmatpush1.bf16.msra.mxu0 %v649
    %2596 = vmatprep.subr.bf16.mxu0 0
    %2597 = vmatpush1.bf16.msra.mxu0 %v646
    %2598 = vmatprep.subr.bf16.mxu0 0
    %2599 = vmatpush1.bf16.msra.mxu0 %v643
    %2600 = vmatprep.subr.bf16.mxu0 0
    %2601 = vmatpush1.bf16.msra.mxu0 %v640
    %2602 = vmatprep.subr.bf16.mxu0 0
    %2603 = vmatpush1.bf16.msra.mxu0 %v637
    %2604 = vmatprep.subr.bf16.mxu0 0
    %2605 = vmatpush1.bf16.msra.mxu0 %v634
    %2606 = vmatprep.subr.bf16.mxu0 0
    %2607 = vmatpush2.bf16.msra.mxu0 0
    %2608 = vmatprep.subr.bf16.mxu0 0
    %2609 = vmatpush2.bf16.msra.mxu0 0
    %2610 = vmatprep.subr.bf16.mxu0 0
    %2611 = vmatpush2.bf16.msra.mxu0 0
    %2612 = vmatprep.subr.bf16.mxu0 0
    %2613 = vmatpush2.bf16.msra.mxu0 0
    %2614 = vmatprep.subr.bf16.mxu0 0
    %2615 = vmatpush2.bf16.msra.mxu0 0
    %2616 = vmatprep.subr.bf16.mxu0 0
    %2617 = vmatpush2.bf16.msra.mxu0 0
    %2618 = vmatprep.subr.bf16.mxu0 0
    %2619 = vmatpush2.bf16.msra.mxu0 0
    %2620 = vmatprep.subr.bf16.mxu0 0
    %2621 = vmatpush2.bf16.msra.mxu0 0
    %2622 = vmatprep.mubr.bf16.mxu0 0
    %2623 = vmatmul.mubr.bf16.gmra.mxu0 %v2548
    %v2624 = vpop.f32.mrf.mxu0
    %v2625 = vadd.f32 0.0, %v2624
    %v2626 = vpop.f32.mrf.mxu0
    %v2627 = vpop.f32.mrf.mxu0
    %v2628 = vpop.f32.mrf.mxu0
    %2629 = vdwg.mxu0
    %v2630 = vadd.f32 %v412, %v2584
    %v2631 = vxor.u32 %v2630, 2147483648
    %v2632 = vmul.f32 %v2631, 1.442695
    %v2633 = vpow.pop %v2632
    %v2634 = vadd.f32 %v2633, 1.0
    %v2635 = vrcp.pop %v2634
    %v2636 = vmul.f32 1.0, %v2635
    %v2637 = vadd.f32 %v414, %v2586
    %v2638 = vxor.u32 %v2637, 2147483648
    %v2639 = vmul.f32 %v2638, 1.442695
    %v2640 = vpow.pop %v2639
    %v2641 = vadd.f32 %v2640, 1.0
    %v2642 = vrcp.pop %v2641
    %v2643 = vmul.f32 1.0, %v2642
    %v2644 = vadd.f32 %v2625, %v507
    %v2645 = vmul.f32 %v2636, %v2644
    %v2646 = vadd.f32 %v479, %v2645
    %v2647 = vtanh.pop %v2646
    %v2648 = vsub.f32 1.0, %v2643
    %v2649 = vmul.f32 %v2648, %v2647
    %v2650 = vmul.f32 %v2643, %v2362
    %v2651 = vadd.f32 %v2649, %v2650
    %2652 = vmatprep.subr.bf16.mxu0 %v1021
    %2653 = vmatpush1.bf16.msra.mxu0 %v1020
    %2654 = vmatprep.subr.bf16.mxu0 %v1018
    %2655 = vmatpush1.bf16.msra.mxu0 %v1017
    %2656 = vmatprep.subr.bf16.mxu0 %v1015
    %2657 = vmatpush1.bf16.msra.mxu0 %v1014
    %2658 = vmatprep.subr.bf16.mxu0 %v1012
    %2659 = vmatpush1.bf16.msra.mxu0 %v1011
    %2660 = vmatprep.subr.bf16.mxu0 %v1009
    %2661 = vmatpush1.bf16.msra.mxu0 %v1008
    %2662 = vmatprep.subr.bf16.mxu0 %v1006
    %2663 = vmatpush1.bf16.msra.mxu0 %v1005
    %2664 = vmatprep.subr.bf16.mxu0 %v1003
    %2665 = vmatpush1.bf16.msra.mxu0 %v1002
    %2666 = vmatprep.subr.bf16.mxu0 %v1000
    %2667 = vmatpush1.bf16.msra.mxu0 %v999
    %2668 = vmatprep.subr.bf16.mxu0 0
    %2669 = vmatpush2.bf16.msra.mxu0 0
    %2670 = vmatprep.subr.bf16.mxu0 0
    %2671 = vmatpush2.bf16.msra.mxu0 0
    %2672 = vmatprep.subr.bf16.mxu0 0
    %2673 = vmatpush2.bf16.msra.mxu0 0
    %2674 = vmatprep.subr.bf16.mxu0 0
    %2675 = vmatpush2.bf16.msra.mxu0 0
    %2676 = vmatprep.subr.bf16.mxu0 0
    %2677 = vmatpush2.bf16.msra.mxu0 0
    %2678 = vmatprep.subr.bf16.mxu0 0
    %2679 = vmatpush2.bf16.msra.mxu0 0
    %2680 = vmatprep.subr.bf16.mxu0 0
    %2681 = vmatpush2.bf16.msra.mxu0 0
    %2682 = vmatprep.subr.bf16.mxu0 0
    %2683 = vmatpush2.bf16.msra.mxu0 0
    %2684 = vmatprep.mubr.bf16.mxu0 0
    %2685 = vmatmul.mubr.bf16.gmra.mxu0 %v2548
    %v2686 = vpop.f32.mrf.mxu0
    %v2687 = vadd.f32 %v490, %v2686
    %v2688 = vpop.f32.mrf.mxu0
    %v2689 = vadd.f32 %v494, %v2688
    %v2690 = vpop.f32.mrf.mxu0
    %v2691 = vpop.f32.mrf.mxu0
    %2692 = vdwg.mxu0
    %2693 = vmatprep.subr.bf16.mxu0 0
    %2694 = vmatpush1.bf16.msra.mxu0 %v1022
    %2695 = vmatprep.subr.bf16.mxu0 0
    %2696 = vmatpush1.bf16.msra.mxu0 %v1019
    %2697 = vmatprep.subr.bf16.mxu0 0
    %2698 = vmatpush1.bf16.msra.mxu0 %v1016
    %2699 = vmatprep.subr.bf16.mxu0 0
    %2700 = vmatpush1.bf16.msra.mxu0 %v1013
    %2701 = vmatprep.subr.bf16.mxu0 0
    %2702 = vmatpush1.bf16.msra.mxu0 %v1010
    %2703 = vmatprep.subr.bf16.mxu0 0
    %2704 = vmatpush1.bf16.msra.mxu0 %v1007
    %2705 = vmatprep.subr.bf16.mxu0 0
    %2706 = vmatpush1.bf16.msra.mxu0 %v1004
    %2707 = vmatprep.subr.bf16.mxu0 0
    %2708 = vmatpush1.bf16.msra.mxu0 %v1001
    %2709 = vmatprep.subr.bf16.mxu0 0
    %2710 = vmatpush2.bf16.msra.mxu0 0
    %2711 = vmatprep.subr.bf16.mxu0 0
    %2712 = vmatpush2.bf16.msra.mxu0 0
    %2713 = vmatprep.subr.bf16.mxu0 0
    %2714 = vmatpush2.bf16.msra.mxu0 0
    %2715 = vmatprep.subr.bf16.mxu0 0
    %2716 = vmatpush2.bf16.msra.mxu0 0
    %2717 = vmatprep.subr.bf16.mxu0 0
    %2718 = vmatpush2.bf16.msra.mxu0 0
    %2719 = vmatprep.subr.bf16.mxu0 0
    %2720 = vmatpush2.bf16.msra.mxu0 0
    %2721 = vmatprep.subr.bf16.mxu0 0
    %2722 = vmatpush2.bf16.msra.mxu0 0
    %2723 = vmatprep.subr.bf16.mxu0 0
    %2724 = vmatpush2.bf16.msra.mxu0 0
    %2725 = vmatprep.mubr.bf16.mxu0 0
    %2726 = vmatmul.mubr.bf16.gmra.mxu0 %v2548
    %v2727 = vpop.f32.mrf.mxu0
    %v2728 = vadd.f32 %v498, %v2727
    %v2729 = vpop.f32.mrf.mxu0
    %v2730 = vpop.f32.mrf.mxu0
    %v2731 = vpop.f32.mrf.mxu0
    %2732 = vdwg.mxu0
    %v2733 = vpack.c.bf16 %v2547, %v2547
    %2734 = vmatprep.subr.bf16.mxu0 %v1263
    %2735 = vmatpush1.bf16.msra.mxu0 %v1262
    %2736 = vmatprep.subr.bf16.mxu0 %v1260
    %2737 = vmatpush1.bf16.msra.mxu0 %v1259
    %2738 = vmatprep.subr.bf16.mxu0 %v1257
    %2739 = vmatpush1.bf16.msra.mxu0 %v1256
    %2740 = vmatprep.subr.bf16.mxu0 %v1254
    %2741 = vmatpush1.bf16.msra.mxu0 %v1253
    %2742 = vmatprep.subr.bf16.mxu0 %v1251
    %2743 = vmatpush1.bf16.msra.mxu0 %v1250
    %2744 = vmatprep.subr.bf16.mxu0 %v1248
    %2745 = vmatpush1.bf16.msra.mxu0 %v1247
    %2746 = vmatprep.subr.bf16.mxu0 %v1245
    %2747 = vmatpush1.bf16.msra.mxu0 %v1244
    %2748 = vmatprep.subr.bf16.mxu0 %v1242
    %2749 = vmatpush1.bf16.msra.mxu0 %v1241
    %2750 = vmatprep.subr.bf16.mxu0 0
    %2751 = vmatpush2.bf16.msra.mxu0 0
    %2752 = vmatprep.subr.bf16.mxu0 0
    %2753 = vmatpush2.bf16.msra.mxu0 0
    %2754 = vmatprep.subr.bf16.mxu0 0
    %2755 = vmatpush2.bf16.msra.mxu0 0
    %2756 = vmatprep.subr.bf16.mxu0 0
    %2757 = vmatpush2.bf16.msra.mxu0 0
    %2758 = vmatprep.subr.bf16.mxu0 0
    %2759 = vmatpush2.bf16.msra.mxu0 0
    %2760 = vmatprep.subr.bf16.mxu0 0
    %2761 = vmatpush2.bf16.msra.mxu0 0
    %2762 = vmatprep.subr.bf16.mxu0 0
    %2763 = vmatpush2.bf16.msra.mxu0 0
    %2764 = vmatprep.subr.bf16.mxu0 0
    %2765 = vmatpush2.bf16.msra.mxu0 0
    %2766 = vmatprep.mubr.bf16.mxu0 0
    %2767 = vmatmul.mubr.bf16.gmra.mxu0 %v2733
    %v2768 = vpop.f32.mrf.mxu0
    %v2769 = vadd.f32 0.0, %v2768
    %v2770 = vpop.f32.mrf.mxu0
    %v2771 = vadd.f32 0.0, %v2770
    %v2772 = vpop.f32.mrf.mxu0
    %v2773 = vpop.f32.mrf.mxu0
    %2774 = vdwg.mxu0
    %2775 = vmatprep.subr.bf16.mxu0 0
    %2776 = vmatpush1.bf16.msra.mxu0 %v1264
    %2777 = vmatprep.subr.bf16.mxu0 0
    %2778 = vmatpush1.bf16.msra.mxu0 %v1261
    %2779 = vmatprep.subr.bf16.mxu0 0
    %2780 = vmatpush1.bf16.msra.mxu0 %v1258
    %2781 = vmatprep.subr.bf16.mxu0 0
    %2782 = vmatpush1.bf16.msra.mxu0 %v1255
    %2783 = vmatprep.subr.bf16.mxu0 0
    %2784 = vmatpush1.bf16.msra.mxu0 %v1252
    %2785 = vmatprep.subr.bf16.mxu0 0
    %2786 = vmatpush1.bf16.msra.mxu0 %v1249
    %2787 = vmatprep.subr.bf16.mxu0 0
    %2788 = vmatpush1.bf16.msra.mxu0 %v1246
    %2789 = vmatprep.subr.bf16.mxu0 0
    %2790 = vmatpush1.bf16.msra.mxu0 %v1243
    %2791 = vmatprep.subr.bf16.mxu0 0
    %2792 = vmatpush2.bf16.msra.mxu0 0
    %2793 = vmatprep.subr.bf16.mxu0 0
    %2794 = vmatpush2.bf16.msra.mxu0 0
    %2795 = vmatprep.subr.bf16.mxu0 0
    %2796 = vmatpush2.bf16.msra.mxu0 0
    %2797 = vmatprep.subr.bf16.mxu0 0
    %2798 = vmatpush2.bf16.msra.mxu0 0
    %2799 = vmatprep.subr.bf16.mxu0 0
    %2800 = vmatpush2.bf16.msra.mxu0 0
    %2801 = vmatprep.subr.bf16.mxu0 0
    %2802 = vmatpush2.bf16.msra.mxu0 0
    %2803 = vmatprep.subr.bf16.mxu0 0
    %2804 = vmatpush2.bf16.msra.mxu0 0
    %2805 = vmatprep.subr.bf16.mxu0 0
    %2806 = vmatpush2.bf16.msra.mxu0 0
    %2807 = vmatprep.mubr.bf16.mxu0 0
    %2808 = vmatmul.mubr.bf16.gmra.mxu0 %v2733
    %v2809 = vpop.f32.mrf.mxu0
    %v2810 = vadd.f32 0.0, %v2809
    %v2811 = vpop.f32.mrf.mxu0
    %v2812 = vpop.f32.mrf.mxu0
    %v2813 = vpop.f32.mrf.mxu0
    %2814 = vdwg.mxu0
    %v2815 = vadd.f32 %v2687, %v2769
    %v2816 = vxor.u32 %v2815, 2147483648
    %v2817 = vmul.f32 %v2816, 1.442695
    %v2818 = vpow.pop %v2817
    %v2819 = vadd.f32 %v2818, 1.0
    %v2820 = vrcp.pop %v2819
    %v2821 = vmul.f32 1.0, %v2820
    %v2822 = vadd.f32 %v2689, %v2771
    %v2823 = vxor.u32 %v2822, 2147483648
    %v2824 = vmul.f32 %v2823, 1.442695
    %v2825 = vpow.pop %v2824
    %v2826 = vadd.f32 %v2825, 1.0
    %v2827 = vrcp.pop %v2826
    %v2828 = vmul.f32 1.0, %v2827
    %v2829 = vadd.f32 %v2810, %v514
    %v2830 = vmul.f32 %v2821, %v2829
    %v2831 = vadd.f32 %v2728, %v2830
    %v2832 = vtanh.pop %v2831
    %v2833 = vsub.f32 1.0, %v2828
    %v2834 = vmul.f32 %v2833, %v2832
    %v2835 = vmul.f32 %v2828, %v2547
    %v2836 = vadd.f32 %v2834, %v2835
    %v2837 = vpack.c.bf16 %v2651, %v2651
    %2838 = vmatprep.subr.bf16.mxu0 %v654
    %2839 = vmatpush1.bf16.msra.mxu0 %v653
    %2840 = vmatprep.subr.bf16.mxu0 %v651
    %2841 = vmatpush1.bf16.msra.mxu0 %v650
    %2842 = vmatprep.subr.bf16.mxu0 %v648
    %2843 = vmatpush1.bf16.msra.mxu0 %v647
    %2844 = vmatprep.subr.bf16.mxu0 %v645
    %2845 = vmatpush1.bf16.msra.mxu0 %v644
    %2846 = vmatprep.subr.bf16.mxu0 %v642
    %2847 = vmatpush1.bf16.msra.mxu0 %v641
    %2848 = vmatprep.subr.bf16.mxu0 %v639
    %2849 = vmatpush1.bf16.msra.mxu0 %v638
    %2850 = vmatprep.subr.bf16.mxu0 %v636
    %2851 = vmatpush1.bf16.msra.mxu0 %v635
    %2852 = vmatprep.subr.bf16.mxu0 %v633
    %2853 = vmatpush1.bf16.msra.mxu0 %v632
    %2854 = vmatprep.subr.bf16.mxu0 0
    %2855 = vmatpush2.bf16.msra.mxu0 0
    %2856 = vmatprep.subr.bf16.mxu0 0
    %2857 = vmatpush2.bf16.msra.mxu0 0
    %2858 = vmatprep.subr.bf16.mxu0 0
    %2859 = vmatpush2.bf16.msra.mxu0 0
    %2860 = vmatprep.subr.bf16.mxu0 0
    %2861 = vmatpush2.bf16.msra.mxu0 0
    %2862 = vmatprep.subr.bf16.mxu0 0
    %2863 = vmatpush2.bf16.msra.mxu0 0
    %2864 = vmatprep.subr.bf16.mxu0 0
    %2865 = vmatpush2.bf16.msra.mxu0 0
    %2866 = vmatprep.subr.bf16.mxu0 0
    %2867 = vmatpush2.bf16.msra.mxu0 0
    %2868 = vmatprep.subr.bf16.mxu0 0
    %2869 = vmatpush2.bf16.msra.mxu0 0
    %2870 = vmatprep.mubr.bf16.mxu0 0
    %2871 = vmatmul.mubr.bf16.gmra.mxu0 %v2837
    %v2872 = vpop.f32.mrf.mxu0
    %v2873 = vadd.f32 0.0, %v2872
    %v2874 = vpop.f32.mrf.mxu0
    %v2875 = vadd.f32 0.0, %v2874
    %v2876 = vpop.f32.mrf.mxu0
    %v2877 = vpop.f32.mrf.mxu0
    %2878 = vdwg.mxu0
    %2879 = vmatprep.subr.bf16.mxu0 0
    %2880 = vmatpush1.bf16.msra.mxu0 %v655
    %2881 = vmatprep.subr.bf16.mxu0 0
    %2882 = vmatpush1.bf16.msra.mxu0 %v652
    %2883 = vmatprep.subr.bf16.mxu0 0
    %2884 = vmatpush1.bf16.msra.mxu0 %v649
    %2885 = vmatprep.subr.bf16.mxu0 0
    %2886 = vmatpush1.bf16.msra.mxu0 %v646
    %2887 = vmatprep.subr.bf16.mxu0 0
    %2888 = vmatpush1.bf16.msra.mxu0 %v643
    %2889 = vmatprep.subr.bf16.mxu0 0
    %2890 = vmatpush1.bf16.msra.mxu0 %v640
    %2891 = vmatprep.subr.bf16.mxu0 0
    %2892 = vmatpush1.bf16.msra.mxu0 %v637
    %2893 = vmatprep.subr.bf16.mxu0 0
    %2894 = vmatpush1.bf16.msra.mxu0 %v634
    %2895 = vmatprep.subr.bf16.mxu0 0
    %2896 = vmatpush2.bf16.msra.mxu0 0
    %2897 = vmatprep.subr.bf16.mxu0 0
    %2898 = vmatpush2.bf16.msra.mxu0 0
    %2899 = vmatprep.subr.bf16.mxu0 0
    %2900 = vmatpush2.bf16.msra.mxu0 0
    %2901 = vmatprep.subr.bf16.mxu0 0
    %2902 = vmatpush2.bf16.msra.mxu0 0
    %2903 = vmatprep.subr.bf16.mxu0 0
    %2904 = vmatpush2.bf16.msra.mxu0 0
    %2905 = vmatprep.subr.bf16.mxu0 0
    %2906 = vmatpush2.bf16.msra.mxu0 0
    %2907 = vmatprep.subr.bf16.mxu0 0
    %2908 = vmatpush2.bf16.msra.mxu0 0
    %2909 = vmatprep.subr.bf16.mxu0 0
    %2910 = vmatpush2.bf16.msra.mxu0 0
    %2911 = vmatprep.mubr.bf16.mxu0 0
    %2912 = vmatmul.mubr.bf16.gmra.mxu0 %v2837
    %v2913 = vpop.f32.mrf.mxu0
    %v2914 = vadd.f32 0.0, %v2913
    %v2915 = vpop.f32.mrf.mxu0
    %v2916 = vpop.f32.mrf.mxu0
    %v2917 = vpop.f32.mrf.mxu0
    %2918 = vdwg.mxu0
    %v2919 = vadd.f32 %v416, %v2873
    %v2920 = vxor.u32 %v2919, 2147483648
    %v2921 = vmul.f32 %v2920, 1.442695
    %v2922 = vpow.pop %v2921
    %v2923 = vadd.f32 %v2922, 1.0
    %v2924 = vrcp.pop %v2923
    %v2925 = vmul.f32 1.0, %v2924
    %v2926 = vadd.f32 %v418, %v2875
    %v2927 = vxor.u32 %v2926, 2147483648
    %v2928 = vmul.f32 %v2927, 1.442695
    %v2929 = vpow.pop %v2928
    %v2930 = vadd.f32 %v2929, 1.0
    %v2931 = vrcp.pop %v2930
    %v2932 = vmul.f32 1.0, %v2931
    %v2933 = vadd.f32 %v2914, %v507
    %v2934 = vmul.f32 %v2925, %v2933
    %v2935 = vadd.f32 %v482, %v2934
    %v2936 = vtanh.pop %v2935
    %v2937 = vsub.f32 1.0, %v2932
    %v2938 = vmul.f32 %v2937, %v2936
    %v2939 = vmul.f32 %v2932, %v2651
    %v2940 = vadd.f32 %v2938, %v2939
    %2941 = vmatprep.subr.bf16.mxu0 %v1021
    %2942 = vmatpush1.bf16.msra.mxu0 %v1020
    %2943 = vmatprep.subr.bf16.mxu0 %v1018
    %2944 = vmatpush1.bf16.msra.mxu0 %v1017
    %2945 = vmatprep.subr.bf16.mxu0 %v1015
    %2946 = vmatpush1.bf16.msra.mxu0 %v1014
    %2947 = vmatprep.subr.bf16.mxu0 %v1012
    %2948 = vmatpush1.bf16.msra.mxu0 %v1011
    %2949 = vmatprep.subr.bf16.mxu0 %v1009
    %2950 = vmatpush1.bf16.msra.mxu0 %v1008
    %2951 = vmatprep.subr.bf16.mxu0 %v1006
    %2952 = vmatpush1.bf16.msra.mxu0 %v1005
    %2953 = vmatprep.subr.bf16.mxu0 %v1003
    %2954 = vmatpush1.bf16.msra.mxu0 %v1002
    %2955 = vmatprep.subr.bf16.mxu0 %v1000
    %2956 = vmatpush1.bf16.msra.mxu0 %v999
    %2957 = vmatprep.subr.bf16.mxu0 0
    %2958 = vmatpush2.bf16.msra.mxu0 0
    %2959 = vmatprep.subr.bf16.mxu0 0
    %2960 = vmatpush2.bf16.msra.mxu0 0
    %2961 = vmatprep.subr.bf16.mxu0 0
    %2962 = vmatpush2.bf16.msra.mxu0 0
    %2963 = vmatprep.subr.bf16.mxu0 0
    %2964 = vmatpush2.bf16.msra.mxu0 0
    %2965 = vmatprep.subr.bf16.mxu0 0
    %2966 = vmatpush2.bf16.msra.mxu0 0
    %2967 = vmatprep.subr.bf16.mxu0 0
    %2968 = vmatpush2.bf16.msra.mxu0 0
    %2969 = vmatprep.subr.bf16.mxu0 0
    %2970 = vmatpush2.bf16.msra.mxu0 0
    %2971 = vmatprep.subr.bf16.mxu0 0
    %2972 = vmatpush2.bf16.msra.mxu0 0
    %2973 = vmatprep.mubr.bf16.mxu0 0
    %2974 = vmatmul.mubr.bf16.gmra.mxu0 %v2837
    %v2975 = vpop.f32.mrf.mxu0
    %v2976 = vadd.f32 %v490, %v2975
    %v2977 = vpop.f32.mrf.mxu0
    %v2978 = vadd.f32 %v494, %v2977
    %v2979 = vpop.f32.mrf.mxu0
    %v2980 = vpop.f32.mrf.mxu0
    %2981 = vdwg.mxu0
    %2982 = vmatprep.subr.bf16.mxu0 0
    %2983 = vmatpush1.bf16.msra.mxu0 %v1022
    %2984 = vmatprep.subr.bf16.mxu0 0
    %2985 = vmatpush1.bf16.msra.mxu0 %v1019
    %2986 = vmatprep.subr.bf16.mxu0 0
    %2987 = vmatpush1.bf16.msra.mxu0 %v1016
    %2988 = vmatprep.subr.bf16.mxu0 0
    %2989 = vmatpush1.bf16.msra.mxu0 %v1013
    %2990 = vmatprep.subr.bf16.mxu0 0
    %2991 = vmatpush1.bf16.msra.mxu0 %v1010
    %2992 = vmatprep.subr.bf16.mxu0 0
    %2993 = vmatpush1.bf16.msra.mxu0 %v1007
    %2994 = vmatprep.subr.bf16.mxu0 0
    %2995 = vmatpush1.bf16.msra.mxu0 %v1004
    %2996 = vmatprep.subr.bf16.mxu0 0
    %2997 = vmatpush1.bf16.msra.mxu0 %v1001
    %2998 = vmatprep.subr.bf16.mxu0 0
    %2999 = vmatpush2.bf16.msra.mxu0 0
    %3000 = vmatprep.subr.bf16.mxu0 0
    %3001 = vmatpush2.bf16.msra.mxu0 0
    %3002 = vmatprep.subr.bf16.mxu0 0
    %3003 = vmatpush2.bf16.msra.mxu0 0
    %3004 = vmatprep.subr.bf16.mxu0 0
    %3005 = vmatpush2.bf16.msra.mxu0 0
    %3006 = vmatprep.subr.bf16.mxu0 0
    %3007 = vmatpush2.bf16.msra.mxu0 0
    %3008 = vmatprep.subr.bf16.mxu0 0
    %3009 = vmatpush2.bf16.msra.mxu0 0
    %3010 = vmatprep.subr.bf16.mxu0 0
    %3011 = vmatpush2.bf16.msra.mxu0 0
    %3012 = vmatprep.subr.bf16.mxu0 0
    %3013 = vmatpush2.bf16.msra.mxu0 0
    %3014 = vmatprep.mubr.bf16.mxu0 0
    %3015 = vmatmul.mubr.bf16.gmra.mxu0 %v2837
    %v3016 = vpop.f32.mrf.mxu0
    %v3017 = vadd.f32 %v498, %v3016
    %v3018 = vpop.f32.mrf.mxu0
    %v3019 = vpop.f32.mrf.mxu0
    %v3020 = vpop.f32.mrf.mxu0
    %3021 = vdwg.mxu0
    %v3022 = vpack.c.bf16 %v2836, %v2836
    %3023 = vmatprep.subr.bf16.mxu0 %v1263
    %3024 = vmatpush1.bf16.msra.mxu0 %v1262
    %3025 = vmatprep.subr.bf16.mxu0 %v1260
    %3026 = vmatpush1.bf16.msra.mxu0 %v1259
    %3027 = vmatprep.subr.bf16.mxu0 %v1257
    %3028 = vmatpush1.bf16.msra.mxu0 %v1256
    %3029 = vmatprep.subr.bf16.mxu0 %v1254
    %3030 = vmatpush1.bf16.msra.mxu0 %v1253
    %3031 = vmatprep.subr.bf16.mxu0 %v1251
    %3032 = vmatpush1.bf16.msra.mxu0 %v1250
    %3033 = vmatprep.subr.bf16.mxu0 %v1248
    %3034 = vmatpush1.bf16.msra.mxu0 %v1247
    %3035 = vmatprep.subr.bf16.mxu0 %v1245
    %3036 = vmatpush1.bf16.msra.mxu0 %v1244
    %3037 = vmatprep.subr.bf16.mxu0 %v1242
    %3038 = vmatpush1.bf16.msra.mxu0 %v1241
    %3039 = vmatprep.subr.bf16.mxu0 0
    %3040 = vmatpush2.bf16.msra.mxu0 0
    %3041 = vmatprep.subr.bf16.mxu0 0
    %3042 = vmatpush2.bf16.msra.mxu0 0
    %3043 = vmatprep.subr.bf16.mxu0 0
    %3044 = vmatpush2.bf16.msra.mxu0 0
    %3045 = vmatprep.subr.bf16.mxu0 0
    %3046 = vmatpush2.bf16.msra.mxu0 0
    %3047 = vmatprep.subr.bf16.mxu0 0
    %3048 = vmatpush2.bf16.msra.mxu0 0
    %3049 = vmatprep.subr.bf16.mxu0 0
    %3050 = vmatpush2.bf16.msra.mxu0 0
    %3051 = vmatprep.subr.bf16.mxu0 0
    %3052 = vmatpush2.bf16.msra.mxu0 0
    %3053 = vmatprep.subr.bf16.mxu0 0
    %3054 = vmatpush2.bf16.msra.mxu0 0
    %3055 = vmatprep.mubr.bf16.mxu0 0
    %3056 = vmatmul.mubr.bf16.gmra.mxu0 %v3022
    %v3057 = vpop.f32.mrf.mxu0
    %v3058 = vadd.f32 0.0, %v3057
    %v3059 = vpop.f32.mrf.mxu0
    %v3060 = vadd.f32 0.0, %v3059
    %v3061 = vpop.f32.mrf.mxu0
    %v3062 = vpop.f32.mrf.mxu0
    %3063 = vdwg.mxu0
    %3064 = vmatprep.subr.bf16.mxu0 0
    %3065 = vmatpush1.bf16.msra.mxu0 %v1264
    %3066 = vmatprep.subr.bf16.mxu0 0
    %3067 = vmatpush1.bf16.msra.mxu0 %v1261
    %3068 = vmatprep.subr.bf16.mxu0 0
    %3069 = vmatpush1.bf16.msra.mxu0 %v1258
    %3070 = vmatprep.subr.bf16.mxu0 0
    %3071 = vmatpush1.bf16.msra.mxu0 %v1255
    %3072 = vmatprep.subr.bf16.mxu0 0
    %3073 = vmatpush1.bf16.msra.mxu0 %v1252
    %3074 = vmatprep.subr.bf16.mxu0 0
    %3075 = vmatpush1.bf16.msra.mxu0 %v1249
    %3076 = vmatprep.subr.bf16.mxu0 0
    %3077 = vmatpush1.bf16.msra.mxu0 %v1246
    %3078 = vmatprep.subr.bf16.mxu0 0
    %3079 = vmatpush1.bf16.msra.mxu0 %v1243
    %3080 = vmatprep.subr.bf16.mxu0 0
    %3081 = vmatpush2.bf16.msra.mxu0 0
    %3082 = vmatprep.subr.bf16.mxu0 0
    %3083 = vmatpush2.bf16.msra.mxu0 0
    %3084 = vmatprep.subr.bf16.mxu0 0
    %3085 = vmatpush2.bf16.msra.mxu0 0
    %3086 = vmatprep.subr.bf16.mxu0 0
    %3087 = vmatpush2.bf16.msra.mxu0 0
    %3088 = vmatprep.subr.bf16.mxu0 0
    %3089 = vmatpush2.bf16.msra.mxu0 0
    %3090 = vmatprep.subr.bf16.mxu0 0
    %3091 = vmatpush2.bf16.msra.mxu0 0
    %3092 = vmatprep.subr.bf16.mxu0 0
    %3093 = vmatpush2.bf16.msra.mxu0 0
    %3094 = vmatprep.subr.bf16.mxu0 0
    %3095 = vmatpush2.bf16.msra.mxu0 0
    %3096 = vmatprep.mubr.bf16.mxu0 0
    %3097 = vmatmul.mubr.bf16.gmra.mxu0 %v3022
    %v3098 = vpop.f32.mrf.mxu0
    %v3099 = vadd.f32 0.0, %v3098
    %v3100 = vpop.f32.mrf.mxu0
    %v3101 = vpop.f32.mrf.mxu0
    %v3102 = vpop.f32.mrf.mxu0
    %3103 = vdwg.mxu0
    %v3104 = vadd.f32 %v2976, %v3058
    %v3105 = vxor.u32 %v3104, 2147483648
    %v3106 = vmul.f32 %v3105, 1.442695
    %v3107 = vpow.pop %v3106
    %v3108 = vadd.f32 %v3107, 1.0
    %v3109 = vrcp.pop %v3108
    %v3110 = vmul.f32 1.0, %v3109
    %v3111 = vadd.f32 %v2978, %v3060
    %v3112 = vxor.u32 %v3111, 2147483648
    %v3113 = vmul.f32 %v3112, 1.442695
    %v3114 = vpow.pop %v3113
    %v3115 = vadd.f32 %v3114, 1.0
    %v3116 = vrcp.pop %v3115
    %v3117 = vmul.f32 1.0, %v3116
    %v3118 = vadd.f32 %v3099, %v514
    %v3119 = vmul.f32 %v3110, %v3118
    %v3120 = vadd.f32 %v3017, %v3119
    %v3121 = vtanh.pop %v3120
    %v3122 = vsub.f32 1.0, %v3117
    %v3123 = vmul.f32 %v3122, %v3121
    %v3124 = vmul.f32 %v3117, %v2836
    %v3125 = vadd.f32 %v3123, %v3124
    %v3126 = vpack.c.bf16 %v2940, %v2940
    %3127 = vmatprep.subr.bf16.mxu0 %v1021
    %3128 = vmatpush1.bf16.msra.mxu0 %v1020
    %3129 = vmatprep.subr.bf16.mxu0 %v1018
    %3130 = vmatpush1.bf16.msra.mxu0 %v1017
    %3131 = vmatprep.subr.bf16.mxu0 %v1015
    %3132 = vmatpush1.bf16.msra.mxu0 %v1014
    %3133 = vmatprep.subr.bf16.mxu0 %v1012
    %3134 = vmatpush1.bf16.msra.mxu0 %v1011
    %3135 = vmatprep.subr.bf16.mxu0 %v1009
    %3136 = vmatpush1.bf16.msra.mxu0 %v1008
    %3137 = vmatprep.subr.bf16.mxu0 %v1006
    %3138 = vmatpush1.bf16.msra.mxu0 %v1005
    %3139 = vmatprep.subr.bf16.mxu0 %v1003
    %3140 = vmatpush1.bf16.msra.mxu0 %v1002
    %3141 = vmatprep.subr.bf16.mxu0 %v1000
    %3142 = vmatpush1.bf16.msra.mxu0 %v999
    %3143 = vmatprep.subr.bf16.mxu0 0
    %3144 = vmatpush2.bf16.msra.mxu0 0
    %3145 = vmatprep.subr.bf16.mxu0 0
    %3146 = vmatpush2.bf16.msra.mxu0 0
    %3147 = vmatprep.subr.bf16.mxu0 0
    %3148 = vmatpush2.bf16.msra.mxu0 0
    %3149 = vmatprep.subr.bf16.mxu0 0
    %3150 = vmatpush2.bf16.msra.mxu0 0
    %3151 = vmatprep.subr.bf16.mxu0 0
    %3152 = vmatpush2.bf16.msra.mxu0 0
    %3153 = vmatprep.subr.bf16.mxu0 0
    %3154 = vmatpush2.bf16.msra.mxu0 0
    %3155 = vmatprep.subr.bf16.mxu0 0
    %3156 = vmatpush2.bf16.msra.mxu0 0
    %3157 = vmatprep.subr.bf16.mxu0 0
    %3158 = vmatpush2.bf16.msra.mxu0 0
    %3159 = vmatprep.mubr.bf16.mxu0 0
    %3160 = vmatmul.mubr.bf16.gmra.mxu0 %v3126
    %v3161 = vpop.f32.mrf.mxu0
    %v3162 = vadd.f32 %v490, %v3161
    %v3163 = vpop.f32.mrf.mxu0
    %v3164 = vadd.f32 %v494, %v3163
    %v3165 = vpop.f32.mrf.mxu0
    %v3166 = vpop.f32.mrf.mxu0
    %3167 = vdwg.mxu0
    %3168 = vmatprep.subr.bf16.mxu0 0
    %3169 = vmatpush1.bf16.msra.mxu0 %v1022
    %3170 = vmatprep.subr.bf16.mxu0 0
    %3171 = vmatpush1.bf16.msra.mxu0 %v1019
    %3172 = vmatprep.subr.bf16.mxu0 0
    %3173 = vmatpush1.bf16.msra.mxu0 %v1016
    %3174 = vmatprep.subr.bf16.mxu0 0
    %3175 = vmatpush1.bf16.msra.mxu0 %v1013
    %3176 = vmatprep.subr.bf16.mxu0 0
    %3177 = vmatpush1.bf16.msra.mxu0 %v1010
    %3178 = vmatprep.subr.bf16.mxu0 0
    %3179 = vmatpush1.bf16.msra.mxu0 %v1007
    %3180 = vmatprep.subr.bf16.mxu0 0
    %3181 = vmatpush1.bf16.msra.mxu0 %v1004
    %3182 = vmatprep.subr.bf16.mxu0 0
    %3183 = vmatpush1.bf16.msra.mxu0 %v1001
    %3184 = vmatprep.subr.bf16.mxu0 0
    %3185 = vmatpush2.bf16.msra.mxu0 0
    %3186 = vmatprep.subr.bf16.mxu0 0
    %3187 = vmatpush2.bf16.msra.mxu0 0
    %3188 = vmatprep.subr.bf16.mxu0 0
    %3189 = vmatpush2.bf16.msra.mxu0 0
    %3190 = vmatprep.subr.bf16.mxu0 0
    %3191 = vmatpush2.bf16.msra.mxu0 0
    %3192 = vmatprep.subr.bf16.mxu0 0
    %3193 = vmatpush2.bf16.msra.mxu0 0
    %3194 = vmatprep.subr.bf16.mxu0 0
    %3195 = vmatpush2.bf16.msra.mxu0 0
    %3196 = vmatprep.subr.bf16.mxu0 0
    %3197 = vmatpush2.bf16.msra.mxu0 0
    %3198 = vmatprep.subr.bf16.mxu0 0
    %3199 = vmatpush2.bf16.msra.mxu0 0
    %3200 = vmatprep.mubr.bf16.mxu0 0
    %3201 = vmatmul.mubr.bf16.gmra.mxu0 %v3126
    %v3202 = vpop.f32.mrf.mxu0
    %v3203 = vadd.f32 %v498, %v3202
    %v3204 = vpop.f32.mrf.mxu0
    %v3205 = vpop.f32.mrf.mxu0
    %v3206 = vpop.f32.mrf.mxu0
    %3207 = vdwg.mxu0
    %v3208 = vpack.c.bf16 %v3125, %v3125
    %3209 = vmatprep.subr.bf16.mxu0 %v1263
    %3210 = vmatpush1.bf16.msra.mxu0 %v1262
    %3211 = vmatprep.subr.bf16.mxu0 %v1260
    %3212 = vmatpush1.bf16.msra.mxu0 %v1259
    %3213 = vmatprep.subr.bf16.mxu0 %v1257
    %3214 = vmatpush1.bf16.msra.mxu0 %v1256
    %3215 = vmatprep.subr.bf16.mxu0 %v1254
    %3216 = vmatpush1.bf16.msra.mxu0 %v1253
    %3217 = vmatprep.subr.bf16.mxu0 %v1251
    %3218 = vmatpush1.bf16.msra.mxu0 %v1250
    %3219 = vmatprep.subr.bf16.mxu0 %v1248
    %3220 = vmatpush1.bf16.msra.mxu0 %v1247
    %3221 = vmatprep.subr.bf16.mxu0 %v1245
    %3222 = vmatpush1.bf16.msra.mxu0 %v1244
    %3223 = vmatprep.subr.bf16.mxu0 %v1242
    %3224 = vmatpush1.bf16.msra.mxu0 %v1241
    %3225 = vmatprep.subr.bf16.mxu0 0
    %3226 = vmatpush2.bf16.msra.mxu0 0
    %3227 = vmatprep.subr.bf16.mxu0 0
    %3228 = vmatpush2.bf16.msra.mxu0 0
    %3229 = vmatprep.subr.bf16.mxu0 0
    %3230 = vmatpush2.bf16.msra.mxu0 0
    %3231 = vmatprep.subr.bf16.mxu0 0
    %3232 = vmatpush2.bf16.msra.mxu0 0
    %3233 = vmatprep.subr.bf16.mxu0 0
    %3234 = vmatpush2.bf16.msra.mxu0 0
    %3235 = vmatprep.subr.bf16.mxu0 0
    %3236 = vmatpush2.bf16.msra.mxu0 0
    %3237 = vmatprep.subr.bf16.mxu0 0
    %3238 = vmatpush2.bf16.msra.mxu0 0
    %3239 = vmatprep.subr.bf16.mxu0 0
    %3240 = vmatpush2.bf16.msra.mxu0 0
    %3241 = vmatprep.mubr.bf16.mxu0 0
    %3242 = vmatmul.mubr.bf16.gmra.mxu0 %v3208
    %v3243 = vpop.f32.mrf.mxu0
    %v3244 = vadd.f32 0.0, %v3243
    %v3245 = vpop.f32.mrf.mxu0
    %v3246 = vadd.f32 0.0, %v3245
    %v3247 = vpop.f32.mrf.mxu0
    %v3248 = vpop.f32.mrf.mxu0
    %3249 = vdwg.mxu0
    %3250 = vmatprep.subr.bf16.mxu0 0
    %3251 = vmatpush1.bf16.msra.mxu0 %v1264
    %3252 = vmatprep.subr.bf16.mxu0 0
    %3253 = vmatpush1.bf16.msra.mxu0 %v1261
    %3254 = vmatprep.subr.bf16.mxu0 0
    %3255 = vmatpush1.bf16.msra.mxu0 %v1258
    %3256 = vmatprep.subr.bf16.mxu0 0
    %3257 = vmatpush1.bf16.msra.mxu0 %v1255
    %3258 = vmatprep.subr.bf16.mxu0 0
    %3259 = vmatpush1.bf16.msra.mxu0 %v1252
    %3260 = vmatprep.subr.bf16.mxu0 0
    %3261 = vmatpush1.bf16.msra.mxu0 %v1249
    %3262 = vmatprep.subr.bf16.mxu0 0
    %3263 = vmatpush1.bf16.msra.mxu0 %v1246
    %3264 = vmatprep.subr.bf16.mxu0 0
    %3265 = vmatpush1.bf16.msra.mxu0 %v1243
    %3266 = vmatprep.subr.bf16.mxu0 0
    %3267 = vmatpush2.bf16.msra.mxu0 0
    %3268 = vmatprep.subr.bf16.mxu0 0
    %3269 = vmatpush2.bf16.msra.mxu0 0
    %3270 = vmatprep.subr.bf16.mxu0 0
    %3271 = vmatpush2.bf16.msra.mxu0 0
    %3272 = vmatprep.subr.bf16.mxu0 0
    %3273 = vmatpush2.bf16.msra.mxu0 0
    %3274 = vmatprep.subr.bf16.mxu0 0
    %3275 = vmatpush2.bf16.msra.mxu0 0
    %3276 = vmatprep.subr.bf16.mxu0 0
    %3277 = vmatpush2.bf16.msra.mxu0 0
    %3278 = vmatprep.subr.bf16.mxu0 0
    %3279 = vmatpush2.bf16.msra.mxu0 0
    %3280 = vmatprep.subr.bf16.mxu0 0
    %3281 = vmatpush2.bf16.msra.mxu0 0
    %3282 = vmatprep.mubr.bf16.mxu0 0
    %3283 = vmatmul.mubr.bf16.gmra.mxu0 %v3208
    %v3284 = vpop.f32.mrf.mxu0
    %v3285 = vadd.f32 0.0, %v3284
    %v3286 = vpop.f32.mrf.mxu0
    %v3287 = vpop.f32.mrf.mxu0
    %v3288 = vpop.f32.mrf.mxu0
    %3289 = vdwg.mxu0
    %v3290 = vadd.f32 %v3162, %v3244
    %v3291 = vxor.u32 %v3290, 2147483648
    %v3292 = vmul.f32 %v3291, 1.442695
    %v3293 = vpow.pop %v3292
    %v3294 = vadd.f32 %v3293, 1.0
    %v3295 = vrcp.pop %v3294
    %v3296 = vmul.f32 1.0, %v3295
    %v3297 = vadd.f32 %v3164, %v3246
    %v3298 = vxor.u32 %v3297, 2147483648
    %v3299 = vmul.f32 %v3298, 1.442695
    %v3300 = vpow.pop %v3299
    %v3301 = vadd.f32 %v3300, 1.0
    %v3302 = vrcp.pop %v3301
    %v3303 = vmul.f32 1.0, %v3302
    %v3304 = vadd.f32 %v3285, %v514
    %v3305 = vmul.f32 %v3296, %v3304
    %v3306 = vadd.f32 %v3203, %v3305
    %v3307 = vtanh.pop %v3306
    %v3308 = vsub.f32 1.0, %v3303
    %v3309 = vmul.f32 %v3308, %v3307
    %v3310 = vmul.f32 %v3303, %v3125
    %v3311 = vadd.f32 %v3309, %v3310
    %v3312 = vld [vmem:[%s11] sm:$0x1]
    %v3313 = vld [vmem:[#allocation13] sm:$0xf]
    %v3314 = vld [vmem:[#allocation13 + $0x4] sm:$0xf]
    %v3315 = vld [vmem:[#allocation13 + $0x8] sm:$0xf]
    %v3316 = vld [vmem:[#allocation13 + $0xc] sm:$0xf]
    %v3317 = vld [vmem:[#allocation13 + $0x10] sm:$0xf]
    %v3318 = vld [vmem:[#allocation13 + $0x14] sm:$0xf]
    %v3319 = vld [vmem:[#allocation13 + $0x18] sm:$0xf]
    %v3320 = vld [vmem:[#allocation13 + $0x1c] sm:$0xf]
    %v3321 = vld [vmem:[#allocation13 + $0x20] sm:$0xf]
    %v3322 = vld [vmem:[#allocation13 + $0x24] sm:$0xf]
    %v3323 = vld [vmem:[#allocation13 + $0x28] sm:$0xf]
    %v3324 = vld [vmem:[#allocation13 + $0x2c] sm:$0xf]
    %v3325 = vld [vmem:[#allocation13 + $0x30] sm:$0xf]
    %v3326 = vld [vmem:[#allocation13 + $0x34] sm:$0xf]
    %v3327 = vld [vmem:[#allocation13 + $0x38] sm:$0xf]
    %v3328 = vld [vmem:[#allocation13 + $0x3c] sm:$0xf]
    %v3345 = vunpack.c.l.b16 %v3313
    %v3346 = vunpack.c.l.b16 %v3314
    %v3347 = vunpack.c.l.b16 %v3315
    %v3348 = vunpack.c.l.b16 %v3316
    %v3349 = vunpack.c.l.b16 %v3317
    %v3350 = vunpack.c.l.b16 %v3318
    %v3351 = vunpack.c.l.b16 %v3319
    %v3352 = vunpack.c.l.b16 %v3320
    %v3353 = vunpack.c.l.b16 %v3321
    %v3354 = vunpack.c.l.b16 %v3322
    %v3355 = vunpack.c.l.b16 %v3323
    %v3356 = vunpack.c.l.b16 %v3324
    %v3357 = vunpack.c.l.b16 %v3325
    %v3358 = vunpack.c.l.b16 %v3326
    %v3359 = vunpack.c.l.b16 %v3327
    %v3360 = vunpack.c.l.b16 %v3328
    %v3361 = vpack.c.b16 %v3346, %v3345
    %v3362 = vpack.c.b16 %v3348, %v3347
    %v3363 = vpack.c.b16 %v3350, %v3349
    %v3364 = vpack.c.b16 %v3352, %v3351
    %v3365 = vpack.c.b16 %v3354, %v3353
    %v3366 = vpack.c.b16 %v3356, %v3355
    %v3367 = vpack.c.b16 %v3358, %v3357
    %v3368 = vpack.c.b16 %v3360, %v3359
    %3377 = vmatprep.subr.bf16.mxu0 0
    %3378 = vmatpush1.bf16.msra.mxu0 %v3368
    %3379 = vmatprep.subr.bf16.mxu0 0
    %3380 = vmatpush1.bf16.msra.mxu0 %v3367
    %3381 = vmatprep.subr.bf16.mxu0 0
    %3382 = vmatpush1.bf16.msra.mxu0 %v3366
    %3383 = vmatprep.subr.bf16.mxu0 0
    %3384 = vmatpush1.bf16.msra.mxu0 %v3365
    %3385 = vmatprep.subr.bf16.mxu0 0
    %3386 = vmatpush1.bf16.msra.mxu0 %v3364
    %3387 = vmatprep.subr.bf16.mxu0 0
    %3388 = vmatpush1.bf16.msra.mxu0 %v3363
    %3389 = vmatprep.subr.bf16.mxu0 0
    %3390 = vmatpush1.bf16.msra.mxu0 %v3362
    %3391 = vmatprep.subr.bf16.mxu0 0
    %3392 = vmatpush1.bf16.msra.mxu0 %v3361
    %3393 = vmatprep.subr.bf16.mxu0 0
    %3394 = vmatpush2.bf16.msra.mxu0 0
    %3395 = vmatprep.subr.bf16.mxu0 0
    %3396 = vmatpush2.bf16.msra.mxu0 0
    %3397 = vmatprep.subr.bf16.mxu0 0
    %3398 = vmatpush2.bf16.msra.mxu0 0
    %3399 = vmatprep.subr.bf16.mxu0 0
    %3400 = vmatpush2.bf16.msra.mxu0 0
    %3401 = vmatprep.subr.bf16.mxu0 0
    %3402 = vmatpush2.bf16.msra.mxu0 0
    %3403 = vmatprep.subr.bf16.mxu0 0
    %3404 = vmatpush2.bf16.msra.mxu0 0
    %3405 = vmatprep.subr.bf16.mxu0 0
    %3406 = vmatpush2.bf16.msra.mxu0 0
    %3407 = vmatprep.subr.bf16.mxu0 0
    %3408 = vmatpush2.bf16.msra.mxu0 0
    %3409 = vmatprep.mubr.bf16.mxu0 0
    %3410 = vmatmul.mubr.bf16.gmra.mxu0 %v3126
    %v3411 = vpop.f32.mrf.mxu0
    %v3412 = vadd.f32 0.0, %v3411
    %v3413 = vpop.f32.mrf.mxu0
    %v3414 = vpop.f32.mrf.mxu0
    %v3415 = vpop.f32.mrf.mxu0
    %3416 = vdwg.mxu0
    %v3417 = vadd.f32 %v3312, %v3412
    %s3418 = scalar_lea.vmem [#allocation13], 64
    %v3419 = vld [vmem:[%s3418] sm:$0xf]
    %v3420 = vld [vmem:[%s3418 + $0x4] sm:$0xf]
    %v3421 = vld [vmem:[%s3418 + $0x8] sm:$0xf]
    %v3422 = vld [vmem:[%s3418 + $0xc] sm:$0xf]
    %v3423 = vld [vmem:[%s3418 + $0x10] sm:$0xf]
    %v3424 = vld [vmem:[%s3418 + $0x14] sm:$0xf]
    %v3425 = vld [vmem:[%s3418 + $0x18] sm:$0xf]
    %v3426 = vld [vmem:[%s3418 + $0x1c] sm:$0xf]
    %v3427 = vld [vmem:[%s3418 + $0x20] sm:$0xf]
    %v3428 = vld [vmem:[%s3418 + $0x24] sm:$0xf]
    %v3429 = vld [vmem:[%s3418 + $0x28] sm:$0xf]
    %v3430 = vld [vmem:[%s3418 + $0x2c] sm:$0xf]
    %v3431 = vld [vmem:[%s3418 + $0x30] sm:$0xf]
    %v3432 = vld [vmem:[%s3418 + $0x34] sm:$0xf]
    %v3433 = vld [vmem:[%s3418 + $0x38] sm:$0xf]
    %v3434 = vld [vmem:[%s3418 + $0x3c] sm:$0xf]
    %v3451 = vunpack.c.l.b16 %v3419
    %v3452 = vunpack.c.l.b16 %v3420
    %v3453 = vunpack.c.l.b16 %v3421
    %v3454 = vunpack.c.l.b16 %v3422
    %v3455 = vunpack.c.l.b16 %v3423
    %v3456 = vunpack.c.l.b16 %v3424
    %v3457 = vunpack.c.l.b16 %v3425
    %v3458 = vunpack.c.l.b16 %v3426
    %v3459 = vunpack.c.l.b16 %v3427
    %v3460 = vunpack.c.l.b16 %v3428
    %v3461 = vunpack.c.l.b16 %v3429
    %v3462 = vunpack.c.l.b16 %v3430
    %v3463 = vunpack.c.l.b16 %v3431
    %v3464 = vunpack.c.l.b16 %v3432
    %v3465 = vunpack.c.l.b16 %v3433
    %v3466 = vunpack.c.l.b16 %v3434
    %v3467 = vpack.c.b16 %v3452, %v3451
    %v3468 = vpack.c.b16 %v3454, %v3453
    %v3469 = vpack.c.b16 %v3456, %v3455
    %v3470 = vpack.c.b16 %v3458, %v3457
    %v3471 = vpack.c.b16 %v3460, %v3459
    %v3472 = vpack.c.b16 %v3462, %v3461
    %v3473 = vpack.c.b16 %v3464, %v3463
    %v3474 = vpack.c.b16 %v3466, %v3465
    %3483 = vmatprep.subr.bf16.mxu0 0
    %3484 = vmatpush1.bf16.msra.mxu0 %v3474
    %3485 = vmatprep.subr.bf16.mxu0 0
    %3486 = vmatpush1.bf16.msra.mxu0 %v3473
    %3487 = vmatprep.subr.bf16.mxu0 0
    %3488 = vmatpush1.bf16.msra.mxu0 %v3472
    %3489 = vmatprep.subr.bf16.mxu0 0
    %3490 = vmatpush1.bf16.msra.mxu0 %v3471
    %3491 = vmatprep.subr.bf16.mxu0 0
    %3492 = vmatpush1.bf16.msra.mxu0 %v3470
    %3493 = vmatprep.subr.bf16.mxu0 0
    %3494 = vmatpush1.bf16.msra.mxu0 %v3469
    %3495 = vmatprep.subr.bf16.mxu0 0
    %3496 = vmatpush1.bf16.msra.mxu0 %v3468
    %3497 = vmatprep.subr.bf16.mxu0 0
    %3498 = vmatpush1.bf16.msra.mxu0 %v3467
    %3499 = vmatprep.subr.bf16.mxu0 0
    %3500 = vmatpush2.bf16.msra.mxu0 0
    %3501 = vmatprep.subr.bf16.mxu0 0
    %3502 = vmatpush2.bf16.msra.mxu0 0
    %3503 = vmatprep.subr.bf16.mxu0 0
    %3504 = vmatpush2.bf16.msra.mxu0 0
    %3505 = vmatprep.subr.bf16.mxu0 0
    %3506 = vmatpush2.bf16.msra.mxu0 0
    %3507 = vmatprep.subr.bf16.mxu0 0
    %3508 = vmatpush2.bf16.msra.mxu0 0
    %3509 = vmatprep.subr.bf16.mxu0 0
    %3510 = vmatpush2.bf16.msra.mxu0 0
    %3511 = vmatprep.subr.bf16.mxu0 0
    %3512 = vmatpush2.bf16.msra.mxu0 0
    %3513 = vmatprep.subr.bf16.mxu0 0
    %3514 = vmatpush2.bf16.msra.mxu0 0
    %3515 = vmatprep.mubr.bf16.mxu0 0
    %3516 = vmatmul.mubr.bf16.gmra.mxu0 %v3126
    %v3517 = vpop.f32.mrf.mxu0
    %v3518 = vadd.f32 0.0, %v3517
    %v3519 = vpop.f32.mrf.mxu0
    %v3520 = vpop.f32.mrf.mxu0
    %v3521 = vpop.f32.mrf.mxu0
    %3522 = vdwg.mxu0
    %v3525 = vunpack.c.l.s4 1966171168
    %v3526 = vunpack.c.0.s8 %v3525
    %v3527 = vlaneseq
    %v3528 = vshrl.u32 %v3527, 7
    %v3529 = vsub.s32 %v3526, %v3528
    %v3530 = vrot.slane %v3518, %v3529
    %v3531 = vcombine.high %v3530, %v3530
    %v3533 = vunpack.c.l.s4 1966171168
    %v3534 = vunpack.c.0.s8 %v3533
    %v3535 = vlaneseq
    %v3536 = vshrl.u32 %v3535, 7
    %v3537 = vsub.s32 %v3534, %v3536
    %v3538 = vrot.slane %v3531, %v3537
    %v3540 = vadd.f32 %v3417, %v3538
    %3541 = vst [vmem:[#allocation14] sm:$0x1] %v3540
    %v3542 = vpack.c.bf16 %v3311, %v3311
    %v3543 = vld [vmem:[#allocation13] sm:$0xf]
    %v3544 = vld [vmem:[#allocation13 + $0x4] sm:$0xf]
    %v3545 = vld [vmem:[#allocation13 + $0x8] sm:$0xf]
    %v3546 = vld [vmem:[#allocation13 + $0xc] sm:$0xf]
    %v3547 = vld [vmem:[#allocation13 + $0x10] sm:$0xf]
    %v3548 = vld [vmem:[#allocation13 + $0x14] sm:$0xf]
    %v3549 = vld [vmem:[#allocation13 + $0x18] sm:$0xf]
    %v3550 = vld [vmem:[#allocation13 + $0x1c] sm:$0xf]
    %v3551 = vld [vmem:[#allocation13 + $0x20] sm:$0xf]
    %v3552 = vld [vmem:[#allocation13 + $0x24] sm:$0xf]
    %v3553 = vld [vmem:[#allocation13 + $0x28] sm:$0xf]
    %v3554 = vld [vmem:[#allocation13 + $0x2c] sm:$0xf]
    %v3555 = vld [vmem:[#allocation13 + $0x30] sm:$0xf]
    %v3556 = vld [vmem:[#allocation13 + $0x34] sm:$0xf]
    %v3557 = vld [vmem:[#allocation13 + $0x38] sm:$0xf]
    %v3558 = vld [vmem:[#allocation13 + $0x3c] sm:$0xf]
    %v3575 = vunpack.c.l.b16 %v3543
    %v3576 = vunpack.c.l.b16 %v3544
    %v3577 = vunpack.c.l.b16 %v3545
    %v3578 = vunpack.c.l.b16 %v3546
    %v3579 = vunpack.c.l.b16 %v3547
    %v3580 = vunpack.c.l.b16 %v3548
    %v3581 = vunpack.c.l.b16 %v3549
    %v3582 = vunpack.c.l.b16 %v3550
    %v3583 = vunpack.c.l.b16 %v3551
    %v3584 = vunpack.c.l.b16 %v3552
    %v3585 = vunpack.c.l.b16 %v3553
    %v3586 = vunpack.c.l.b16 %v3554
    %v3587 = vunpack.c.l.b16 %v3555
    %v3588 = vunpack.c.l.b16 %v3556
    %v3589 = vunpack.c.l.b16 %v3557
    %v3590 = vunpack.c.l.b16 %v3558
    %v3591 = vpack.c.b16 %v3576, %v3575
    %v3592 = vpack.c.b16 %v3578, %v3577
    %v3593 = vpack.c.b16 %v3580, %v3579
    %v3594 = vpack.c.b16 %v3582, %v3581
    %v3595 = vpack.c.b16 %v3584, %v3583
    %v3596 = vpack.c.b16 %v3586, %v3585
    %v3597 = vpack.c.b16 %v3588, %v3587
    %v3598 = vpack.c.b16 %v3590, %v3589
    %3607 = vmatprep.subr.bf16.mxu0 0
    %3608 = vmatpush1.bf16.msra.mxu0 %v3598
    %3609 = vmatprep.subr.bf16.mxu0 0
    %3610 = vmatpush1.bf16.msra.mxu0 %v3597
    %3611 = vmatprep.subr.bf16.mxu0 0
    %3612 = vmatpush1.bf16.msra.mxu0 %v3596
    %3613 = vmatprep.subr.bf16.mxu0 0
    %3614 = vmatpush1.bf16.msra.mxu0 %v3595
    %3615 = vmatprep.subr.bf16.mxu0 0
    %3616 = vmatpush1.bf16.msra.mxu0 %v3594
    %3617 = vmatprep.subr.bf16.mxu0 0
    %3618 = vmatpush1.bf16.msra.mxu0 %v3593
    %3619 = vmatprep.subr.bf16.mxu0 0
    %3620 = vmatpush1.bf16.msra.mxu0 %v3592
    %3621 = vmatprep.subr.bf16.mxu0 0
    %3622 = vmatpush1.bf16.msra.mxu0 %v3591
    %3623 = vmatprep.subr.bf16.mxu0 0
    %3624 = vmatpush2.bf16.msra.mxu0 0
    %3625 = vmatprep.subr.bf16.mxu0 0
    %3626 = vmatpush2.bf16.msra.mxu0 0
    %3627 = vmatprep.subr.bf16.mxu0 0
    %3628 = vmatpush2.bf16.msra.mxu0 0
    %3629 = vmatprep.subr.bf16.mxu0 0
    %3630 = vmatpush2.bf16.msra.mxu0 0
    %3631 = vmatprep.subr.bf16.mxu0 0
    %3632 = vmatpush2.bf16.msra.mxu0 0
    %3633 = vmatprep.subr.bf16.mxu0 0
    %3634 = vmatpush2.bf16.msra.mxu0 0
    %3635 = vmatprep.subr.bf16.mxu0 0
    %3636 = vmatpush2.bf16.msra.mxu0 0
    %3637 = vmatprep.subr.bf16.mxu0 0
    %3638 = vmatpush2.bf16.msra.mxu0 0
    %3639 = vmatprep.mubr.bf16.mxu0 0
    %3640 = vmatmul.mubr.bf16.gmra.mxu0 %v3542
    %v3641 = vpop.f32.mrf.mxu0
    %v3642 = vadd.f32 0.0, %v3641
    %v3643 = vpop.f32.mrf.mxu0
    %v3644 = vpop.f32.mrf.mxu0
    %v3645 = vpop.f32.mrf.mxu0
    %3646 = vdwg.mxu0
    %v3647 = vadd.f32 %v3312, %v3642
    %v3648 = vld [vmem:[%s3418] sm:$0xf]
    %v3649 = vld [vmem:[%s3418 + $0x4] sm:$0xf]
    %v3650 = vld [vmem:[%s3418 + $0x8] sm:$0xf]
    %v3651 = vld [vmem:[%s3418 + $0xc] sm:$0xf]
    %v3652 = vld [vmem:[%s3418 + $0x10] sm:$0xf]
    %v3653 = vld [vmem:[%s3418 + $0x14] sm:$0xf]
    %v3654 = vld [vmem:[%s3418 + $0x18] sm:$0xf]
    %v3655 = vld [vmem:[%s3418 + $0x1c] sm:$0xf]
    %v3656 = vld [vmem:[%s3418 + $0x20] sm:$0xf]
    %v3657 = vld [vmem:[%s3418 + $0x24] sm:$0xf]
    %v3658 = vld [vmem:[%s3418 + $0x28] sm:$0xf]
    %v3659 = vld [vmem:[%s3418 + $0x2c] sm:$0xf]
    %v3660 = vld [vmem:[%s3418 + $0x30] sm:$0xf]
    %v3661 = vld [vmem:[%s3418 + $0x34] sm:$0xf]
    %v3662 = vld [vmem:[%s3418 + $0x38] sm:$0xf]
    %v3663 = vld [vmem:[%s3418 + $0x3c] sm:$0xf]
    %v3680 = vunpack.c.l.b16 %v3648
    %v3681 = vunpack.c.l.b16 %v3649
    %v3682 = vunpack.c.l.b16 %v3650
    %v3683 = vunpack.c.l.b16 %v3651
    %v3684 = vunpack.c.l.b16 %v3652
    %v3685 = vunpack.c.l.b16 %v3653
    %v3686 = vunpack.c.l.b16 %v3654
    %v3687 = vunpack.c.l.b16 %v3655
    %v3688 = vunpack.c.l.b16 %v3656
    %v3689 = vunpack.c.l.b16 %v3657
    %v3690 = vunpack.c.l.b16 %v3658
    %v3691 = vunpack.c.l.b16 %v3659
    %v3692 = vunpack.c.l.b16 %v3660
    %v3693 = vunpack.c.l.b16 %v3661
    %v3694 = vunpack.c.l.b16 %v3662
    %v3695 = vunpack.c.l.b16 %v3663
    %v3696 = vpack.c.b16 %v3681, %v3680
    %v3697 = vpack.c.b16 %v3683, %v3682
    %v3698 = vpack.c.b16 %v3685, %v3684
    %v3699 = vpack.c.b16 %v3687, %v3686
    %v3700 = vpack.c.b16 %v3689, %v3688
    %v3701 = vpack.c.b16 %v3691, %v3690
    %v3702 = vpack.c.b16 %v3693, %v3692
    %v3703 = vpack.c.b16 %v3695, %v3694
    %3712 = vmatprep.subr.bf16.mxu0 0
    %3713 = vmatpush1.bf16.msra.mxu0 %v3703
    %3714 = vmatprep.subr.bf16.mxu0 0
    %3715 = vmatpush1.bf16.msra.mxu0 %v3702
    %3716 = vmatprep.subr.bf16.mxu0 0
    %3717 = vmatpush1.bf16.msra.mxu0 %v3701
    %3718 = vmatprep.subr.bf16.mxu0 0
    %3719 = vmatpush1.bf16.msra.mxu0 %v3700
    %3720 = vmatprep.subr.bf16.mxu0 0
    %3721 = vmatpush1.bf16.msra.mxu0 %v3699
    %3722 = vmatprep.subr.bf16.mxu0 0
    %3723 = vmatpush1.bf16.msra.mxu0 %v3698
    %3724 = vmatprep.subr.bf16.mxu0 0
    %3725 = vmatpush1.bf16.msra.mxu0 %v3697
    %3726 = vmatprep.subr.bf16.mxu0 0
    %3727 = vmatpush1.bf16.msra.mxu0 %v3696
    %3728 = vmatprep.subr.bf16.mxu0 0
    %3729 = vmatpush2.bf16.msra.mxu0 0
    %3730 = vmatprep.subr.bf16.mxu0 0
    %3731 = vmatpush2.bf16.msra.mxu0 0
    %3732 = vmatprep.subr.bf16.mxu0 0
    %3733 = vmatpush2.bf16.msra.mxu0 0
    %3734 = vmatprep.subr.bf16.mxu0 0
    %3735 = vmatpush2.bf16.msra.mxu0 0
    %3736 = vmatprep.subr.bf16.mxu0 0
    %3737 = vmatpush2.bf16.msra.mxu0 0
    %3738 = vmatprep.subr.bf16.mxu0 0
    %3739 = vmatpush2.bf16.msra.mxu0 0
    %3740 = vmatprep.subr.bf16.mxu0 0
    %3741 = vmatpush2.bf16.msra.mxu0 0
    %3742 = vmatprep.subr.bf16.mxu0 0
    %3743 = vmatpush2.bf16.msra.mxu0 0
    %3744 = vmatprep.mubr.bf16.mxu0 0
    %3745 = vmatmul.mubr.bf16.gmra.mxu0 %v3542
    %v3746 = vpop.f32.mrf.mxu0
    %v3747 = vadd.f32 0.0, %v3746
    %v3748 = vpop.f32.mrf.mxu0
    %v3749 = vpop.f32.mrf.mxu0
    %v3750 = vpop.f32.mrf.mxu0
    %3751 = vdwg.mxu0
    %v3754 = vunpack.c.l.s4 1966171168
    %v3755 = vunpack.c.0.s8 %v3754
    %v3756 = vlaneseq
    %v3757 = vshrl.u32 %v3756, 7
    %v3758 = vsub.s32 %v3755, %v3757
    %v3759 = vrot.slane %v3747, %v3758
    %v3760 = vcombine.high %v3759, %v3759
    %v3762 = vunpack.c.l.s4 1966171168
    %v3763 = vunpack.c.0.s8 %v3762
    %v3764 = vlaneseq
    %v3765 = vshrl.u32 %v3764, 7
    %v3766 = vsub.s32 %v3763, %v3765
    %v3767 = vrot.slane %v3760, %v3766
    %v3769 = vadd.f32 %v3647, %v3767
    %3770 = vst [vmem:[#allocation14 + $0x1] sm:$0x1] %v3769
    // Predicated region
    $region78: #{tpu_custom_call.1} parent=1 // pred_check
      _
    $region79: #{tpu_custom_call.1} parent=1 // pred_check_branch
      %3772 = sbr.rel (0) target = $region81
    $region80: #{tpu_custom_call.1} parent=1 // pred_region
      %s3774 = ssub.s32 32, 32
      %3775 = vsyncadd [#allocation4], %s3774
      %s3777 = sshll.u32 [#allocation14], 4
      %s3778 = int_to_ptr.vmem [resolvable:$true] %s3777
      %3780 = dma.vmem_to_hbm [thread:$0]  %s3778, 32, %s12, [#allocation4]
    $region81: #{tpu_custom_call.1} parent=1 // pred_fallthru
      _
    // Predicated region
    $region82: #{tpu_custom_call.1} parent=1 // pred_check
      _
    $region83: #{tpu_custom_call.1} parent=1 // pred_check_branch
      %3782 = sbr.rel (0) target = $region85
    $region84: #{tpu_custom_call.1} parent=1 // pred_region
      %3783 = dma.done [#allocation4], 32
    $region85: #{tpu_custom_call.1} parent=1 // pred_fallthru
      _
    %3784 = vsyncpa [#allocation3], 1
    %3785 = vsyncpa [#allocation6], 1
    %3786 = vsyncpa [#allocation9], 1
    %3787 = vsyncpa [#allocation12], 1
    %3788 = vsyncpa [#allocation4], 1

</llo_original>
